<compile_context>
chip_gen: v7x
topology: tpu7x:2x2x1
jax: 0.10.0
libtpu: 0.0.40
codegen_flags: <defaults>
</compile_context>

<pallas_src>
import functools

import jax
import jax.numpy as jnp
from jax.experimental import pallas as pl
from jax.experimental.pallas import tpu as pltpu


# ----------------------------- kernel helpers ------------------------------

def _layernorm(x, g, b, eps=1e-5):
    mu = jnp.mean(x, axis=-1, keepdims=True)
    var = jnp.mean((x - mu) ** 2, axis=-1, keepdims=True)
    return (x - mu) * jax.lax.rsqrt(var + eps) * g + b


def _mha(h_bf, kv_bf, w_ref, b_ref, causal, num_heads, head_dim):
    """Head-batched BioGptAttention (eval mode).

    h_bf/kv_bf: bf16 (S, D)/(Skv, D).  w_ref: (4, D, D) bf16 [q,k,v,o].
    b_ref: (4, D) f32.  The 1/sqrt(dh) q-scale is pre-folded into w_ref[0]/b_ref[0].
    Returns (out_f32 (S, D), k_bf16 (Skv, D), v_bf16 (Skv, D)).
    """
    S = h_bf.shape[0]
    Skv = kv_bf.shape[0]

    # QKV projections (bf16 MXU, f32 accumulate).  Cast to bf16 BEFORE the
    # head-split transpose so the XLU moves half the bytes.
    q = (jnp.dot(h_bf, w_ref[0], preferred_element_type=jnp.float32) + b_ref[0]).astype(jnp.bfloat16)
    k = (jnp.dot(kv_bf, w_ref[1], preferred_element_type=jnp.float32) + b_ref[1]).astype(jnp.bfloat16)
    v = (jnp.dot(kv_bf, w_ref[2], preferred_element_type=jnp.float32) + b_ref[2]).astype(jnp.bfloat16)

    qh = jnp.transpose(q.reshape(S, num_heads, head_dim), (1, 0, 2))
    kh = jnp.transpose(k.reshape(Skv, num_heads, head_dim), (1, 0, 2))
    vh = jnp.transpose(v.reshape(Skv, num_heads, head_dim), (1, 0, 2))

    s = jnp.einsum("hqd,hkd->hqk", qh, kh, preferred_element_type=jnp.float32)
    if causal:
        rows = jax.lax.broadcasted_iota(jnp.int32, (S, Skv), 0)
        cols = jax.lax.broadcasted_iota(jnp.int32, (S, Skv), 1)
        s = jnp.where((rows >= cols)[None, :, :], s, -1e30)   # mask folded into scores
    s = s - jnp.max(s, axis=-1, keepdims=True)
    p = jnp.exp(s)
    inv = pl.reciprocal(jnp.sum(p, axis=-1, keepdims=True), approx=True)
    p = (p * inv).astype(jnp.bfloat16)

    o_h = jnp.einsum("hqk,hkd->hqd", p, vh, preferred_element_type=jnp.float32)

    # Output projection: one XLU transpose back to (S, D), then a single
    # full-contraction (S,D)@(D,D) MXU matmul (no per-head K=head_dim matmuls).
    ctx = jnp.transpose(o_h.astype(jnp.bfloat16), (1, 0, 2)).reshape(S, num_heads * head_dim)
    out = jnp.dot(ctx, w_ref[3], preferred_element_type=jnp.float32) + b_ref[3]
    return out, k, v


# ------------------------- kernel 1: attention ------------------------------

def _attn_kernel(x_ref, enc_ref, ln_g_ref, ln_b_ref,
                 sw_ref, sb_ref, cw_ref, cb_ref,
                 x2_ref, sk_ref, sv_ref, ck_ref, cv_ref,
                 *, num_heads, head_dim):
    x = x_ref[0]          # (S, D) f32
    enc = enc_ref[0]      # (Se, D) f32

    # self-attention (pre-LN, causal, residual)
    h = _layernorm(x, ln_g_ref[0], ln_b_ref[0]).astype(jnp.bfloat16)
    attn, k_s, v_s = _mha(h, h, sw_ref, sb_ref, True, num_heads, head_dim)
    sk_ref[0] = k_s       # lane-dense bf16 KV cache stores
    sv_ref[0] = v_s
    x1 = x + attn         # dropout is identity in eval mode

    # cross-attention (pre-LN, unmasked, residual)
    h2 = _layernorm(x1, ln_g_ref[1], ln_b_ref[1]).astype(jnp.bfloat16)
    attn2, k_c, v_c = _mha(h2, enc.astype(jnp.bfloat16), cw_ref, cb_ref, False,
                           num_heads, head_dim)
    ck_ref[0] = k_c
    cv_ref[0] = v_c
    x2_ref[0] = x1 + attn2


# ------------------------- kernel 2: streamed FFN ---------------------------

def _ffn_kernel(x2_ref, lng_ref, lnb_ref, fc1w_ref, fc1b_ref, fc2w_ref, fc2b_ref,
                out_ref, h_ref):
    @pl.when(pl.program_id(1) == 0)
    def _init():
        x2 = x2_ref[...]                                              # (tm, D) f32
        h_ref[...] = _layernorm(x2, lng_ref[...], lnb_ref[...]).astype(jnp.bfloat16)
        out_ref[...] = x2 + fc2b_ref[...]                             # residual + fc2 bias

    z = jnp.dot(h_ref[...], fc1w_ref[...],
                preferred_element_type=jnp.float32) + fc1b_ref[...]
    z = jax.nn.gelu(z, approximate=True).astype(jnp.bfloat16)         # tanh GELU -> EUP
    out_ref[...] += jnp.dot(z, fc2w_ref[...], preferred_element_type=jnp.float32)


# ------------------------------ param prep -----------------------------------

def prepare_decoder_params(params, *, num_heads):
    """One-time weight prep (call at load time, NOT per forward call):
    folds the 1/sqrt(dh) q-scale into the q projection and casts matmul
    weights to bf16."""
    D = params["self_w"].shape[-1]
    scale = (D // num_heads) ** -0.5
    return {
        "ln_g": params["ln_g"].astype(jnp.float32),
        "ln_b": params["ln_b"].astype(jnp.float32),
        "self_w": params["self_w"].at[0].multiply(scale).astype(jnp.bfloat16),
        "self_b": params["self_b"].at[0].multiply(scale).astype(jnp.float32),
        "cross_w": params["cross_w"].at[0].multiply(scale).astype(jnp.bfloat16),
        "cross_b": params["cross_b"].at[0].multiply(scale).astype(jnp.float32),
        "fc1_w": params["fc1_w"].astype(jnp.bfloat16),
        "fc1_b": params["fc1_b"].astype(jnp.float32),
        "fc2_w": params["fc2_w"].astype(jnp.bfloat16),
        "fc2_b": params["fc2_b"].astype(jnp.float32),
    }


# -------------------------------- wrapper -----------------------------------

def _cparams(dimension_semantics, vmem_limit_bytes):
    if vmem_limit_bytes is None:
        return pltpu.CompilerParams(dimension_semantics=dimension_semantics)
    return pltpu.CompilerParams(dimension_semantics=dimension_semantics,
                                vmem_limit_bytes=vmem_limit_bytes)


def biogpt_decoder_layer(x, enc, prep, *, num_heads, ffn_block=None, block_rows=None,
                         vmem_limit_bytes=None, single_buffer_weights=False):
    B, S, D = x.shape
    Se = enc.shape[1]
    I = prep["fc1_w"].shape[1]
    head_dim = D // num_heads

    def wspec(shape, index_map):
        # constant-index weight blocks: optionally single-buffered on
        # VMEM-tight configs (v7x) -- the block index never changes.
        if single_buffer_weights:
            return pl.BlockSpec(shape, index_map, pipeline_mode=pl.Buffered(1))
        return pl.BlockSpec(shape, index_map)

    const2 = lambda b: (0, 0)
    const3 = lambda b: (0, 0, 0)

    # ---- call 1: fused self-attn + cross-attn, one grid step per batch row ----
    attn_kernel = functools.partial(_attn_kernel, num_heads=num_heads, head_dim=head_dim)
    x2, sk, sv, ck, cv = pl.pallas_call(
        attn_kernel,
        out_shape=(
            jax.ShapeDtypeStruct((B, S, D), jnp.float32),    # x2 (post cross-attn residual)
            jax.ShapeDtypeStruct((B, S, D), jnp.bfloat16),   # self k (bf16 KV cache)
            jax.ShapeDtypeStruct((B, S, D), jnp.bfloat16),   # self v
            jax.ShapeDtypeStruct((B, Se, D), jnp.bfloat16),  # cross k
            jax.ShapeDtypeStruct((B, Se, D), jnp.bfloat16),  # cross v
        ),
        grid_spec=pltpu.PrefetchScalarGridSpec(
            num_scalar_prefetch=0,
            grid=(B,),
            in_specs=[
                pl.BlockSpec((1, S, D), lambda b: (b, 0, 0)),    # x
                pl.BlockSpec((1, Se, D), lambda b: (b, 0, 0)),   # enc
                wspec((3, D), const2),                           # LN gammas
                wspec((3, D), const2),                           # LN betas
                wspec((4, D, D), const3),                        # self attn W (bf16)
                wspec((4, D), const2),                           # self attn b
                wspec((4, D, D), const3),                        # cross attn W (bf16)
                wspec((4, D), const2),                           # cross attn b
            ],
            out_specs=[
                pl.BlockSpec((1, S, D), lambda b: (b, 0, 0)),
                pl.BlockSpec((1, S, D), lambda b: (b, 0, 0)),
                pl.BlockSpec((1, S, D), lambda b: (b, 0, 0)),
                pl.BlockSpec((1, Se, D), lambda b: (b, 0, 0)),
                pl.BlockSpec((1, Se, D), lambda b: (b, 0, 0)),
            ],
        ),
        compiler_params=_cparams(("parallel",), vmem_limit_bytes),
    )(x, enc, prep["ln_g"], prep["ln_b"],
      prep["self_w"], prep["self_b"], prep["cross_w"], prep["cross_b"])

    # ---- call 2: streamed FFN over the flattened (B*S, D) activation slab ----
    M = B * S
    tm = M if block_rows is None else block_rows
    assert M % tm == 0 and (tm == M or tm % 8 == 0)
    if ffn_block is None:
        ffn_block = min(I, 2048)                      # big chunks: v5e/v6e friendly
    assert I % ffn_block == 0 and (ffn_block == I or ffn_block % 128 == 0)

    x2f = x2.reshape(M, D)

    out = pl.pallas_call(
        _ffn_kernel,
        out_shape=jax.ShapeDtypeStruct((M, D), jnp.float32),
        grid_spec=pltpu.PrefetchScalarGridSpec(
            num_scalar_prefetch=0,
            grid=(M // tm, I // ffn_block),
            in_specs=[
                pl.BlockSpec((tm, D), lambda m, k: (m, 0)),          # x2 slab (residual)
                wspec((D,), lambda m, k: (0,)),                      # final-LN gamma
                wspec((D,), lambda m, k: (0,)),                      # final-LN beta
                pl.BlockSpec((D, ffn_block), lambda m, k: (0, k)),   # fc1 W chunk
                pl.BlockSpec((ffn_block,), lambda m, k: (k,)),       # fc1 b chunk
                pl.BlockSpec((ffn_block, D), lambda m, k: (k, 0)),   # fc2 W chunk
                wspec((D,), lambda m, k: (0,)),                      # fc2 b
            ],
            out_specs=pl.BlockSpec((tm, D), lambda m, k: (m, 0)),    # acc over k
            scratch_shapes=[pltpu.VMEM((tm, D), jnp.bfloat16)],      # cached LN(x2)
        ),
        compiler_params=_cparams(("parallel", "arbitrary"), vmem_limit_bytes),
    )(x2f, prep["ln_g"][2], prep["ln_b"][2],
      prep["fc1_w"], prep["fc1_b"], prep["fc2_w"], prep["fc2_b"])

    out = out.reshape(B, S, D)

    # Restore the (B, H, Skv, dh) present_key_value contract (free layout plumbing).
    def split_heads(t):
        Sk = t.shape[1]
        return t.reshape(B, Sk, num_heads, head_dim).transpose(0, 2, 1, 3)

    return out, split_heads(sk), split_heads(sv), split_heads(ck), split_heads(cv)


# --------------------------- pure-JAX reference ------------------------------

def _ref_layer(x, enc, p, num_heads):
    B, S, D = x.shape
    Se = enc.shape[1]
    dh = D // num_heads

    causal = jnp.where(jnp.arange(S)[:, None] >= jnp.arange(S)[None, :],
                       0.0, -1e9).astype(jnp.float32)
    smask = jnp.broadcast_to(causal, (B, S, S))
    cmask = jnp.zeros((B, S, Se), jnp.float32)

    def ln(v, g, b):
        mu = v.mean(-1, keepdims=True)
        var = ((v - mu) ** 2).mean(-1, keepdims=True)
        return (v - mu) / jnp.sqrt(var + 1e-5) * g + b

    def mha(h, kv, w, b, mask):
        Skv = kv.shape[1]
        q = (h @ w[0] + b[0]) * dh ** -0.5
        k = kv @ w[1] + b[1]
        v = kv @ w[2] + b[2]
        qh = q.reshape(B, S, num_heads, dh).transpose(0, 2, 1, 3)
        kh = k.reshape(B, Skv, num_heads, dh).transpose(0, 2, 1, 3)
        vh = v.reshape(B, Skv, num_heads, dh).transpose(0, 2, 1, 3)
        s = jnp.einsum("bhqd,bhkd->bhqk", qh, kh) + mask[:, None, :, :]
        pw = jax.nn.softmax(s, axis=-1)
        o = jnp.einsum("bhqk,bhkd->bhqd", pw, vh)
        o = o.transpose(0, 2, 1, 3).reshape(B, S, D)
        return o @ w[3] + b[3], kh, vh

    h = ln(x, p["ln_g"][0], p["ln_b"][0])
    a, sk, sv = mha(h, h, p["self_w"], p["self_b"], smask)
    x = x + a
    h = ln(x, p["ln_g"][1], p["ln_b"][1])
    a, ck, cv = mha(h, enc, p["cross_w"], p["cross_b"], cmask)
    x = x + a
    h = ln(x, p["ln_g"][2], p["ln_b"][2])
    h = jax.nn.gelu(h @ p["fc1_w"] + p["fc1_b"], approximate=False)
    h = h @ p["fc2_w"] + p["fc2_b"]
    return x + h, sk, sv, ck, cv


# ----------------------------------- main ------------------------------------

if __name__ == "__main__":
    B, S, Se, D, H, I = 2, 8, 8, 32, 4, 256

    key = jax.random.PRNGKey(0)
    keys = jax.random.split(key, 12)

    params = {
        "ln_g": jnp.ones((3, D), jnp.float32),
        "ln_b": jnp.zeros((3, D), jnp.float32),
        "self_w": 0.02 * jax.random.normal(keys[0], (4, D, D), jnp.float32),
        "self_b": 0.02 * jax.random.normal(keys[1], (4, D), jnp.float32),
        "cross_w": 0.02 * jax.random.normal(keys[2], (4, D, D), jnp.float32),
        "cross_b": 0.02 * jax.random.normal(keys[3], (4, D), jnp.float32),
        "fc1_w": 0.02 * jax.random.normal(keys[4], (D, I), jnp.float32),
        "fc1_b": 0.02 * jax.random.normal(keys[5], (I,), jnp.float32),
        "fc2_w": 0.02 * jax.random.normal(keys[6], (I, D), jnp.float32),
        "fc2_b": 0.02 * jax.random.normal(keys[7], (D,), jnp.float32),
    }

    x = jax.random.normal(keys[8], (B, S, D), jnp.float32)
    enc = jax.random.normal(keys[9], (B, Se, D), jnp.float32)

    # One-time weight prep (q-scale fold + bf16 cast), hoisted out of the call.
    prep = prepare_decoder_params(params, num_heads=H)

    # ffn_block=128 -> 2 FFN chunks per row block to exercise the streamed FFN path.
    outs = biogpt_decoder_layer(x, enc, prep, num_heads=H, ffn_block=128)
    outs = jax.block_until_ready(outs)

    # correctness check vs a pure-JAX f32 reference (bf16 MXU / bf16 KV / tanh
    # GELU => looser tolerance; this is the intended numerics contract)
    ref = _ref_layer(x, enc, params, H)
    for got, want in zip(outs, ref):
        assert got.shape == want.shape, f"shape mismatch {got.shape} vs {want.shape}"
        assert jnp.allclose(got.astype(jnp.float32), want, rtol=3e-2, atol=3e-2), \
            "mismatch vs reference"

    print("KERNEL_OK")
</pallas_src>

<mosaic_0001>
module attributes {stable_mosaic.version = 11 : i64} {
  func.func @_attn_kernel(%arg0: i32, %arg1: memref<1x8x32xf32, #tpu.memory_space<vmem>>, %arg2: memref<1x8x32xf32, #tpu.memory_space<vmem>>, %arg3: memref<3x32xf32, #tpu.memory_space<vmem>>, %arg4: memref<3x32xf32, #tpu.memory_space<vmem>>, %arg5: memref<4x32x32xbf16, #tpu.memory_space<vmem>>, %arg6: memref<4x32xf32, #tpu.memory_space<vmem>>, %arg7: memref<4x32x32xbf16, #tpu.memory_space<vmem>>, %arg8: memref<4x32xf32, #tpu.memory_space<vmem>>, %arg9: memref<1x8x32xf32, #tpu.memory_space<vmem>>, %arg10: memref<1x8x32xbf16, #tpu.memory_space<vmem>>, %arg11: memref<1x8x32xbf16, #tpu.memory_space<vmem>>, %arg12: memref<1x8x32xbf16, #tpu.memory_space<vmem>>, %arg13: memref<1x8x32xbf16, #tpu.memory_space<vmem>>) attributes {dimension_semantics = [#tpu.dimension_semantics<parallel>], iteration_bounds = array<i64: 2>, scalar_prefetch = 0 : i64, scratch_operands = 0 : i64, tpu.core_type = #tpu.core_type<tc>, window_params = [{transform_indices = @transform_0, window_bounds = array<i64: 1, 8, 32>}, {transform_indices = @transform_1, window_bounds = array<i64: 1, 8, 32>}, {pipeline_mode = #tpu.pipeline_mode<synchronous>, transform_indices = @transform_2, window_bounds = array<i64: 3, 32>}, {pipeline_mode = #tpu.pipeline_mode<synchronous>, transform_indices = @transform_3, window_bounds = array<i64: 3, 32>}, {pipeline_mode = #tpu.pipeline_mode<synchronous>, transform_indices = @transform_4, window_bounds = array<i64: 4, 32, 32>}, {pipeline_mode = #tpu.pipeline_mode<synchronous>, transform_indices = @transform_5, window_bounds = array<i64: 4, 32>}, {pipeline_mode = #tpu.pipeline_mode<synchronous>, transform_indices = @transform_6, window_bounds = array<i64: 4, 32, 32>}, {pipeline_mode = #tpu.pipeline_mode<synchronous>, transform_indices = @transform_7, window_bounds = array<i64: 4, 32>}, {transform_indices = @transform_8, window_bounds = array<i64: 1, 8, 32>}, {transform_indices = @transform_9, window_bounds = array<i64: 1, 8, 32>}, {transform_indices = @transform_10, window_bounds = array<i64: 1, 8, 32>}, {transform_indices = @transform_11, window_bounds = array<i64: 1, 8, 32>}, {transform_indices = @transform_12, window_bounds = array<i64: 1, 8, 32>}]} {
    %c0 = arith.constant 0 : index
    %c0_0 = arith.constant 0 : index
    %c0_1 = arith.constant 0 : index
    %0 = vector.load %arg1[%c0, %c0_0, %c0_1] : memref<1x8x32xf32, #tpu.memory_space<vmem>>, vector<1x8x32xf32>
    %1 = vector.shape_cast %0 : vector<1x8x32xf32> to vector<8x32xf32>
    %c0_2 = arith.constant 0 : index
    %c0_3 = arith.constant 0 : index
    %c0_4 = arith.constant 0 : index
    %2 = vector.load %arg2[%c0_2, %c0_3, %c0_4] : memref<1x8x32xf32, #tpu.memory_space<vmem>>, vector<1x8x32xf32>
    %3 = vector.shape_cast %2 : vector<1x8x32xf32> to vector<8x32xf32>
    %c0_5 = arith.constant 0 : index
    %c0_6 = arith.constant 0 : index
    %4 = vector.load %arg3[%c0_5, %c0_6] : memref<3x32xf32, #tpu.memory_space<vmem>>, vector<1x32xf32>
    %5 = vector.shape_cast %4 : vector<1x32xf32> to vector<32xf32>
    %c0_7 = arith.constant 0 : index
    %c0_8 = arith.constant 0 : index
    %6 = vector.load %arg4[%c0_7, %c0_8] : memref<3x32xf32, #tpu.memory_space<vmem>>, vector<1x32xf32>
    %7 = vector.shape_cast %6 : vector<1x32xf32> to vector<32xf32>
    %cst = arith.constant dense<0.000000e+00> : vector<8xf32>
    %8 = vector.multi_reduction <add>, %1, %cst [1] : vector<8x32xf32> to vector<8xf32>
    %9 = vector.shape_cast %8 : vector<8xf32> to vector<8x1xf32>
    %cst_9 = arith.constant 3.200000e+01 : f32
    %10 = vector.broadcast %cst_9 : f32 to vector<8x1xf32>
    %11 = arith.divf %9, %10 : vector<8x1xf32>
    %12 = vector.broadcast %11 : vector<8x1xf32> to vector<8x32xf32>
    %13 = arith.subf %1, %12 : vector<8x32xf32>
    %14 = arith.mulf %13, %13 : vector<8x32xf32>
    %cst_10 = arith.constant dense<0.000000e+00> : vector<8xf32>
    %15 = vector.multi_reduction <add>, %14, %cst_10 [1] : vector<8x32xf32> to vector<8xf32>
    %16 = vector.shape_cast %15 : vector<8xf32> to vector<8x1xf32>
    %cst_11 = arith.constant 3.200000e+01 : f32
    %17 = vector.broadcast %cst_11 : f32 to vector<8x1xf32>
    %18 = arith.divf %16, %17 : vector<8x1xf32>
    %19 = vector.broadcast %11 : vector<8x1xf32> to vector<8x32xf32>
    %20 = arith.subf %1, %19 : vector<8x32xf32>
    %cst_12 = arith.constant 9.99999974E-6 : f32
    %21 = vector.broadcast %cst_12 : f32 to vector<8x1xf32>
    %22 = arith.addf %18, %21 : vector<8x1xf32>
    %23 = math.rsqrt %22 : vector<8x1xf32>
    %24 = vector.broadcast %23 : vector<8x1xf32> to vector<8x32xf32>
    %25 = arith.mulf %20, %24 : vector<8x32xf32>
    %26 = vector.shape_cast %5 : vector<32xf32> to vector<1x32xf32>
    %27 = vector.broadcast %26 : vector<1x32xf32> to vector<8x32xf32>
    %28 = arith.mulf %25, %27 : vector<8x32xf32>
    %29 = vector.shape_cast %7 : vector<32xf32> to vector<1x32xf32>
    %30 = vector.broadcast %29 : vector<1x32xf32> to vector<8x32xf32>
    %31 = arith.addf %28, %30 : vector<8x32xf32>
    %32 = arith.truncf %31 : vector<8x32xf32> to vector<8x32xbf16>
    %c0_13 = arith.constant 0 : index
    %c0_14 = arith.constant 0 : index
    %c0_15 = arith.constant 0 : index
    %33 = vector.load %arg5[%c0_13, %c0_14, %c0_15] : memref<4x32x32xbf16, #tpu.memory_space<vmem>>, vector<1x32x32xbf16>
    %34 = vector.shape_cast %33 : vector<1x32x32xbf16> to vector<32x32xbf16>
    %cst_16 = arith.constant dense<0.000000e+00> : vector<8x32xf32>
    %35 = tpu.matmul %32, %34, %cst_16 {dimension_numbers = #tpu.dot_dimension_numbers<[1], [0], [0], [1], [0, 0, 1, 1], [], []>} : vector<8x32xbf16>, vector<32x32xbf16>, vector<8x32xf32> -> vector<8x32xf32>
    %c0_17 = arith.constant 0 : index
    %c0_18 = arith.constant 0 : index
    %36 = vector.load %arg6[%c0_17, %c0_18] : memref<4x32xf32, #tpu.memory_space<vmem>>, vector<1x32xf32>
    %37 = vector.shape_cast %36 : vector<1x32xf32> to vector<32xf32>
    %38 = vector.shape_cast %37 : vector<32xf32> to vector<1x32xf32>
    %39 = vector.broadcast %38 : vector<1x32xf32> to vector<8x32xf32>
    %40 = arith.addf %35, %39 : vector<8x32xf32>
    %41 = arith.truncf %40 : vector<8x32xf32> to vector<8x32xbf16>
    %c1 = arith.constant 1 : index
    %c0_19 = arith.constant 0 : index
    %c0_20 = arith.constant 0 : index
    %42 = vector.load %arg5[%c1, %c0_19, %c0_20] : memref<4x32x32xbf16, #tpu.memory_space<vmem>>, vector<1x32x32xbf16>
    %43 = vector.shape_cast %42 : vector<1x32x32xbf16> to vector<32x32xbf16>
    %cst_21 = arith.constant dense<0.000000e+00> : vector<8x32xf32>
    %44 = tpu.matmul %32, %43, %cst_21 {dimension_numbers = #tpu.dot_dimension_numbers<[1], [0], [0], [1], [0, 0, 1, 1], [], []>} : vector<8x32xbf16>, vector<32x32xbf16>, vector<8x32xf32> -> vector<8x32xf32>
    %c1_22 = arith.constant 1 : index
    %c0_23 = arith.constant 0 : index
    %45 = vector.load %arg6[%c1_22, %c0_23] : memref<4x32xf32, #tpu.memory_space<vmem>>, vector<1x32xf32>
    %46 = vector.shape_cast %45 : vector<1x32xf32> to vector<32xf32>
    %47 = vector.shape_cast %46 : vector<32xf32> to vector<1x32xf32>
    %48 = vector.broadcast %47 : vector<1x32xf32> to vector<8x32xf32>
    %49 = arith.addf %44, %48 : vector<8x32xf32>
    %50 = arith.truncf %49 : vector<8x32xf32> to vector<8x32xbf16>
    %c2 = arith.constant 2 : index
    %c0_24 = arith.constant 0 : index
    %c0_25 = arith.constant 0 : index
    %51 = vector.load %arg5[%c2, %c0_24, %c0_25] : memref<4x32x32xbf16, #tpu.memory_space<vmem>>, vector<1x32x32xbf16>
    %52 = vector.shape_cast %51 : vector<1x32x32xbf16> to vector<32x32xbf16>
    %cst_26 = arith.constant dense<0.000000e+00> : vector<8x32xf32>
    %53 = tpu.matmul %32, %52, %cst_26 {dimension_numbers = #tpu.dot_dimension_numbers<[1], [0], [0], [1], [0, 0, 1, 1], [], []>} : vector<8x32xbf16>, vector<32x32xbf16>, vector<8x32xf32> -> vector<8x32xf32>
    %c2_27 = arith.constant 2 : index
    %c0_28 = arith.constant 0 : index
    %54 = vector.load %arg6[%c2_27, %c0_28] : memref<4x32xf32, #tpu.memory_space<vmem>>, vector<1x32xf32>
    %55 = vector.shape_cast %54 : vector<1x32xf32> to vector<32xf32>
    %56 = vector.shape_cast %55 : vector<32xf32> to vector<1x32xf32>
    %57 = vector.broadcast %56 : vector<1x32xf32> to vector<8x32xf32>
    %58 = arith.addf %53, %57 : vector<8x32xf32>
    %59 = arith.truncf %58 : vector<8x32xf32> to vector<8x32xbf16>
    %60 = vector.shape_cast %41 : vector<8x32xbf16> to vector<8x4x8xbf16>
    %61 = tpu.transpose %60, [1, 0, 2] : vector<8x4x8xbf16> -> vector<4x8x8xbf16>
    %62 = vector.shape_cast %50 : vector<8x32xbf16> to vector<8x4x8xbf16>
    %63 = tpu.transpose %62, [1, 0, 2] : vector<8x4x8xbf16> -> vector<4x8x8xbf16>
    %64 = vector.shape_cast %59 : vector<8x32xbf16> to vector<8x4x8xbf16>
    %65 = tpu.transpose %64, [1, 0, 2] : vector<8x4x8xbf16> -> vector<4x8x8xbf16>
    "tpu.trace_start"() <{level = 10 : i32, message = "hqd,hkd->hqk"}> : () -> ()
    %cst_29 = arith.constant dense<0.000000e+00> : vector<4x8x8xf32>
    %66 = tpu.matmul %61, %63, %cst_29 {dimension_numbers = #tpu.dot_dimension_numbers<[2], [2], [1], [1], [0, 0, 0, 1, 1, 1], [0], [0]>} : vector<4x8x8xbf16>, vector<4x8x8xbf16>, vector<4x8x8xf32> -> vector<4x8x8xf32>
    "tpu.trace_stop"() : () -> ()
    %67 = tpu.iota {dimensions = array<i32: 0>} : vector<8x8xi32>
    %68 = tpu.iota {dimensions = array<i32: 1>} : vector<8x8xi32>
    %69 = arith.cmpi sge, %67, %68 : vector<8x8xi32>
    %70 = vector.shape_cast %69 : vector<8x8xi1> to vector<1x8x8xi1>
    %cst_30 = arith.constant -1.000000e+30 : f32
    %71 = vector.shape_cast %70 : vector<1x8x8xi1> to vector<1x8x8xi1>
    %72 = vector.broadcast %71 : vector<1x8x8xi1> to vector<4x8x8xi1>
    %73 = vector.broadcast %cst_30 : f32 to vector<4x8x8xf32>
    %74 = arith.select %72, %66, %73 : vector<4x8x8xi1>, vector<4x8x8xf32>
    %cst_31 = arith.constant dense<0xFF800000> : vector<4x8xf32>
    %75 = vector.multi_reduction <maximumf>, %74, %cst_31 [2] : vector<4x8x8xf32> to vector<4x8xf32>
    %76 = vector.shape_cast %75 : vector<4x8xf32> to vector<4x8x1xf32>
    %77 = vector.broadcast %76 : vector<4x8x1xf32> to vector<4x8x8xf32>
    %78 = arith.subf %74, %77 : vector<4x8x8xf32>
    %79 = math.exp %78 : vector<4x8x8xf32>
    %cst_32 = arith.constant dense<0.000000e+00> : vector<4x8xf32>
    %80 = vector.multi_reduction <add>, %79, %cst_32 [2] : vector<4x8x8xf32> to vector<4x8xf32>
    %81 = vector.shape_cast %80 : vector<4x8xf32> to vector<4x8x1xf32>
    %82 = tpu.reciprocal %81 {approx = true} : vector<4x8x1xf32> -> vector<4x8x1xf32>
    %83 = vector.broadcast %82 : vector<4x8x1xf32> to vector<4x8x8xf32>
    %84 = arith.mulf %79, %83 : vector<4x8x8xf32>
    %85 = arith.truncf %84 : vector<4x8x8xf32> to vector<4x8x8xbf16>
    "tpu.trace_start"() <{level = 10 : i32, message = "hqk,hkd->hqd"}> : () -> ()
    %cst_33 = arith.constant dense<0.000000e+00> : vector<4x8x8xf32>
    %86 = tpu.matmul %85, %65, %cst_33 {dimension_numbers = #tpu.dot_dimension_numbers<[2], [1], [1], [2], [0, 0, 0, 1, 1, 2], [0], [0]>} : vector<4x8x8xbf16>, vector<4x8x8xbf16>, vector<4x8x8xf32> -> vector<4x8x8xf32>
    "tpu.trace_stop"() : () -> ()
    %87 = arith.truncf %86 : vector<4x8x8xf32> to vector<4x8x8xbf16>
    %88 = tpu.transpose %87, [1, 0, 2] : vector<4x8x8xbf16> -> vector<8x4x8xbf16>
    %89 = vector.shape_cast %88 : vector<8x4x8xbf16> to vector<8x32xbf16>
    %c3 = arith.constant 3 : index
    %c0_34 = arith.constant 0 : index
    %c0_35 = arith.constant 0 : index
    %90 = vector.load %arg5[%c3, %c0_34, %c0_35] : memref<4x32x32xbf16, #tpu.memory_space<vmem>>, vector<1x32x32xbf16>
    %91 = vector.shape_cast %90 : vector<1x32x32xbf16> to vector<32x32xbf16>
    %cst_36 = arith.constant dense<0.000000e+00> : vector<8x32xf32>
    %92 = tpu.matmul %89, %91, %cst_36 {dimension_numbers = #tpu.dot_dimension_numbers<[1], [0], [0], [1], [0, 0, 1, 1], [], []>} : vector<8x32xbf16>, vector<32x32xbf16>, vector<8x32xf32> -> vector<8x32xf32>
    %c3_37 = arith.constant 3 : index
    %c0_38 = arith.constant 0 : index
    %93 = vector.load %arg6[%c3_37, %c0_38] : memref<4x32xf32, #tpu.memory_space<vmem>>, vector<1x32xf32>
    %94 = vector.shape_cast %93 : vector<1x32xf32> to vector<32xf32>
    %95 = vector.shape_cast %94 : vector<32xf32> to vector<1x32xf32>
    %96 = vector.broadcast %95 : vector<1x32xf32> to vector<8x32xf32>
    %97 = arith.addf %92, %96 : vector<8x32xf32>
    %c0_39 = arith.constant 0 : index
    %c0_40 = arith.constant 0 : index
    %c0_41 = arith.constant 0 : index
    %98 = vector.load %arg10[%c0_39, %c0_40, %c0_41] : memref<1x8x32xbf16, #tpu.memory_space<vmem>>, vector<1x8x32xbf16>
    %99 = vector.shape_cast %98 : vector<1x8x32xbf16> to vector<8x32xbf16>
    %100 = vector.shape_cast %50 : vector<8x32xbf16> to vector<1x8x32xbf16>
    tpu.vector_store %arg10[%c0_39, %c0_40, %c0_41], %100 {strides = array<i32>} : memref<1x8x32xbf16, #tpu.memory_space<vmem>>, vector<1x8x32xbf16>,
    %c0_42 = arith.constant 0 : index
    %c0_43 = arith.constant 0 : index
    %c0_44 = arith.constant 0 : index
    %101 = vector.load %arg11[%c0_42, %c0_43, %c0_44] : memref<1x8x32xbf16, #tpu.memory_space<vmem>>, vector<1x8x32xbf16>
    %102 = vector.shape_cast %101 : vector<1x8x32xbf16> to vector<8x32xbf16>
    %103 = vector.shape_cast %59 : vector<8x32xbf16> to vector<1x8x32xbf16>
    tpu.vector_store %arg11[%c0_42, %c0_43, %c0_44], %103 {strides = array<i32>} : memref<1x8x32xbf16, #tpu.memory_space<vmem>>, vector<1x8x32xbf16>,
    %104 = arith.addf %1, %97 : vector<8x32xf32>
    %c1_45 = arith.constant 1 : index
    %c0_46 = arith.constant 0 : index
    %105 = vector.load %arg3[%c1_45, %c0_46] : memref<3x32xf32, #tpu.memory_space<vmem>>, vector<1x32xf32>
    %106 = vector.shape_cast %105 : vector<1x32xf32> to vector<32xf32>
    %c1_47 = arith.constant 1 : index
    %c0_48 = arith.constant 0 : index
    %107 = vector.load %arg4[%c1_47, %c0_48] : memref<3x32xf32, #tpu.memory_space<vmem>>, vector<1x32xf32>
    %108 = vector.shape_cast %107 : vector<1x32xf32> to vector<32xf32>
    %cst_49 = arith.constant dense<0.000000e+00> : vector<8xf32>
    %109 = vector.multi_reduction <add>, %104, %cst_49 [1] : vector<8x32xf32> to vector<8xf32>
    %110 = vector.shape_cast %109 : vector<8xf32> to vector<8x1xf32>
    %cst_50 = arith.constant 3.200000e+01 : f32
    %111 = vector.broadcast %cst_50 : f32 to vector<8x1xf32>
    %112 = arith.divf %110, %111 : vector<8x1xf32>
    %113 = vector.broadcast %112 : vector<8x1xf32> to vector<8x32xf32>
    %114 = arith.subf %104, %113 : vector<8x32xf32>
    %115 = arith.mulf %114, %114 : vector<8x32xf32>
    %cst_51 = arith.constant dense<0.000000e+00> : vector<8xf32>
    %116 = vector.multi_reduction <add>, %115, %cst_51 [1] : vector<8x32xf32> to vector<8xf32>
    %117 = vector.shape_cast %116 : vector<8xf32> to vector<8x1xf32>
    %cst_52 = arith.constant 3.200000e+01 : f32
    %118 = vector.broadcast %cst_52 : f32 to vector<8x1xf32>
    %119 = arith.divf %117, %118 : vector<8x1xf32>
    %120 = vector.broadcast %112 : vector<8x1xf32> to vector<8x32xf32>
    %121 = arith.subf %104, %120 : vector<8x32xf32>
    %cst_53 = arith.constant 9.99999974E-6 : f32
    %122 = vector.broadcast %cst_53 : f32 to vector<8x1xf32>
    %123 = arith.addf %119, %122 : vector<8x1xf32>
    %124 = math.rsqrt %123 : vector<8x1xf32>
    %125 = vector.broadcast %124 : vector<8x1xf32> to vector<8x32xf32>
    %126 = arith.mulf %121, %125 : vector<8x32xf32>
    %127 = vector.shape_cast %106 : vector<32xf32> to vector<1x32xf32>
    %128 = vector.broadcast %127 : vector<1x32xf32> to vector<8x32xf32>
    %129 = arith.mulf %126, %128 : vector<8x32xf32>
    %130 = vector.shape_cast %108 : vector<32xf32> to vector<1x32xf32>
    %131 = vector.broadcast %130 : vector<1x32xf32> to vector<8x32xf32>
    %132 = arith.addf %129, %131 : vector<8x32xf32>
    %133 = arith.truncf %132 : vector<8x32xf32> to vector<8x32xbf16>
    %134 = arith.truncf %3 : vector<8x32xf32> to vector<8x32xbf16>
    %c0_54 = arith.constant 0 : index
    %c0_55 = arith.constant 0 : index
    %c0_56 = arith.constant 0 : index
    %135 = vector.load %arg7[%c0_54, %c0_55, %c0_56] : memref<4x32x32xbf16, #tpu.memory_space<vmem>>, vector<1x32x32xbf16>
    %136 = vector.shape_cast %135 : vector<1x32x32xbf16> to vector<32x32xbf16>
    %cst_57 = arith.constant dense<0.000000e+00> : vector<8x32xf32>
    %137 = tpu.matmul %133, %136, %cst_57 {dimension_numbers = #tpu.dot_dimension_numbers<[1], [0], [0], [1], [0, 0, 1, 1], [], []>} : vector<8x32xbf16>, vector<32x32xbf16>, vector<8x32xf32> -> vector<8x32xf32>
    %c0_58 = arith.constant 0 : index
    %c0_59 = arith.constant 0 : index
    %138 = vector.load %arg8[%c0_58, %c0_59] : memref<4x32xf32, #tpu.memory_space<vmem>>, vector<1x32xf32>
    %139 = vector.shape_cast %138 : vector<1x32xf32> to vector<32xf32>
    %140 = vector.shape_cast %139 : vector<32xf32> to vector<1x32xf32>
    %141 = vector.broadcast %140 : vector<1x32xf32> to vector<8x32xf32>
    %142 = arith.addf %137, %141 : vector<8x32xf32>
    %143 = arith.truncf %142 : vector<8x32xf32> to vector<8x32xbf16>
    %c1_60 = arith.constant 1 : index
    %c0_61 = arith.constant 0 : index
    %c0_62 = arith.constant 0 : index
    %144 = vector.load %arg7[%c1_60, %c0_61, %c0_62] : memref<4x32x32xbf16, #tpu.memory_space<vmem>>, vector<1x32x32xbf16>
    %145 = vector.shape_cast %144 : vector<1x32x32xbf16> to vector<32x32xbf16>
    %cst_63 = arith.constant dense<0.000000e+00> : vector<8x32xf32>
    %146 = tpu.matmul %134, %145, %cst_63 {dimension_numbers = #tpu.dot_dimension_numbers<[1], [0], [0], [1], [0, 0, 1, 1], [], []>} : vector<8x32xbf16>, vector<32x32xbf16>, vector<8x32xf32> -> vector<8x32xf32>
    %c1_64 = arith.constant 1 : index
    %c0_65 = arith.constant 0 : index
    %147 = vector.load %arg8[%c1_64, %c0_65] : memref<4x32xf32, #tpu.memory_space<vmem>>, vector<1x32xf32>
    %148 = vector.shape_cast %147 : vector<1x32xf32> to vector<32xf32>
    %149 = vector.shape_cast %148 : vector<32xf32> to vector<1x32xf32>
    %150 = vector.broadcast %149 : vector<1x32xf32> to vector<8x32xf32>
    %151 = arith.addf %146, %150 : vector<8x32xf32>
    %152 = arith.truncf %151 : vector<8x32xf32> to vector<8x32xbf16>
    %c2_66 = arith.constant 2 : index
    %c0_67 = arith.constant 0 : index
    %c0_68 = arith.constant 0 : index
    %153 = vector.load %arg7[%c2_66, %c0_67, %c0_68] : memref<4x32x32xbf16, #tpu.memory_space<vmem>>, vector<1x32x32xbf16>
    %154 = vector.shape_cast %153 : vector<1x32x32xbf16> to vector<32x32xbf16>
    %cst_69 = arith.constant dense<0.000000e+00> : vector<8x32xf32>
    %155 = tpu.matmul %134, %154, %cst_69 {dimension_numbers = #tpu.dot_dimension_numbers<[1], [0], [0], [1], [0, 0, 1, 1], [], []>} : vector<8x32xbf16>, vector<32x32xbf16>, vector<8x32xf32> -> vector<8x32xf32>
    %c2_70 = arith.constant 2 : index
    %c0_71 = arith.constant 0 : index
    %156 = vector.load %arg8[%c2_70, %c0_71] : memref<4x32xf32, #tpu.memory_space<vmem>>, vector<1x32xf32>
    %157 = vector.shape_cast %156 : vector<1x32xf32> to vector<32xf32>
    %158 = vector.shape_cast %157 : vector<32xf32> to vector<1x32xf32>
    %159 = vector.broadcast %158 : vector<1x32xf32> to vector<8x32xf32>
    %160 = arith.addf %155, %159 : vector<8x32xf32>
    %161 = arith.truncf %160 : vector<8x32xf32> to vector<8x32xbf16>
    %162 = vector.shape_cast %143 : vector<8x32xbf16> to vector<8x4x8xbf16>
    %163 = tpu.transpose %162, [1, 0, 2] : vector<8x4x8xbf16> -> vector<4x8x8xbf16>
    %164 = vector.shape_cast %152 : vector<8x32xbf16> to vector<8x4x8xbf16>
    %165 = tpu.transpose %164, [1, 0, 2] : vector<8x4x8xbf16> -> vector<4x8x8xbf16>
    %166 = vector.shape_cast %161 : vector<8x32xbf16> to vector<8x4x8xbf16>
    %167 = tpu.transpose %166, [1, 0, 2] : vector<8x4x8xbf16> -> vector<4x8x8xbf16>
    "tpu.trace_start"() <{level = 10 : i32, message = "hqd,hkd->hqk"}> : () -> ()
    %cst_72 = arith.constant dense<0.000000e+00> : vector<4x8x8xf32>
    %168 = tpu.matmul %163, %165, %cst_72 {dimension_numbers = #tpu.dot_dimension_numbers<[2], [2], [1], [1], [0, 0, 0, 1, 1, 1], [0], [0]>} : vector<4x8x8xbf16>, vector<4x8x8xbf16>, vector<4x8x8xf32> -> vector<4x8x8xf32>
    "tpu.trace_stop"() : () -> ()
    %cst_73 = arith.constant dense<0xFF800000> : vector<4x8xf32>
    %169 = vector.multi_reduction <maximumf>, %168, %cst_73 [2] : vector<4x8x8xf32> to vector<4x8xf32>
    %170 = vector.shape_cast %169 : vector<4x8xf32> to vector<4x8x1xf32>
    %171 = vector.broadcast %170 : vector<4x8x1xf32> to vector<4x8x8xf32>
    %172 = arith.subf %168, %171 : vector<4x8x8xf32>
    %173 = math.exp %172 : vector<4x8x8xf32>
    %cst_74 = arith.constant dense<0.000000e+00> : vector<4x8xf32>
    %174 = vector.multi_reduction <add>, %173, %cst_74 [2] : vector<4x8x8xf32> to vector<4x8xf32>
    %175 = vector.shape_cast %174 : vector<4x8xf32> to vector<4x8x1xf32>
    %176 = tpu.reciprocal %175 {approx = true} : vector<4x8x1xf32> -> vector<4x8x1xf32>
    %177 = vector.broadcast %176 : vector<4x8x1xf32> to vector<4x8x8xf32>
    %178 = arith.mulf %173, %177 : vector<4x8x8xf32>
    %179 = arith.truncf %178 : vector<4x8x8xf32> to vector<4x8x8xbf16>
    "tpu.trace_start"() <{level = 10 : i32, message = "hqk,hkd->hqd"}> : () -> ()
    %cst_75 = arith.constant dense<0.000000e+00> : vector<4x8x8xf32>
    %180 = tpu.matmul %179, %167, %cst_75 {dimension_numbers = #tpu.dot_dimension_numbers<[2], [1], [1], [2], [0, 0, 0, 1, 1, 2], [0], [0]>} : vector<4x8x8xbf16>, vector<4x8x8xbf16>, vector<4x8x8xf32> -> vector<4x8x8xf32>
    "tpu.trace_stop"() : () -> ()
    %181 = arith.truncf %180 : vector<4x8x8xf32> to vector<4x8x8xbf16>
    %182 = tpu.transpose %181, [1, 0, 2] : vector<4x8x8xbf16> -> vector<8x4x8xbf16>
    %183 = vector.shape_cast %182 : vector<8x4x8xbf16> to vector<8x32xbf16>
    %c3_76 = arith.constant 3 : index
    %c0_77 = arith.constant 0 : index
    %c0_78 = arith.constant 0 : index
    %184 = vector.load %arg7[%c3_76, %c0_77, %c0_78] : memref<4x32x32xbf16, #tpu.memory_space<vmem>>, vector<1x32x32xbf16>
    %185 = vector.shape_cast %184 : vector<1x32x32xbf16> to vector<32x32xbf16>
    %cst_79 = arith.constant dense<0.000000e+00> : vector<8x32xf32>
    %186 = tpu.matmul %183, %185, %cst_79 {dimension_numbers = #tpu.dot_dimension_numbers<[1], [0], [0], [1], [0, 0, 1, 1], [], []>} : vector<8x32xbf16>, vector<32x32xbf16>, vector<8x32xf32> -> vector<8x32xf32>
    %c3_80 = arith.constant 3 : index
    %c0_81 = arith.constant 0 : index
    %187 = vector.load %arg8[%c3_80, %c0_81] : memref<4x32xf32, #tpu.memory_space<vmem>>, vector<1x32xf32>
    %188 = vector.shape_cast %187 : vector<1x32xf32> to vector<32xf32>
    %189 = vector.shape_cast %188 : vector<32xf32> to vector<1x32xf32>
    %190 = vector.broadcast %189 : vector<1x32xf32> to vector<8x32xf32>
    %191 = arith.addf %186, %190 : vector<8x32xf32>
    %c0_82 = arith.constant 0 : index
    %c0_83 = arith.constant 0 : index
    %c0_84 = arith.constant 0 : index
    %192 = vector.load %arg12[%c0_82, %c0_83, %c0_84] : memref<1x8x32xbf16, #tpu.memory_space<vmem>>, vector<1x8x32xbf16>
    %193 = vector.shape_cast %192 : vector<1x8x32xbf16> to vector<8x32xbf16>
    %194 = vector.shape_cast %152 : vector<8x32xbf16> to vector<1x8x32xbf16>
    tpu.vector_store %arg12[%c0_82, %c0_83, %c0_84], %194 {strides = array<i32>} : memref<1x8x32xbf16, #tpu.memory_space<vmem>>, vector<1x8x32xbf16>,
    %c0_85 = arith.constant 0 : index
    %c0_86 = arith.constant 0 : index
    %c0_87 = arith.constant 0 : index
    %195 = vector.load %arg13[%c0_85, %c0_86, %c0_87] : memref<1x8x32xbf16, #tpu.memory_space<vmem>>, vector<1x8x32xbf16>
    %196 = vector.shape_cast %195 : vector<1x8x32xbf16> to vector<8x32xbf16>
    %197 = vector.shape_cast %161 : vector<8x32xbf16> to vector<1x8x32xbf16>
    tpu.vector_store %arg13[%c0_85, %c0_86, %c0_87], %197 {strides = array<i32>} : memref<1x8x32xbf16, #tpu.memory_space<vmem>>, vector<1x8x32xbf16>,
    %198 = arith.addf %104, %191 : vector<8x32xf32>
    %c0_88 = arith.constant 0 : index
    %c0_89 = arith.constant 0 : index
    %c0_90 = arith.constant 0 : index
    %199 = vector.load %arg9[%c0_88, %c0_89, %c0_90] : memref<1x8x32xf32, #tpu.memory_space<vmem>>, vector<1x8x32xf32>
    %200 = vector.shape_cast %199 : vector<1x8x32xf32> to vector<8x32xf32>
    %201 = vector.shape_cast %198 : vector<8x32xf32> to vector<1x8x32xf32>
    tpu.vector_store %arg9[%c0_88, %c0_89, %c0_90], %201 {strides = array<i32>} : memref<1x8x32xf32, #tpu.memory_space<vmem>>, vector<1x8x32xf32>,
    return
  }
  func.func @transform_0(%arg0: i32) -> (i32, i32, i32) {
    %c0_i32 = arith.constant 0 : i32
    %c0_i32_0 = arith.constant 0 : i32
    %c0_i32_1 = arith.constant 0 : i32
    return %arg0, %c0_i32, %c0_i32_0 : i32, i32, i32
  }
  func.func @transform_1(%arg0: i32) -> (i32, i32, i32) {
    %c0_i32 = arith.constant 0 : i32
    %c0_i32_0 = arith.constant 0 : i32
    %c0_i32_1 = arith.constant 0 : i32
    return %arg0, %c0_i32, %c0_i32_0 : i32, i32, i32
  }
  func.func @transform_2(%arg0: i32) -> (i32, i32) {
    %c0_i32 = arith.constant 0 : i32
    %c0_i32_0 = arith.constant 0 : i32
    %c0_i32_1 = arith.constant 0 : i32
    return %c0_i32, %c0_i32_0 : i32, i32
  }
  func.func @transform_3(%arg0: i32) -> (i32, i32) {
    %c0_i32 = arith.constant 0 : i32
    %c0_i32_0 = arith.constant 0 : i32
    %c0_i32_1 = arith.constant 0 : i32
    return %c0_i32, %c0_i32_0 : i32, i32
  }
  func.func @transform_4(%arg0: i32) -> (i32, i32, i32) {
    %c0_i32 = arith.constant 0 : i32
    %c0_i32_0 = arith.constant 0 : i32
    %c0_i32_1 = arith.constant 0 : i32
    %c0_i32_2 = arith.constant 0 : i32
    return %c0_i32, %c0_i32_0, %c0_i32_1 : i32, i32, i32
  }
  func.func @transform_5(%arg0: i32) -> (i32, i32) {
    %c0_i32 = arith.constant 0 : i32
    %c0_i32_0 = arith.constant 0 : i32
    %c0_i32_1 = arith.constant 0 : i32
    return %c0_i32, %c0_i32_0 : i32, i32
  }
  func.func @transform_6(%arg0: i32) -> (i32, i32, i32) {
    %c0_i32 = arith.constant 0 : i32
    %c0_i32_0 = arith.constant 0 : i32
    %c0_i32_1 = arith.constant 0 : i32
    %c0_i32_2 = arith.constant 0 : i32
    return %c0_i32, %c0_i32_0, %c0_i32_1 : i32, i32, i32
  }
  func.func @transform_7(%arg0: i32) -> (i32, i32) {
    %c0_i32 = arith.constant 0 : i32
    %c0_i32_0 = arith.constant 0 : i32
    %c0_i32_1 = arith.constant 0 : i32
    return %c0_i32, %c0_i32_0 : i32, i32
  }
  func.func @transform_8(%arg0: i32) -> (i32, i32, i32) {
    %c0_i32 = arith.constant 0 : i32
    %c0_i32_0 = arith.constant 0 : i32
    %c0_i32_1 = arith.constant 0 : i32
    return %arg0, %c0_i32, %c0_i32_0 : i32, i32, i32
  }
  func.func @transform_9(%arg0: i32) -> (i32, i32, i32) {
    %c0_i32 = arith.constant 0 : i32
    %c0_i32_0 = arith.constant 0 : i32
    %c0_i32_1 = arith.constant 0 : i32
    return %arg0, %c0_i32, %c0_i32_0 : i32, i32, i32
  }
  func.func @transform_10(%arg0: i32) -> (i32, i32, i32) {
    %c0_i32 = arith.constant 0 : i32
    %c0_i32_0 = arith.constant 0 : i32
    %c0_i32_1 = arith.constant 0 : i32
    return %arg0, %c0_i32, %c0_i32_0 : i32, i32, i32
  }
  func.func @transform_11(%arg0: i32) -> (i32, i32, i32) {
    %c0_i32 = arith.constant 0 : i32
    %c0_i32_0 = arith.constant 0 : i32
    %c0_i32_1 = arith.constant 0 : i32
    return %arg0, %c0_i32, %c0_i32_0 : i32, i32, i32
  }
  func.func @transform_12(%arg0: i32) -> (i32, i32, i32) {
    %c0_i32 = arith.constant 0 : i32
    %c0_i32_0 = arith.constant 0 : i32
    %c0_i32_1 = arith.constant 0 : i32
    return %arg0, %c0_i32, %c0_i32_0 : i32, i32, i32
  }
}

</mosaic_0001>

<llo_original>
// kernel: tpu_custom_call.1
$region0: #{tpu_custom_call.1}
  #allocation0 [shape = 'u32[]', space=smem, size = 0x4, offset = 0x4, fixed_abs, tag = 'smem constant byte address 0x4 - core index']
  #allocation1 [shape = 'u32[144,128]{1,0:T(1,128)}', space=vmem, size = 0x12000, scoped, tag = 'internal scratch']
  %s0 = inlined_call_operand.hbm [shape: f32[2,8,32], index: 0, kind: input, shape index: {}]
  %s1 = inlined_call_operand.hbm [shape: f32[2,8,32], index: 1, kind: input, shape index: {}]
  %s2 = inlined_call_operand.vmem [shape: f32[3,32], index: 2, kind: input, shape index: {}]
  %s3 = inlined_call_operand.vmem [shape: f32[3,32], index: 3, kind: input, shape index: {}]
  %s4 = inlined_call_operand.hbm [shape: bf16[4,32,32], index: 4, kind: input, shape index: {}]
  %s5 = inlined_call_operand.vmem [shape: f32[4,32], index: 5, kind: input, shape index: {}]
  %s6 = inlined_call_operand.hbm [shape: bf16[4,32,32], index: 6, kind: input, shape index: {}]
  %s7 = inlined_call_operand.vmem [shape: f32[4,32], index: 7, kind: input, shape index: {}]
  %s8 = inlined_call_operand.hbm [shape: f32[2,8,32], index: 8, kind: output, shape index: {0}]
  %s9 = inlined_call_operand.hbm [shape: bf16[2,8,32], index: 9, kind: output, shape index: {1}]
  %s10 = inlined_call_operand.hbm [shape: bf16[2,8,32], index: 10, kind: output, shape index: {2}]
  %s11 = inlined_call_operand.hbm [shape: bf16[2,8,32], index: 11, kind: output, shape index: {3}]
  %s12 = inlined_call_operand.hbm [shape: bf16[2,8,32], index: 12, kind: output, shape index: {4}]
  %13 = xla_tuple %s8, %s9, %s10, %s11, %s12
  %s14 = sld [smem:[#allocation0]]
  $region113: #{tpu_custom_call.1} parent=0
    _
  %s16 = ssub.s32 1, %s14
  %s17 = scalar_select 0, %s16, %s14
  $region1: #{tpu_custom_call.1} parent=0
    #allocation2 [shape = 'u8[8192]{0}', space=vmem, size = 0x2000, scoped, tag = 'input window, operand 0']
    #allocation3 [shape = 's32[2]{0}', space=sflag, size = 0x8, scoped, tag = 'scoped memory for tpu_custom_call.1']
    #allocation4 [shape = 's32[2]{0}', space=sflag, size = 0x8, scoped, tag = 'scoped memory for tpu_custom_call.1']
    #allocation5 [shape = 'u8[8192]{0}', space=vmem, size = 0x2000, scoped, tag = 'input window, operand 1']
    #allocation6 [shape = 's32[2]{0}', space=sflag, size = 0x8, scoped, tag = 'scoped memory for tpu_custom_call.1']
    #allocation7 [shape = 'u8[32768]{0}', space=vmem, size = 0x8000, scoped, tag = 'input window, operand 4, single buffered']
    #allocation8 [shape = 'u8[32768]{0}', space=vmem, size = 0x8000, scoped, tag = 'input window, operand 6, single buffered']
    #allocation9 [shape = 's32[1]{0}', space=sflag, size = 0x4, scoped, tag = 'scoped memory for tpu_custom_call.1']
    #allocation10 [shape = 'u8[8192]{0}', space=vmem, size = 0x2000, scoped, tag = 'output window, operand 0']
    #allocation11 [shape = 'u8[4096]{0}', space=vmem, size = 0x1000, scoped, tag = 'output window, operand 1']
    #allocation12 [shape = 's32[2]{0}', space=sflag, size = 0x8, scoped, tag = 'scoped memory for tpu_custom_call.1']
    #allocation13 [shape = 'u8[4096]{0}', space=vmem, size = 0x1000, scoped, tag = 'output window, operand 2']
    #allocation14 [shape = 'u8[4096]{0}', space=vmem, size = 0x1000, scoped, tag = 'output window, operand 3']
    #allocation15 [shape = 's32[2]{0}', space=sflag, size = 0x8, scoped, tag = 'scoped memory for tpu_custom_call.1']
    #allocation16 [shape = 'u8[4096]{0}', space=vmem, size = 0x1000, scoped, tag = 'output window, operand 4']
    %18 = vsyncpa [#allocation3], 0
    %s19 = scalar_lea.sflag [#allocation3], 1
    %20 = vsyncpa %s19, 0
    %21 = vsyncpa [#allocation6], 0
    %s22 = scalar_lea.sflag [#allocation6], 1
    %23 = vsyncpa %s22, 0
    %24 = vsyncpa [#allocation9], 0
    %25 = vsyncpa [#allocation4], 0
    %s26 = scalar_lea.sflag [#allocation4], 1
    %27 = vsyncpa %s26, 0
    %28 = vsyncpa [#allocation12], 0
    %s29 = scalar_lea.sflag [#allocation12], 1
    %30 = vsyncpa %s29, 0
    %31 = vsyncpa [#allocation15], 0
    %s32 = scalar_lea.sflag [#allocation15], 1
    %33 = vsyncpa %s32, 0
    loop: start=0, step=1, limit=4
    $region2: #{tpu_custom_call.1} parent=1 // loop_pre_header
      _
    $region3: #{tpu_custom_call.1} parent=1 // loop_header
      %s35 = sphi 0, %s39
      %p36 = scmp.ge.s32.totalorder %s35, 4
      %s45 = sphi 0, %s47
      %s48 = sphi 0, %s45
      %s49 = sphi 0, %s48
      %s65 = sphi 0, %s49
      %s71 = sphi 0, %s73
      %s74 = sphi 0, %s71
      %s75 = sphi 0, %s74
      %s91 = sphi 0, %s75
      %s95 = sphi 0, %s95
      %s97 = sphi 0, %s95
      %s98 = sphi 0, %s97
      %s112 = sphi 0, %s98
      %s116 = sphi 0, %s116
      %s118 = sphi 0, %s116
      %s119 = sphi 0, %s118
      %s133 = sphi 0, %s119
      %s137 = sphi 0, %s137
      %s139 = sphi 0, %s137
      %s140 = sphi 0, %s139
      %s154 = sphi 0, %s140
      %s158 = sphi 0, %s158
      %s160 = sphi 0, %s158
      %s161 = sphi 0, %s160
      %s175 = sphi 0, %s161
      %s179 = sphi 0, %s179
      %s181 = sphi 0, %s179
      %s182 = sphi 0, %s181
      %s196 = sphi 0, %s182
      %s200 = sphi 0, %s200
      %s202 = sphi 0, %s200
      %s203 = sphi 0, %s202
      %s217 = sphi 0, %s203
      %s223 = sphi 0, %s225
      %s226 = sphi 0, %s223
      %s227 = sphi 0, %s226
      %s243 = sphi 0, %s227
      %s249 = sphi 0, %s251
      %s252 = sphi 0, %s249
      %s253 = sphi 0, %s252
      %s269 = sphi 0, %s253
      %s275 = sphi 0, %s277
      %s278 = sphi 0, %s275
      %s279 = sphi 0, %s278
      %s295 = sphi 0, %s279
      %s301 = sphi 0, %s303
      %s304 = sphi 0, %s301
      %s305 = sphi 0, %s304
      %s321 = sphi 0, %s305
      %s327 = sphi 0, %s329
      %s330 = sphi 0, %s327
      %s331 = sphi 0, %s330
      %s347 = sphi 0, %s331
    $region4: #{tpu_custom_call.1} parent=1 // loop_header_branch
      %38 = sbr.rel (%p36) target = $region8
    $region5: #{tpu_custom_call.1} parent=1 // loop_body
      %s40 = ssub.s32 %s35, 1
      %s41 = ssub.s32 %s35, 2
      %s42 = sadd.s32 %s35, 1
      %s43 = ssub.s32 %s35, %s42
      %p44 = scmp.eq.s32.totalorder %s43, 0
      %s46 = sadd.s32 %s45, 1
      %s47 = scalar_select %p44, %s45, %s46
      %p50 = pneg %p44
      %p51 = scmp.eq.s32.totalorder %s35, 1
      %p52 = por %p50, %p51
      %p53 = scmp.ne.s32.totalorder %s45, %s48
      %p54 = scmp.eq.s32.totalorder %s35, 0
      %p55 = por %p53, %p54
      %p56 = scmp.ne.s32.totalorder %s45, %s48
      %p57 = scmp.eq.s32.totalorder %s40, 1
      %p58 = por %p56, %p57
      %p59 = scmp.ne.s32.totalorder %s48, %s49
      %p60 = scmp.eq.s32.totalorder %s40, 0
      %p61 = por %p59, %p60
      %p62 = scmp.ne.s32.totalorder %s48, %s49
      %p63 = scmp.eq.s32.totalorder %s41, 1
      %p64 = por %p62, %p63
      %p66 = scmp.ne.s32.totalorder %s49, %s65
      %p67 = scmp.eq.s32.totalorder %s41, 0
      %p68 = por %p66, %p67
      %s69 = ssub.s32 %s35, %s42
      %p70 = scmp.eq.s32.totalorder %s69, 0
      %s72 = sadd.s32 %s71, 1
      %s73 = scalar_select %p70, %s71, %s72
      %p76 = pneg %p70
      %p77 = scmp.eq.s32.totalorder %s35, 1
      %p78 = por %p76, %p77
      %p79 = scmp.ne.s32.totalorder %s71, %s74
      %p80 = scmp.eq.s32.totalorder %s35, 0
      %p81 = por %p79, %p80
      %p82 = scmp.ne.s32.totalorder %s71, %s74
      %p83 = scmp.eq.s32.totalorder %s40, 1
      %p84 = por %p82, %p83
      %p85 = scmp.ne.s32.totalorder %s74, %s75
      %p86 = scmp.eq.s32.totalorder %s40, 0
      %p87 = por %p85, %p86
      %p88 = scmp.ne.s32.totalorder %s74, %s75
      %p89 = scmp.eq.s32.totalorder %s41, 1
      %p90 = por %p88, %p89
      %p92 = scmp.ne.s32.totalorder %s75, %s91
      %p93 = scmp.eq.s32.totalorder %s41, 0
      %p94 = por %p92, %p93
      %s96 = sadd.s32 %s95, 1
      %p99 = scmp.eq.s32.totalorder %s35, 1
      %p100 = scmp.ne.s32.totalorder %s95, %s97
      %p101 = scmp.eq.s32.totalorder %s35, 0
      %p102 = por %p100, %p101
      %p103 = scmp.ne.s32.totalorder %s95, %s97
      %p104 = scmp.eq.s32.totalorder %s40, 1
      %p105 = por %p103, %p104
      %p106 = scmp.ne.s32.totalorder %s97, %s98
      %p107 = scmp.eq.s32.totalorder %s40, 0
      %p108 = por %p106, %p107
      %p109 = scmp.ne.s32.totalorder %s97, %s98
      %p110 = scmp.eq.s32.totalorder %s41, 1
      %p111 = por %p109, %p110
      %p113 = scmp.ne.s32.totalorder %s98, %s112
      %p114 = scmp.eq.s32.totalorder %s41, 0
      %p115 = por %p113, %p114
      %s117 = sadd.s32 %s116, 1
      %p120 = scmp.eq.s32.totalorder %s35, 1
      %p121 = scmp.ne.s32.totalorder %s116, %s118
      %p122 = scmp.eq.s32.totalorder %s35, 0
      %p123 = por %p121, %p122
      %p124 = scmp.ne.s32.totalorder %s116, %s118
      %p125 = scmp.eq.s32.totalorder %s40, 1
      %p126 = por %p124, %p125
      %p127 = scmp.ne.s32.totalorder %s118, %s119
      %p128 = scmp.eq.s32.totalorder %s40, 0
      %p129 = por %p127, %p128
      %p130 = scmp.ne.s32.totalorder %s118, %s119
      %p131 = scmp.eq.s32.totalorder %s41, 1
      %p132 = por %p130, %p131
      %p134 = scmp.ne.s32.totalorder %s119, %s133
      %p135 = scmp.eq.s32.totalorder %s41, 0
      %p136 = por %p134, %p135
      %s138 = sadd.s32 %s137, 1
      %p141 = scmp.eq.s32.totalorder %s35, 1
      %p142 = scmp.ne.s32.totalorder %s137, %s139
      %p143 = scmp.eq.s32.totalorder %s35, 0
      %p144 = por %p142, %p143
      %p145 = scmp.ne.s32.totalorder %s137, %s139
      %p146 = scmp.eq.s32.totalorder %s40, 1
      %p147 = por %p145, %p146
      %p148 = scmp.ne.s32.totalorder %s139, %s140
      %p149 = scmp.eq.s32.totalorder %s40, 0
      %p150 = por %p148, %p149
      %p151 = scmp.ne.s32.totalorder %s139, %s140
      %p152 = scmp.eq.s32.totalorder %s41, 1
      %p153 = por %p151, %p152
      %p155 = scmp.ne.s32.totalorder %s140, %s154
      %p156 = scmp.eq.s32.totalorder %s41, 0
      %p157 = por %p155, %p156
      %s159 = sadd.s32 %s158, 1
      %p162 = scmp.eq.s32.totalorder %s35, 1
      %p163 = scmp.ne.s32.totalorder %s158, %s160
      %p164 = scmp.eq.s32.totalorder %s35, 0
      %p165 = por %p163, %p164
      %p166 = scmp.ne.s32.totalorder %s158, %s160
      %p167 = scmp.eq.s32.totalorder %s40, 1
      %p168 = por %p166, %p167
      %p169 = scmp.ne.s32.totalorder %s160, %s161
      %p170 = scmp.eq.s32.totalorder %s40, 0
      %p171 = por %p169, %p170
      %p172 = scmp.ne.s32.totalorder %s160, %s161
      %p173 = scmp.eq.s32.totalorder %s41, 1
      %p174 = por %p172, %p173
      %p176 = scmp.ne.s32.totalorder %s161, %s175
      %p177 = scmp.eq.s32.totalorder %s41, 0
      %p178 = por %p176, %p177
      %s180 = sadd.s32 %s179, 1
      %p183 = scmp.eq.s32.totalorder %s35, 1
      %p184 = scmp.ne.s32.totalorder %s179, %s181
      %p185 = scmp.eq.s32.totalorder %s35, 0
      %p186 = por %p184, %p185
      %p187 = scmp.ne.s32.totalorder %s179, %s181
      %p188 = scmp.eq.s32.totalorder %s40, 1
      %p189 = por %p187, %p188
      %p190 = scmp.ne.s32.totalorder %s181, %s182
      %p191 = scmp.eq.s32.totalorder %s40, 0
      %p192 = por %p190, %p191
      %p193 = scmp.ne.s32.totalorder %s181, %s182
      %p194 = scmp.eq.s32.totalorder %s41, 1
      %p195 = por %p193, %p194
      %p197 = scmp.ne.s32.totalorder %s182, %s196
      %p198 = scmp.eq.s32.totalorder %s41, 0
      %p199 = por %p197, %p198
      %s201 = sadd.s32 %s200, 1
      %p204 = scmp.eq.s32.totalorder %s35, 1
      %p205 = scmp.ne.s32.totalorder %s200, %s202
      %p206 = scmp.eq.s32.totalorder %s35, 0
      %p207 = por %p205, %p206
      %p208 = scmp.ne.s32.totalorder %s200, %s202
      %p209 = scmp.eq.s32.totalorder %s40, 1
      %p210 = por %p208, %p209
      %p211 = scmp.ne.s32.totalorder %s202, %s203
      %p212 = scmp.eq.s32.totalorder %s40, 0
      %p213 = por %p211, %p212
      %p214 = scmp.ne.s32.totalorder %s202, %s203
      %p215 = scmp.eq.s32.totalorder %s41, 1
      %p216 = por %p214, %p215
      %p218 = scmp.ne.s32.totalorder %s203, %s217
      %p219 = scmp.eq.s32.totalorder %s41, 0
      %p220 = por %p218, %p219
      %s221 = ssub.s32 %s35, %s42
      %p222 = scmp.eq.s32.totalorder %s221, 0
      %s224 = sadd.s32 %s223, 1
      %s225 = scalar_select %p222, %s223, %s224
      %p228 = pneg %p222
      %p229 = scmp.eq.s32.totalorder %s35, 1
      %p230 = por %p228, %p229
      %p231 = scmp.ne.s32.totalorder %s223, %s226
      %p232 = scmp.eq.s32.totalorder %s35, 0
      %p233 = por %p231, %p232
      %p234 = scmp.ne.s32.totalorder %s223, %s226
      %p235 = scmp.eq.s32.totalorder %s40, 1
      %p236 = por %p234, %p235
      %p237 = scmp.ne.s32.totalorder %s226, %s227
      %p238 = scmp.eq.s32.totalorder %s40, 0
      %p239 = por %p237, %p238
      %p240 = scmp.ne.s32.totalorder %s226, %s227
      %p241 = scmp.eq.s32.totalorder %s41, 1
      %p242 = por %p240, %p241
      %p244 = scmp.ne.s32.totalorder %s227, %s243
      %p245 = scmp.eq.s32.totalorder %s41, 0
      %p246 = por %p244, %p245
      %s247 = ssub.s32 %s35, %s42
      %p248 = scmp.eq.s32.totalorder %s247, 0
      %s250 = sadd.s32 %s249, 1
      %s251 = scalar_select %p248, %s249, %s250
      %p254 = pneg %p248
      %p255 = scmp.eq.s32.totalorder %s35, 1
      %p256 = por %p254, %p255
      %p257 = scmp.ne.s32.totalorder %s249, %s252
      %p258 = scmp.eq.s32.totalorder %s35, 0
      %p259 = por %p257, %p258
      %p260 = scmp.ne.s32.totalorder %s249, %s252
      %p261 = scmp.eq.s32.totalorder %s40, 1
      %p262 = por %p260, %p261
      %p263 = scmp.ne.s32.totalorder %s252, %s253
      %p264 = scmp.eq.s32.totalorder %s40, 0
      %p265 = por %p263, %p264
      %p266 = scmp.ne.s32.totalorder %s252, %s253
      %p267 = scmp.eq.s32.totalorder %s41, 1
      %p268 = por %p266, %p267
      %p270 = scmp.ne.s32.totalorder %s253, %s269
      %p271 = scmp.eq.s32.totalorder %s41, 0
      %p272 = por %p270, %p271
      %s273 = ssub.s32 %s35, %s42
      %p274 = scmp.eq.s32.totalorder %s273, 0
      %s276 = sadd.s32 %s275, 1
      %s277 = scalar_select %p274, %s275, %s276
      %p280 = pneg %p274
      %p281 = scmp.eq.s32.totalorder %s35, 1
      %p282 = por %p280, %p281
      %p283 = scmp.ne.s32.totalorder %s275, %s278
      %p284 = scmp.eq.s32.totalorder %s35, 0
      %p285 = por %p283, %p284
      %p286 = scmp.ne.s32.totalorder %s275, %s278
      %p287 = scmp.eq.s32.totalorder %s40, 1
      %p288 = por %p286, %p287
      %p289 = scmp.ne.s32.totalorder %s278, %s279
      %p290 = scmp.eq.s32.totalorder %s40, 0
      %p291 = por %p289, %p290
      %p292 = scmp.ne.s32.totalorder %s278, %s279
      %p293 = scmp.eq.s32.totalorder %s41, 1
      %p294 = por %p292, %p293
      %p296 = scmp.ne.s32.totalorder %s279, %s295
      %p297 = scmp.eq.s32.totalorder %s41, 0
      %p298 = por %p296, %p297
      %s299 = ssub.s32 %s35, %s42
      %p300 = scmp.eq.s32.totalorder %s299, 0
      %s302 = sadd.s32 %s301, 1
      %s303 = scalar_select %p300, %s301, %s302
      %p306 = pneg %p300
      %p307 = scmp.eq.s32.totalorder %s35, 1
      %p308 = por %p306, %p307
      %p309 = scmp.ne.s32.totalorder %s301, %s304
      %p310 = scmp.eq.s32.totalorder %s35, 0
      %p311 = por %p309, %p310
      %p312 = scmp.ne.s32.totalorder %s301, %s304
      %p313 = scmp.eq.s32.totalorder %s40, 1
      %p314 = por %p312, %p313
      %p315 = scmp.ne.s32.totalorder %s304, %s305
      %p316 = scmp.eq.s32.totalorder %s40, 0
      %p317 = por %p315, %p316
      %p318 = scmp.ne.s32.totalorder %s304, %s305
      %p319 = scmp.eq.s32.totalorder %s41, 1
      %p320 = por %p318, %p319
      %p322 = scmp.ne.s32.totalorder %s305, %s321
      %p323 = scmp.eq.s32.totalorder %s41, 0
      %p324 = por %p322, %p323
      %s325 = ssub.s32 %s35, %s42
      %p326 = scmp.eq.s32.totalorder %s325, 0
      %s328 = sadd.s32 %s327, 1
      %s329 = scalar_select %p326, %s327, %s328
      %p332 = pneg %p326
      %p333 = scmp.eq.s32.totalorder %s35, 1
      %p334 = por %p332, %p333
      %p335 = scmp.ne.s32.totalorder %s327, %s330
      %p336 = scmp.eq.s32.totalorder %s35, 0
      %p337 = por %p335, %p336
      %p338 = scmp.ne.s32.totalorder %s327, %s330
      %p339 = scmp.eq.s32.totalorder %s40, 1
      %p340 = por %p338, %p339
      %p341 = scmp.ne.s32.totalorder %s330, %s331
      %p342 = scmp.eq.s32.totalorder %s40, 0
      %p343 = por %p341, %p342
      %p344 = scmp.ne.s32.totalorder %s330, %s331
      %p345 = scmp.eq.s32.totalorder %s41, 1
      %p346 = por %p344, %p345
      %p348 = scmp.ne.s32.totalorder %s331, %s347
      %p349 = scmp.eq.s32.totalorder %s41, 0
      %p350 = por %p348, %p349
      %p351 = scmp.le.s32.totalorder 1, %s35
      %p352 = scmp.lt.s32.totalorder %s35, 3
      %p353 = pnand %p351, %p352
      %p354 = pneg %p353
      // Predicated region
      $region9: #{tpu_custom_call.1} parent=5 // pred_check
        _
      $region10: #{tpu_custom_call.1} parent=5 // pred_check_branch
        %356 = sbr.rel (%p353) target = $region12
      $region11: #{tpu_custom_call.1} parent=5 // pred_region
        %s357 = ssub.s32 %s35, 1
        // Predicated region
        $region13: #{tpu_custom_call.1} parent=11 // pred_check
          %p358 = pneg %p108
        $region14: #{tpu_custom_call.1} parent=11 // pred_check_branch
          %360 = sbr.rel (%p358) target = $region16
        $region15: #{tpu_custom_call.1} parent=11 // pred_region
          _
        $region16: #{tpu_custom_call.1} parent=11 // pred_fallthru
          _
        // Predicated region
        $region17: #{tpu_custom_call.1} parent=11 // pred_check
          %p361 = pneg %p129
        $region18: #{tpu_custom_call.1} parent=11 // pred_check_branch
          %363 = sbr.rel (%p361) target = $region20
        $region19: #{tpu_custom_call.1} parent=11 // pred_region
          _
        $region20: #{tpu_custom_call.1} parent=11 // pred_fallthru
          _
        // Predicated region
        $region21: #{tpu_custom_call.1} parent=11 // pred_check
          %p364 = pneg %p150
        $region22: #{tpu_custom_call.1} parent=11 // pred_check_branch
          %366 = sbr.rel (%p364) target = $region24
        $region23: #{tpu_custom_call.1} parent=11 // pred_region
          %s368 = ssub.s32 1024, 1024
          %369 = vsyncadd [#allocation6], %s368
          %s370 = sshll.u32 [#allocation7], 4
          %s371 = int_to_ptr.vmem [resolvable:$true] %s370
          %376 = dma.hbm_to_vmem [thread:$0]  %s4, 1024, %s371, [#allocation6], 64, 64, 4
        $region24: #{tpu_custom_call.1} parent=11 // pred_fallthru
          _
        // Predicated region
        $region25: #{tpu_custom_call.1} parent=11 // pred_check
          %p377 = pneg %p171
        $region26: #{tpu_custom_call.1} parent=11 // pred_check_branch
          %379 = sbr.rel (%p377) target = $region28
        $region27: #{tpu_custom_call.1} parent=11 // pred_region
          _
        $region28: #{tpu_custom_call.1} parent=11 // pred_fallthru
          _
        // Predicated region
        $region29: #{tpu_custom_call.1} parent=11 // pred_check
          %p380 = pneg %p192
        $region30: #{tpu_custom_call.1} parent=11 // pred_check_branch
          %382 = sbr.rel (%p380) target = $region32
        $region31: #{tpu_custom_call.1} parent=11 // pred_region
          %s384 = ssub.s32 1024, 1024
          %385 = vsyncadd [#allocation9], %s384
          %s386 = sshll.u32 [#allocation8], 4
          %s387 = int_to_ptr.vmem [resolvable:$true] %s386
          %392 = dma.hbm_to_vmem [thread:$0]  %s6, 1024, %s387, [#allocation9], 64, 64, 4
        $region32: #{tpu_custom_call.1} parent=11 // pred_fallthru
          _
        // Predicated region
        $region33: #{tpu_custom_call.1} parent=11 // pred_check
          %p393 = pneg %p213
        $region34: #{tpu_custom_call.1} parent=11 // pred_check_branch
          %395 = sbr.rel (%p393) target = $region36
        $region35: #{tpu_custom_call.1} parent=11 // pred_region
          _
        $region36: #{tpu_custom_call.1} parent=11 // pred_fallthru
          _
      $region12: #{tpu_custom_call.1} parent=5 // pred_fallthru
        _
      %p396 = scmp.lt.s32.totalorder %s35, 2
      // Predicated region
      $region37: #{tpu_custom_call.1} parent=5 // pred_check
        %p397 = pneg %p396
      $region38: #{tpu_custom_call.1} parent=5 // pred_check_branch
        %399 = sbr.rel (%p397) target = $region40
      $region39: #{tpu_custom_call.1} parent=5 // pred_region
        // Predicated region
        $region41: #{tpu_custom_call.1} parent=39 // pred_check
          %p400 = pneg %p55
        $region42: #{tpu_custom_call.1} parent=39 // pred_check_branch
          %402 = sbr.rel (%p400) target = $region44
        $region43: #{tpu_custom_call.1} parent=39 // pred_region
          %s403 = sand.u32 %s45, 1
          %s404 = scalar_lea.sflag [#allocation3], %s403
          %s405 = sand.u32 %s45, 1
          %s406 = smul.addr %s405, 8
          %s407 = scalar_lea.vmem [#allocation2], %s406
          %s409 = ssub.s32 128, 128
          %410 = vsyncadd %s404, %s409
          %s411 = smul.addr %s35, 128
          %s412 = scalar_lea.hbm %s0, %s411
          %s414 = sshll.u32 %s407, 4
          %s415 = int_to_ptr.vmem [resolvable:$true] %s414
          %417 = dma.hbm_to_vmem [thread:$0]  %s412, 128, %s415, %s404
        $region44: #{tpu_custom_call.1} parent=39 // pred_fallthru
          _
        // Predicated region
        $region45: #{tpu_custom_call.1} parent=39 // pred_check
          %p418 = pneg %p81
        $region46: #{tpu_custom_call.1} parent=39 // pred_check_branch
          %420 = sbr.rel (%p418) target = $region48
        $region47: #{tpu_custom_call.1} parent=39 // pred_region
          %s421 = sand.u32 %s35, 1
          %s422 = scalar_lea.sflag [#allocation6], %s421
          %s423 = sand.u32 %s71, 1
          %s424 = smul.addr %s423, 8
          %s425 = scalar_lea.vmem [#allocation5], %s424
          %s427 = ssub.s32 128, 128
          %428 = vsyncadd %s422, %s427
          %s429 = smul.addr %s35, 128
          %s430 = scalar_lea.hbm %s1, %s429
          %s432 = sshll.u32 %s425, 4
          %s433 = int_to_ptr.vmem [resolvable:$true] %s432
          %435 = dma.hbm_to_vmem [thread:$0]  %s430, 128, %s433, %s422
        $region48: #{tpu_custom_call.1} parent=39 // pred_fallthru
          _
      $region40: #{tpu_custom_call.1} parent=5 // pred_fallthru
        _
      %p436 = scmp.le.s32.totalorder 1, %s35
      %p437 = scmp.lt.s32.totalorder %s35, 3
      %p438 = pnand %p436, %p437
      %p439 = pneg %p438
      // Predicated region
      $region49: #{tpu_custom_call.1} parent=5 // pred_check
        _
      $region50: #{tpu_custom_call.1} parent=5 // pred_check_branch
        %441 = sbr.rel (%p438) target = $region52
      $region51: #{tpu_custom_call.1} parent=5 // pred_region
        %s442 = ssub.s32 %s35, 1
        %s443 = sand.u32 %s48, 1
        %s444 = scalar_lea.sflag [#allocation3], %s443
        %s445 = sand.u32 %s48, 1
        %s446 = smul.addr %s445, 8
        %s447 = scalar_lea.vmem [#allocation2], %s446
        // Predicated region
        $region53: #{tpu_custom_call.1} parent=51 // pred_check
          %p448 = pneg %p61
        $region54: #{tpu_custom_call.1} parent=51 // pred_check_branch
          %450 = sbr.rel (%p448) target = $region56
        $region55: #{tpu_custom_call.1} parent=51 // pred_region
          %451 = dma.done %s444, 128
        $region56: #{tpu_custom_call.1} parent=51 // pred_fallthru
          _
        %s452 = sand.u32 %s40, 1
        %s453 = scalar_lea.sflag [#allocation6], %s452
        %s454 = sand.u32 %s74, 1
        %s455 = smul.addr %s454, 8
        %s456 = scalar_lea.vmem [#allocation5], %s455
        // Predicated region
        $region57: #{tpu_custom_call.1} parent=51 // pred_check
          %p457 = pneg %p87
        $region58: #{tpu_custom_call.1} parent=51 // pred_check_branch
          %459 = sbr.rel (%p457) target = $region60
        $region59: #{tpu_custom_call.1} parent=51 // pred_region
          %460 = dma.done %s453, 128
        $region60: #{tpu_custom_call.1} parent=51 // pred_fallthru
          _
        // Predicated region
        $region61: #{tpu_custom_call.1} parent=51 // pred_check
          %p461 = pneg %p150
        $region62: #{tpu_custom_call.1} parent=51 // pred_check_branch
          %463 = sbr.rel (%p461) target = $region64
        $region63: #{tpu_custom_call.1} parent=51 // pred_region
          %464 = dma.done [#allocation6], 1024
        $region64: #{tpu_custom_call.1} parent=51 // pred_fallthru
          _
        // Predicated region
        $region65: #{tpu_custom_call.1} parent=51 // pred_check
          %p465 = pneg %p192
        $region66: #{tpu_custom_call.1} parent=51 // pred_check_branch
          %467 = sbr.rel (%p465) target = $region68
        $region67: #{tpu_custom_call.1} parent=51 // pred_region
          %468 = dma.done [#allocation9], 1024
        $region68: #{tpu_custom_call.1} parent=51 // pred_fallthru
          _
        %s469 = sand.u32 %s48, 1
        %s470 = scalar_lea.sflag [#allocation3], %s469
        %s471 = sand.u32 %s48, 1
        %s472 = smul.addr %s471, 8
        %s473 = scalar_lea.vmem [#allocation2], %s472
        %p474 = pneg %p61
        %p475 = pneg %p58
        %s476 = sand.u32 %s40, 1
        %s477 = scalar_lea.sflag [#allocation6], %s476
        %s478 = sand.u32 %s74, 1
        %s479 = smul.addr %s478, 8
        %s480 = scalar_lea.vmem [#allocation5], %s479
        %p481 = pneg %p87
        %p482 = pneg %p84
        %p483 = pneg %p108
        %p484 = pneg %p105
        %p485 = pneg %p129
        %p486 = pneg %p126
        %p487 = pneg %p150
        %p488 = pneg %p147
        %p489 = pneg %p171
        %p490 = pneg %p168
        %p491 = pneg %p192
        %p492 = pneg %p189
        %p493 = pneg %p213
        %p494 = pneg %p210
        %p495 = pneg %p239
        %p496 = pneg %p236
        %s497 = sand.u32 %s226, 1
        %s498 = scalar_lea.sflag [#allocation4], %s497
        %s499 = sand.u32 %s226, 1
        %s500 = smul.addr %s499, 8
        %s501 = scalar_lea.vmem [#allocation10], %s500
        %p502 = pneg %p265
        %p503 = pneg %p262
        %s504 = sand.u32 %s40, 1
        %s505 = scalar_lea.sflag [#allocation12], %s504
        %s506 = sand.u32 %s252, 1
        %s507 = smul.addr %s506, 4
        %s508 = scalar_lea.vmem [#allocation11], %s507
        %p509 = pneg %p291
        %p510 = pneg %p288
        %s511 = sand.u32 %s40, 1
        %s512 = scalar_lea.sflag [#allocation12], %s511
        %s513 = sand.u32 %s278, 1
        %s514 = smul.addr %s513, 4
        %s515 = scalar_lea.vmem [#allocation13], %s514
        %p516 = pneg %p317
        %p517 = pneg %p314
        %s518 = sand.u32 %s40, 1
        %s519 = scalar_lea.sflag [#allocation15], %s518
        %s520 = sand.u32 %s304, 1
        %s521 = smul.addr %s520, 4
        %s522 = scalar_lea.vmem [#allocation14], %s521
        %p523 = pneg %p343
        %p524 = pneg %p340
        %s525 = sand.u32 %s40, 1
        %s526 = scalar_lea.sflag [#allocation15], %s525
        %s527 = sand.u32 %s330, 1
        %s528 = smul.addr %s527, 4
        %s529 = scalar_lea.vmem [#allocation16], %s528
        %v531 = vld [vmem:[%s447] sm:$0xff]
        %v532 = vld [vmem:[%s456] sm:$0xff]
        %v533 = vld [vmem:[%s2] sm:$0x1]
        %v534 = vld [vmem:[%s3] sm:$0x1]
        %vm535 = vcmask 261120
        %v536 = vsel %vm535, %v531, 0.0
        %537 = vadd.xlane.f32.xlu0 %v536
        %v538 = vpop.xlane.xlu0 %537
        %v539 = vrcp.pop 32.0
        %v540 = vmul.f32 %v538, %v539
        %v541 = vsub.f32 %v531, %v540
        %v542 = vmul.f32 %v541, %v541
        %v543 = vsel %vm535, %v542, 0.0
        %544 = vadd.xlane.f32.xlu0 %v543
        %v545 = vpop.xlane.xlu0 %544
        %v546 = vmul.f32 %v545, %v539
        %v547 = vadd.f32 %v546, 1e-05
        %v548 = vrsqrt.pop %v547
        %v549 = vmul.f32 %v541, %v548
        %v550 = vlaneseq
        %v551 = vshrl.u32 %v550, 7
        %v552 = vsub.s32 0, %v551
        %v553 = vrot.slane %v533, %v552
        %v554 = vmul.f32 %v549, %v553
        %v555 = vlaneseq
        %v556 = vshrl.u32 %v555, 7
        %v557 = vsub.s32 0, %v556
        %v558 = vrot.slane %v534, %v557
        %v559 = vadd.f32 %v554, %v558
        %v560 = vpack.c.bf16 %v559, %v559
        %v561 = vld [vmem:[#allocation7] sm:$0xf]
        %v562 = vld [vmem:[#allocation7 + $0x4] sm:$0xf]
        %v563 = vld [vmem:[#allocation7 + $0x8] sm:$0xf]
        %v564 = vld [vmem:[#allocation7 + $0xc] sm:$0xf]
        %v565 = vld [vmem:[%s5] sm:$0x1]
        %v566 = vlaneseq
        %v567 = vshrl.u32 %v566, 7
        %v568 = vsub.s32 0, %v567
        %v569 = vrot.slane %v565, %v568
        %v574 = vunpack.c.l.b16 %v561
        %v575 = vunpack.c.l.b16 %v562
        %v576 = vunpack.c.l.b16 %v563
        %v577 = vunpack.c.l.b16 %v564
        %v578 = vpack.c.b16 %v575, %v574
        %v579 = vpack.c.b16 %v577, %v576
        %v583 = vsel %vm535, %v560, 0
        %585 = vmatprep.subr.bf16.mxu0 0
        %586 = vmatpush1.bf16.msra.mxu0 %v578
        %587 = vmatprep.subr.bf16.mxu0 0
        %588 = vmatpush1.bf16.msra.mxu0 %v579
        %589 = vmatprep.subr.bf16.mxu0 0
        %590 = vmatpush1.bf16.msra.mxu0 0
        %591 = vmatprep.subr.bf16.mxu0 0
        %592 = vmatpush1.bf16.msra.mxu0 0
        %593 = vmatprep.subr.bf16.mxu0 0
        %594 = vmatpush1.bf16.msra.mxu0 0
        %595 = vmatprep.subr.bf16.mxu0 0
        %596 = vmatpush1.bf16.msra.mxu0 0
        %597 = vmatprep.subr.bf16.mxu0 0
        %598 = vmatpush1.bf16.msra.mxu0 0
        %599 = vmatprep.subr.bf16.mxu0 0
        %600 = vmatpush1.bf16.msra.mxu0 0
        %601 = vmatprep.subr.bf16.mxu0 0
        %602 = vmatpush1.bf16.msra.mxu0 0
        %603 = vmatprep.subr.bf16.mxu0 0
        %604 = vmatpush1.bf16.msra.mxu0 0
        %605 = vmatprep.subr.bf16.mxu0 0
        %606 = vmatpush1.bf16.msra.mxu0 0
        %607 = vmatprep.subr.bf16.mxu0 0
        %608 = vmatpush1.bf16.msra.mxu0 0
        %609 = vmatprep.subr.bf16.mxu0 0
        %610 = vmatpush1.bf16.msra.mxu0 0
        %611 = vmatprep.subr.bf16.mxu0 0
        %612 = vmatpush1.bf16.msra.mxu0 0
        %613 = vmatprep.subr.bf16.mxu0 0
        %614 = vmatpush1.bf16.msra.mxu0 0
        %615 = vmatprep.subr.bf16.mxu0 0
        %616 = vmatpush1.bf16.msra.mxu0 0
        %617 = vmatprep.mubr.bf16.mxu0 0
        %618 = vmatmul.mubr.bf16.gmra.mrb[0].mxu0 %v583
        %v619 = vpop.f32.mrb[0].mxu0
        %v620 = vadd.f32 %v569, %v619
        %v621 = vpop.f32.mrb[0].mxu0
        %v622 = vpop.f32.mrb[0].mxu0
        %v623 = vpop.f32.mrb[0].mxu0
        %624 = vdwg.mxu0
        %v625 = vpack.c.bf16 %v620, %v620
        %s626 = scalar_lea.vmem [#allocation7], 16
        %v627 = vld [vmem:[%s626] sm:$0xf]
        %v628 = vld [vmem:[%s626 + $0x4] sm:$0xf]
        %v629 = vld [vmem:[%s626 + $0x8] sm:$0xf]
        %v630 = vld [vmem:[%s626 + $0xc] sm:$0xf]
        %v631 = vld [vmem:[%s5 + $0x1] sm:$0x1]
        %v632 = vlaneseq
        %v633 = vshrl.u32 %v632, 7
        %v634 = vsub.s32 0, %v633
        %v635 = vrot.slane %v631, %v634
        %v640 = vunpack.c.l.b16 %v627
        %v641 = vunpack.c.l.b16 %v628
        %v642 = vunpack.c.l.b16 %v629
        %v643 = vunpack.c.l.b16 %v630
        %v644 = vpack.c.b16 %v641, %v640
        %v645 = vpack.c.b16 %v643, %v642
        %648 = vmatprep.subr.bf16.mxu0 0
        %649 = vmatpush1.bf16.msra.mxu0 %v644
        %650 = vmatprep.subr.bf16.mxu0 0
        %651 = vmatpush1.bf16.msra.mxu0 %v645
        %652 = vmatprep.subr.bf16.mxu0 0
        %653 = vmatpush1.bf16.msra.mxu0 0
        %654 = vmatprep.subr.bf16.mxu0 0
        %655 = vmatpush1.bf16.msra.mxu0 0
        %656 = vmatprep.subr.bf16.mxu0 0
        %657 = vmatpush1.bf16.msra.mxu0 0
        %658 = vmatprep.subr.bf16.mxu0 0
        %659 = vmatpush1.bf16.msra.mxu0 0
        %660 = vmatprep.subr.bf16.mxu0 0
        %661 = vmatpush1.bf16.msra.mxu0 0
        %662 = vmatprep.subr.bf16.mxu0 0
        %663 = vmatpush1.bf16.msra.mxu0 0
        %664 = vmatprep.subr.bf16.mxu0 0
        %665 = vmatpush1.bf16.msra.mxu0 0
        %666 = vmatprep.subr.bf16.mxu0 0
        %667 = vmatpush1.bf16.msra.mxu0 0
        %668 = vmatprep.subr.bf16.mxu0 0
        %669 = vmatpush1.bf16.msra.mxu0 0
        %670 = vmatprep.subr.bf16.mxu0 0
        %671 = vmatpush1.bf16.msra.mxu0 0
        %672 = vmatprep.subr.bf16.mxu0 0
        %673 = vmatpush1.bf16.msra.mxu0 0
        %674 = vmatprep.subr.bf16.mxu0 0
        %675 = vmatpush1.bf16.msra.mxu0 0
        %676 = vmatprep.subr.bf16.mxu0 0
        %677 = vmatpush1.bf16.msra.mxu0 0
        %678 = vmatprep.subr.bf16.mxu0 0
        %679 = vmatpush1.bf16.msra.mxu0 0
        %680 = vmatprep.mubr.bf16.mxu0 0
        %681 = vmatmul.mubr.bf16.gmra.mrb[0].mxu0 %v583
        %v682 = vpop.f32.mrb[0].mxu0
        %v683 = vadd.f32 %v635, %v682
        %v684 = vpop.f32.mrb[0].mxu0
        %v685 = vpop.f32.mrb[0].mxu0
        %v686 = vpop.f32.mrb[0].mxu0
        %687 = vdwg.mxu0
        %v688 = vpack.c.bf16 %v683, %v683
        %s689 = scalar_lea.vmem [#allocation7], 32
        %v690 = vld [vmem:[%s689] sm:$0xf]
        %v691 = vld [vmem:[%s689 + $0x4] sm:$0xf]
        %v692 = vld [vmem:[%s689 + $0x8] sm:$0xf]
        %v693 = vld [vmem:[%s689 + $0xc] sm:$0xf]
        %v694 = vld [vmem:[%s5 + $0x2] sm:$0x1]
        %v695 = vlaneseq
        %v696 = vshrl.u32 %v695, 7
        %v697 = vsub.s32 0, %v696
        %v698 = vrot.slane %v694, %v697
        %v703 = vunpack.c.l.b16 %v690
        %v704 = vunpack.c.l.b16 %v691
        %v705 = vunpack.c.l.b16 %v692
        %v706 = vunpack.c.l.b16 %v693
        %v707 = vpack.c.b16 %v704, %v703
        %v708 = vpack.c.b16 %v706, %v705
        %711 = vmatprep.subr.bf16.mxu0 0
        %712 = vmatpush1.bf16.msra.mxu0 %v707
        %713 = vmatprep.subr.bf16.mxu0 0
        %714 = vmatpush1.bf16.msra.mxu0 %v708
        %715 = vmatprep.subr.bf16.mxu0 0
        %716 = vmatpush1.bf16.msra.mxu0 0
        %717 = vmatprep.subr.bf16.mxu0 0
        %718 = vmatpush1.bf16.msra.mxu0 0
        %719 = vmatprep.subr.bf16.mxu0 0
        %720 = vmatpush1.bf16.msra.mxu0 0
        %721 = vmatprep.subr.bf16.mxu0 0
        %722 = vmatpush1.bf16.msra.mxu0 0
        %723 = vmatprep.subr.bf16.mxu0 0
        %724 = vmatpush1.bf16.msra.mxu0 0
        %725 = vmatprep.subr.bf16.mxu0 0
        %726 = vmatpush1.bf16.msra.mxu0 0
        %727 = vmatprep.subr.bf16.mxu0 0
        %728 = vmatpush1.bf16.msra.mxu0 0
        %729 = vmatprep.subr.bf16.mxu0 0
        %730 = vmatpush1.bf16.msra.mxu0 0
        %731 = vmatprep.subr.bf16.mxu0 0
        %732 = vmatpush1.bf16.msra.mxu0 0
        %733 = vmatprep.subr.bf16.mxu0 0
        %734 = vmatpush1.bf16.msra.mxu0 0
        %735 = vmatprep.subr.bf16.mxu0 0
        %736 = vmatpush1.bf16.msra.mxu0 0
        %737 = vmatprep.subr.bf16.mxu0 0
        %738 = vmatpush1.bf16.msra.mxu0 0
        %739 = vmatprep.subr.bf16.mxu0 0
        %740 = vmatpush1.bf16.msra.mxu0 0
        %741 = vmatprep.subr.bf16.mxu0 0
        %742 = vmatpush1.bf16.msra.mxu0 0
        %743 = vmatprep.mubr.bf16.mxu0 0
        %744 = vmatmul.mubr.bf16.gmra.mrb[0].mxu0 %v583
        %v745 = vpop.f32.mrb[0].mxu0
        %v746 = vadd.f32 %v698, %v745
        %v747 = vpop.f32.mrb[0].mxu0
        %v748 = vpop.f32.mrb[0].mxu0
        %v749 = vpop.f32.mrb[0].mxu0
        %750 = vdwg.mxu0
        %v751 = vpack.c.bf16 %v746, %v746
        %753 = vrot.lane.b32.xlu0 %v625, 120
        %v754 = vpop.permute.xlu0 %753
        %755 = vrot.lane.b32.xlu0 %v625, 112
        %v756 = vpop.permute.xlu0 %755
        %757 = vrot.lane.b32.xlu0 %v625, 104
        %v758 = vpop.permute.xlu0 %757
        %v760 = vunpack.c.l.s4 1983009808
        %v761 = vunpack.c.0.s8 %v760
        %v762 = vlaneseq
        %v763 = vshrl.u32 %v762, 7
        %v764 = vsub.s32 %v761, %v763
        %v765 = vrot.slane %v625, %v764
        %v768 = vunpack.c.l.s4 1983009808
        %v769 = vunpack.c.0.s8 %v768
        %v770 = vlaneseq
        %v771 = vshrl.u32 %v770, 7
        %v772 = vsub.s32 %v769, %v771
        %v773 = vrot.slane %v756, %v772
        %v774 = vcombine.low %v765, %v773
        %v775 = vcombine.high %v765, %v773
        %v777 = vunpack.c.l.s4 1934713408
        %v778 = vunpack.c.0.s8 %v777
        %v779 = vlaneseq
        %v780 = vshrl.u32 %v779, 7
        %v781 = vsub.s32 %v778, %v780
        %v782 = vrot.slane %v774, %v781
        %v784 = vunpack.c.l.s4 1934713408
        %v785 = vunpack.c.0.s8 %v784
        %v786 = vlaneseq
        %v787 = vshrl.u32 %v786, 7
        %v788 = vsub.s32 %v785, %v787
        %v789 = vrot.slane %v775, %v788
        %v790 = vcombine.high %v782, 0
        %v791 = vcombine.high %v789, 0
        %v794 = vunpack.c.l.s4 1983009808
        %v795 = vunpack.c.0.s8 %v794
        %v796 = vlaneseq
        %v797 = vshrl.u32 %v796, 7
        %v798 = vsub.s32 %v795, %v797
        %v799 = vrot.slane %v754, %v798
        %v802 = vunpack.c.l.s4 1983009808
        %v803 = vunpack.c.0.s8 %v802
        %v804 = vlaneseq
        %v805 = vshrl.u32 %v804, 7
        %v806 = vsub.s32 %v803, %v805
        %v807 = vrot.slane %v758, %v806
        %v808 = vcombine.low %v799, %v807
        %v809 = vcombine.high %v799, %v807
        %v811 = vunpack.c.l.s4 1934713408
        %v812 = vunpack.c.0.s8 %v811
        %v813 = vlaneseq
        %v814 = vshrl.u32 %v813, 7
        %v815 = vsub.s32 %v812, %v814
        %v816 = vrot.slane %v808, %v815
        %v818 = vunpack.c.l.s4 1934713408
        %v819 = vunpack.c.0.s8 %v818
        %v820 = vlaneseq
        %v821 = vshrl.u32 %v820, 7
        %v822 = vsub.s32 %v819, %v821
        %v823 = vrot.slane %v809, %v822
        %v824 = vcombine.high %v816, 0
        %v825 = vcombine.high %v823, 0
        %v828 = vpack.i.b16 %v816, %v782
        %v830 = vshrl.u32 %v782, 16
        %v831 = vshrl.u32 %v816, 16
        %v832 = vpack.i.b16 %v831, %v830
        %v836 = vpack.i.b16 %v824, %v790
        %v838 = vshrl.u32 %v790, 16
        %v839 = vshrl.u32 %v824, 16
        %v840 = vpack.i.b16 %v839, %v838
        %v844 = vpack.i.b16 %v823, %v789
        %v846 = vshrl.u32 %v789, 16
        %v847 = vshrl.u32 %v823, 16
        %v848 = vpack.i.b16 %v847, %v846
        %v852 = vpack.i.b16 %v825, %v791
        %v854 = vshrl.u32 %v791, 16
        %v855 = vshrl.u32 %v825, 16
        %v856 = vpack.i.b16 %v855, %v854
        %v858 = vcombine.low %v828, %v844
        %v860 = vunpack.c.l.s4 1983009808
        %v861 = vunpack.c.0.s8 %v860
        %v862 = vlaneseq
        %v863 = vshrl.u32 %v862, 7
        %v864 = vsub.s32 %v861, %v863
        %v865 = vrot.slane %v858, %v864
        %v866 = vcombine.low %v836, %v852
        %v868 = vunpack.c.l.s4 1983009808
        %v869 = vunpack.c.0.s8 %v868
        %v870 = vlaneseq
        %v871 = vshrl.u32 %v870, 7
        %v872 = vsub.s32 %v869, %v871
        %v873 = vrot.slane %v866, %v872
        %v874 = vcombine.low %v865, %v873
        %v876 = vunpack.c.l.s4 1934713408
        %v877 = vunpack.c.0.s8 %v876
        %v878 = vlaneseq
        %v879 = vshrl.u32 %v878, 7
        %v880 = vsub.s32 %v877, %v879
        %v881 = vrot.slane %v874, %v880
        %v882 = vcombine.high %v881, 0
        %v883 = vcombine.low %v832, %v848
        %v885 = vunpack.c.l.s4 1983009808
        %v886 = vunpack.c.0.s8 %v885
        %v887 = vlaneseq
        %v888 = vshrl.u32 %v887, 7
        %v889 = vsub.s32 %v886, %v888
        %v890 = vrot.slane %v883, %v889
        %v891 = vcombine.low %v840, %v856
        %v893 = vunpack.c.l.s4 1983009808
        %v894 = vunpack.c.0.s8 %v893
        %v895 = vlaneseq
        %v896 = vshrl.u32 %v895, 7
        %v897 = vsub.s32 %v894, %v896
        %v898 = vrot.slane %v891, %v897
        %v899 = vcombine.low %v890, %v898
        %v901 = vunpack.c.l.s4 1934713408
        %v902 = vunpack.c.0.s8 %v901
        %v903 = vlaneseq
        %v904 = vshrl.u32 %v903, 7
        %v905 = vsub.s32 %v902, %v904
        %v906 = vrot.slane %v899, %v905
        %v907 = vcombine.high %v906, 0
        %v910 = vpack.i.b16 %v906, %v881
        %v911 = vshrl.u32 %v881, 16
        %v912 = vshrl.u32 %v906, 16
        %v913 = vpack.i.b16 %v912, %v911
        %v916 = vpack.i.b16 %v907, %v882
        %v917 = vshrl.u32 %v882, 16
        %v918 = vshrl.u32 %v907, 16
        %v919 = vpack.i.b16 %v918, %v917
        %921 = vrot.lane.b32.xlu0 %v688, 120
        %v922 = vpop.permute.xlu0 %921
        %923 = vrot.lane.b32.xlu0 %v688, 112
        %v924 = vpop.permute.xlu0 %923
        %925 = vrot.lane.b32.xlu0 %v688, 104
        %v926 = vpop.permute.xlu0 %925
        %v928 = vunpack.c.l.s4 1983009808
        %v929 = vunpack.c.0.s8 %v928
        %v930 = vlaneseq
        %v931 = vshrl.u32 %v930, 7
        %v932 = vsub.s32 %v929, %v931
        %v933 = vrot.slane %v688, %v932
        %v936 = vunpack.c.l.s4 1983009808
        %v937 = vunpack.c.0.s8 %v936
        %v938 = vlaneseq
        %v939 = vshrl.u32 %v938, 7
        %v940 = vsub.s32 %v937, %v939
        %v941 = vrot.slane %v924, %v940
        %v942 = vcombine.low %v933, %v941
        %v943 = vcombine.high %v933, %v941
        %v945 = vunpack.c.l.s4 1934713408
        %v946 = vunpack.c.0.s8 %v945
        %v947 = vlaneseq
        %v948 = vshrl.u32 %v947, 7
        %v949 = vsub.s32 %v946, %v948
        %v950 = vrot.slane %v942, %v949
        %v952 = vunpack.c.l.s4 1934713408
        %v953 = vunpack.c.0.s8 %v952
        %v954 = vlaneseq
        %v955 = vshrl.u32 %v954, 7
        %v956 = vsub.s32 %v953, %v955
        %v957 = vrot.slane %v943, %v956
        %v958 = vcombine.high %v950, 0
        %v959 = vcombine.high %v957, 0
        %v962 = vunpack.c.l.s4 1983009808
        %v963 = vunpack.c.0.s8 %v962
        %v964 = vlaneseq
        %v965 = vshrl.u32 %v964, 7
        %v966 = vsub.s32 %v963, %v965
        %v967 = vrot.slane %v922, %v966
        %v970 = vunpack.c.l.s4 1983009808
        %v971 = vunpack.c.0.s8 %v970
        %v972 = vlaneseq
        %v973 = vshrl.u32 %v972, 7
        %v974 = vsub.s32 %v971, %v973
        %v975 = vrot.slane %v926, %v974
        %v976 = vcombine.low %v967, %v975
        %v977 = vcombine.high %v967, %v975
        %v979 = vunpack.c.l.s4 1934713408
        %v980 = vunpack.c.0.s8 %v979
        %v981 = vlaneseq
        %v982 = vshrl.u32 %v981, 7
        %v983 = vsub.s32 %v980, %v982
        %v984 = vrot.slane %v976, %v983
        %v986 = vunpack.c.l.s4 1934713408
        %v987 = vunpack.c.0.s8 %v986
        %v988 = vlaneseq
        %v989 = vshrl.u32 %v988, 7
        %v990 = vsub.s32 %v987, %v989
        %v991 = vrot.slane %v977, %v990
        %v992 = vcombine.high %v984, 0
        %v993 = vcombine.high %v991, 0
        %v996 = vpack.i.b16 %v984, %v950
        %v998 = vshrl.u32 %v950, 16
        %v999 = vshrl.u32 %v984, 16
        %v1000 = vpack.i.b16 %v999, %v998
        %v1004 = vpack.i.b16 %v992, %v958
        %v1006 = vshrl.u32 %v958, 16
        %v1007 = vshrl.u32 %v992, 16
        %v1008 = vpack.i.b16 %v1007, %v1006
        %v1012 = vpack.i.b16 %v991, %v957
        %v1014 = vshrl.u32 %v957, 16
        %v1015 = vshrl.u32 %v991, 16
        %v1016 = vpack.i.b16 %v1015, %v1014
        %v1020 = vpack.i.b16 %v993, %v959
        %v1022 = vshrl.u32 %v959, 16
        %v1023 = vshrl.u32 %v993, 16
        %v1024 = vpack.i.b16 %v1023, %v1022
        %v1026 = vcombine.low %v996, %v1012
        %v1028 = vunpack.c.l.s4 1983009808
        %v1029 = vunpack.c.0.s8 %v1028
        %v1030 = vlaneseq
        %v1031 = vshrl.u32 %v1030, 7
        %v1032 = vsub.s32 %v1029, %v1031
        %v1033 = vrot.slane %v1026, %v1032
        %v1034 = vcombine.low %v1004, %v1020
        %v1036 = vunpack.c.l.s4 1983009808
        %v1037 = vunpack.c.0.s8 %v1036
        %v1038 = vlaneseq
        %v1039 = vshrl.u32 %v1038, 7
        %v1040 = vsub.s32 %v1037, %v1039
        %v1041 = vrot.slane %v1034, %v1040
        %v1042 = vcombine.low %v1033, %v1041
        %v1044 = vunpack.c.l.s4 1934713408
        %v1045 = vunpack.c.0.s8 %v1044
        %v1046 = vlaneseq
        %v1047 = vshrl.u32 %v1046, 7
        %v1048 = vsub.s32 %v1045, %v1047
        %v1049 = vrot.slane %v1042, %v1048
        %v1050 = vcombine.high %v1049, 0
        %v1051 = vcombine.low %v1000, %v1016
        %v1053 = vunpack.c.l.s4 1983009808
        %v1054 = vunpack.c.0.s8 %v1053
        %v1055 = vlaneseq
        %v1056 = vshrl.u32 %v1055, 7
        %v1057 = vsub.s32 %v1054, %v1056
        %v1058 = vrot.slane %v1051, %v1057
        %v1059 = vcombine.low %v1008, %v1024
        %v1061 = vunpack.c.l.s4 1983009808
        %v1062 = vunpack.c.0.s8 %v1061
        %v1063 = vlaneseq
        %v1064 = vshrl.u32 %v1063, 7
        %v1065 = vsub.s32 %v1062, %v1064
        %v1066 = vrot.slane %v1059, %v1065
        %v1067 = vcombine.low %v1058, %v1066
        %v1069 = vunpack.c.l.s4 1934713408
        %v1070 = vunpack.c.0.s8 %v1069
        %v1071 = vlaneseq
        %v1072 = vshrl.u32 %v1071, 7
        %v1073 = vsub.s32 %v1070, %v1072
        %v1074 = vrot.slane %v1067, %v1073
        %v1075 = vcombine.high %v1074, 0
        %v1078 = vpack.i.b16 %v1074, %v1049
        %v1079 = vshrl.u32 %v1049, 16
        %v1080 = vshrl.u32 %v1074, 16
        %v1081 = vpack.i.b16 %v1080, %v1079
        %v1084 = vpack.i.b16 %v1075, %v1050
        %v1085 = vshrl.u32 %v1050, 16
        %v1086 = vshrl.u32 %v1075, 16
        %v1087 = vpack.i.b16 %v1086, %v1085
        %1089 = vrot.lane.b32.xlu0 %v751, 120
        %v1090 = vpop.permute.xlu0 %1089
        %1091 = vrot.lane.b32.xlu0 %v751, 112
        %v1092 = vpop.permute.xlu0 %1091
        %1093 = vrot.lane.b32.xlu0 %v751, 104
        %v1094 = vpop.permute.xlu0 %1093
        %v1096 = vunpack.c.l.s4 1983009808
        %v1097 = vunpack.c.0.s8 %v1096
        %v1098 = vlaneseq
        %v1099 = vshrl.u32 %v1098, 7
        %v1100 = vsub.s32 %v1097, %v1099
        %v1101 = vrot.slane %v751, %v1100
        %v1104 = vunpack.c.l.s4 1983009808
        %v1105 = vunpack.c.0.s8 %v1104
        %v1106 = vlaneseq
        %v1107 = vshrl.u32 %v1106, 7
        %v1108 = vsub.s32 %v1105, %v1107
        %v1109 = vrot.slane %v1092, %v1108
        %v1110 = vcombine.low %v1101, %v1109
        %v1111 = vcombine.high %v1101, %v1109
        %v1113 = vunpack.c.l.s4 1934713408
        %v1114 = vunpack.c.0.s8 %v1113
        %v1115 = vlaneseq
        %v1116 = vshrl.u32 %v1115, 7
        %v1117 = vsub.s32 %v1114, %v1116
        %v1118 = vrot.slane %v1110, %v1117
        %v1120 = vunpack.c.l.s4 1934713408
        %v1121 = vunpack.c.0.s8 %v1120
        %v1122 = vlaneseq
        %v1123 = vshrl.u32 %v1122, 7
        %v1124 = vsub.s32 %v1121, %v1123
        %v1125 = vrot.slane %v1111, %v1124
        %v1126 = vcombine.high %v1118, 0
        %v1127 = vcombine.high %v1125, 0
        %v1130 = vunpack.c.l.s4 1983009808
        %v1131 = vunpack.c.0.s8 %v1130
        %v1132 = vlaneseq
        %v1133 = vshrl.u32 %v1132, 7
        %v1134 = vsub.s32 %v1131, %v1133
        %v1135 = vrot.slane %v1090, %v1134
        %v1138 = vunpack.c.l.s4 1983009808
        %v1139 = vunpack.c.0.s8 %v1138
        %v1140 = vlaneseq
        %v1141 = vshrl.u32 %v1140, 7
        %v1142 = vsub.s32 %v1139, %v1141
        %v1143 = vrot.slane %v1094, %v1142
        %v1144 = vcombine.low %v1135, %v1143
        %v1145 = vcombine.high %v1135, %v1143
        %v1147 = vunpack.c.l.s4 1934713408
        %v1148 = vunpack.c.0.s8 %v1147
        %v1149 = vlaneseq
        %v1150 = vshrl.u32 %v1149, 7
        %v1151 = vsub.s32 %v1148, %v1150
        %v1152 = vrot.slane %v1144, %v1151
        %v1154 = vunpack.c.l.s4 1934713408
        %v1155 = vunpack.c.0.s8 %v1154
        %v1156 = vlaneseq
        %v1157 = vshrl.u32 %v1156, 7
        %v1158 = vsub.s32 %v1155, %v1157
        %v1159 = vrot.slane %v1145, %v1158
        %v1160 = vcombine.high %v1152, 0
        %v1161 = vcombine.high %v1159, 0
        %v1164 = vpack.i.b16 %v1152, %v1118
        %v1166 = vshrl.u32 %v1118, 16
        %v1167 = vshrl.u32 %v1152, 16
        %v1168 = vpack.i.b16 %v1167, %v1166
        %v1172 = vpack.i.b16 %v1160, %v1126
        %v1174 = vshrl.u32 %v1126, 16
        %v1175 = vshrl.u32 %v1160, 16
        %v1176 = vpack.i.b16 %v1175, %v1174
        %v1180 = vpack.i.b16 %v1159, %v1125
        %v1182 = vshrl.u32 %v1125, 16
        %v1183 = vshrl.u32 %v1159, 16
        %v1184 = vpack.i.b16 %v1183, %v1182
        %v1188 = vpack.i.b16 %v1161, %v1127
        %v1190 = vshrl.u32 %v1127, 16
        %v1191 = vshrl.u32 %v1161, 16
        %v1192 = vpack.i.b16 %v1191, %v1190
        %v1194 = vcombine.low %v1164, %v1180
        %v1196 = vunpack.c.l.s4 1983009808
        %v1197 = vunpack.c.0.s8 %v1196
        %v1198 = vlaneseq
        %v1199 = vshrl.u32 %v1198, 7
        %v1200 = vsub.s32 %v1197, %v1199
        %v1201 = vrot.slane %v1194, %v1200
        %v1202 = vcombine.low %v1172, %v1188
        %v1204 = vunpack.c.l.s4 1983009808
        %v1205 = vunpack.c.0.s8 %v1204
        %v1206 = vlaneseq
        %v1207 = vshrl.u32 %v1206, 7
        %v1208 = vsub.s32 %v1205, %v1207
        %v1209 = vrot.slane %v1202, %v1208
        %v1210 = vcombine.low %v1201, %v1209
        %v1212 = vunpack.c.l.s4 1934713408
        %v1213 = vunpack.c.0.s8 %v1212
        %v1214 = vlaneseq
        %v1215 = vshrl.u32 %v1214, 7
        %v1216 = vsub.s32 %v1213, %v1215
        %v1217 = vrot.slane %v1210, %v1216
        %v1218 = vcombine.high %v1217, 0
        %v1219 = vcombine.low %v1168, %v1184
        %v1221 = vunpack.c.l.s4 1983009808
        %v1222 = vunpack.c.0.s8 %v1221
        %v1223 = vlaneseq
        %v1224 = vshrl.u32 %v1223, 7
        %v1225 = vsub.s32 %v1222, %v1224
        %v1226 = vrot.slane %v1219, %v1225
        %v1227 = vcombine.low %v1176, %v1192
        %v1229 = vunpack.c.l.s4 1983009808
        %v1230 = vunpack.c.0.s8 %v1229
        %v1231 = vlaneseq
        %v1232 = vshrl.u32 %v1231, 7
        %v1233 = vsub.s32 %v1230, %v1232
        %v1234 = vrot.slane %v1227, %v1233
        %v1235 = vcombine.low %v1226, %v1234
        %v1237 = vunpack.c.l.s4 1934713408
        %v1238 = vunpack.c.0.s8 %v1237
        %v1239 = vlaneseq
        %v1240 = vshrl.u32 %v1239, 7
        %v1241 = vsub.s32 %v1238, %v1240
        %v1242 = vrot.slane %v1235, %v1241
        %v1243 = vcombine.high %v1242, 0
        %v1246 = vpack.i.b16 %v1242, %v1217
        %v1247 = vshrl.u32 %v1217, 16
        %v1248 = vshrl.u32 %v1242, 16
        %v1249 = vpack.i.b16 %v1248, %v1247
        %v1252 = vpack.i.b16 %v1243, %v1218
        %v1253 = vshrl.u32 %v1218, 16
        %v1254 = vshrl.u32 %v1243, 16
        %v1255 = vpack.i.b16 %v1254, %v1253
        %vm1256 = vcmask 64512
        %v1258 = vsel %vm1256, %v910, 0
        %v1261 = vsel %vm1256, %v1078, 0
        %1263 = vmatprep.subr.bf16.mxu0 0
        %1264 = vmatpush1.bf16.xpose.msra.mxu0 %v1261
        %1265 = vmatprep.subr.bf16.mxu0 0
        %1266 = vmatpush1.bf16.xpose.msra.mxu0 0
        %1267 = vmatprep.subr.bf16.mxu0 0
        %1268 = vmatpush1.bf16.xpose.msra.mxu0 0
        %1269 = vmatprep.subr.bf16.mxu0 0
        %1270 = vmatpush1.bf16.xpose.msra.mxu0 0
        %1271 = vmatprep.subr.bf16.mxu0 0
        %1272 = vmatpush1.bf16.xpose.msra.mxu0 0
        %1273 = vmatprep.subr.bf16.mxu0 0
        %1274 = vmatpush1.bf16.xpose.msra.mxu0 0
        %1275 = vmatprep.subr.bf16.mxu0 0
        %1276 = vmatpush1.bf16.xpose.msra.mxu0 0
        %1277 = vmatprep.subr.bf16.mxu0 0
        %1278 = vmatpush1.bf16.xpose.msra.mxu0 0
        %1279 = vmatprep.subr.bf16.mxu0 0
        %1280 = vmatpush1.bf16.xpose.msra.mxu0 0
        %1281 = vmatprep.subr.bf16.mxu0 0
        %1282 = vmatpush1.bf16.xpose.msra.mxu0 0
        %1283 = vmatprep.subr.bf16.mxu0 0
        %1284 = vmatpush1.bf16.xpose.msra.mxu0 0
        %1285 = vmatprep.subr.bf16.mxu0 0
        %1286 = vmatpush1.bf16.xpose.msra.mxu0 0
        %1287 = vmatprep.subr.bf16.mxu0 0
        %1288 = vmatpush1.bf16.xpose.msra.mxu0 0
        %1289 = vmatprep.subr.bf16.mxu0 0
        %1290 = vmatpush1.bf16.xpose.msra.mxu0 0
        %1291 = vmatprep.subr.bf16.mxu0 0
        %1292 = vmatpush1.bf16.xpose.msra.mxu0 0
        %1293 = vmatprep.subr.bf16.mxu0 0
        %1294 = vmatpush1.bf16.xpose.msra.mxu0 0
        %1295 = vmatprep.mubr.bf16.mxu0 0
        %1296 = vmatmul.mubr.bf16.gmra.mrb[0].mxu0 %v1258
        %v1297 = vpop.f32.mrb[0].mxu0
        %v1298 = vadd.f32 0.0, %v1297
        %v1299 = vpop.f32.mrb[0].mxu0
        %v1300 = vpop.f32.mrb[0].mxu0
        %v1301 = vpop.f32.mrb[0].mxu0
        %1302 = vdwg.mxu0
        %v1304 = vsel %vm1256, %v913, 0
        %v1307 = vsel %vm1256, %v1081, 0
        %1309 = vmatprep.subr.bf16.mxu0 0
        %1310 = vmatpush1.bf16.xpose.msra.mxu0 %v1307
        %1311 = vmatprep.subr.bf16.mxu0 0
        %1312 = vmatpush1.bf16.xpose.msra.mxu0 0
        %1313 = vmatprep.subr.bf16.mxu0 0
        %1314 = vmatpush1.bf16.xpose.msra.mxu0 0
        %1315 = vmatprep.subr.bf16.mxu0 0
        %1316 = vmatpush1.bf16.xpose.msra.mxu0 0
        %1317 = vmatprep.subr.bf16.mxu0 0
        %1318 = vmatpush1.bf16.xpose.msra.mxu0 0
        %1319 = vmatprep.subr.bf16.mxu0 0
        %1320 = vmatpush1.bf16.xpose.msra.mxu0 0
        %1321 = vmatprep.subr.bf16.mxu0 0
        %1322 = vmatpush1.bf16.xpose.msra.mxu0 0
        %1323 = vmatprep.subr.bf16.mxu0 0
        %1324 = vmatpush1.bf16.xpose.msra.mxu0 0
        %1325 = vmatprep.subr.bf16.mxu0 0
        %1326 = vmatpush1.bf16.xpose.msra.mxu0 0
        %1327 = vmatprep.subr.bf16.mxu0 0
        %1328 = vmatpush1.bf16.xpose.msra.mxu0 0
        %1329 = vmatprep.subr.bf16.mxu0 0
        %1330 = vmatpush1.bf16.xpose.msra.mxu0 0
        %1331 = vmatprep.subr.bf16.mxu0 0
        %1332 = vmatpush1.bf16.xpose.msra.mxu0 0
        %1333 = vmatprep.subr.bf16.mxu0 0
        %1334 = vmatpush1.bf16.xpose.msra.mxu0 0
        %1335 = vmatprep.subr.bf16.mxu0 0
        %1336 = vmatpush1.bf16.xpose.msra.mxu0 0
        %1337 = vmatprep.subr.bf16.mxu0 0
        %1338 = vmatpush1.bf16.xpose.msra.mxu0 0
        %1339 = vmatprep.subr.bf16.mxu0 0
        %1340 = vmatpush1.bf16.xpose.msra.mxu0 0
        %1341 = vmatprep.mubr.bf16.mxu0 0
        %1342 = vmatmul.mubr.bf16.gmra.mrb[0].mxu0 %v1304
        %v1343 = vpop.f32.mrb[0].mxu0
        %v1344 = vadd.f32 0.0, %v1343
        %v1345 = vpop.f32.mrb[0].mxu0
        %v1346 = vpop.f32.mrb[0].mxu0
        %v1347 = vpop.f32.mrb[0].mxu0
        %1348 = vdwg.mxu0
        %v1350 = vsel %vm1256, %v916, 0
        %v1353 = vsel %vm1256, %v1084, 0
        %1355 = vmatprep.subr.bf16.mxu0 0
        %1356 = vmatpush1.bf16.xpose.msra.mxu0 %v1353
        %1357 = vmatprep.subr.bf16.mxu0 0
        %1358 = vmatpush1.bf16.xpose.msra.mxu0 0
        %1359 = vmatprep.subr.bf16.mxu0 0
        %1360 = vmatpush1.bf16.xpose.msra.mxu0 0
        %1361 = vmatprep.subr.bf16.mxu0 0
        %1362 = vmatpush1.bf16.xpose.msra.mxu0 0
        %1363 = vmatprep.subr.bf16.mxu0 0
        %1364 = vmatpush1.bf16.xpose.msra.mxu0 0
        %1365 = vmatprep.subr.bf16.mxu0 0
        %1366 = vmatpush1.bf16.xpose.msra.mxu0 0
        %1367 = vmatprep.subr.bf16.mxu0 0
        %1368 = vmatpush1.bf16.xpose.msra.mxu0 0
        %1369 = vmatprep.subr.bf16.mxu0 0
        %1370 = vmatpush1.bf16.xpose.msra.mxu0 0
        %1371 = vmatprep.subr.bf16.mxu0 0
        %1372 = vmatpush1.bf16.xpose.msra.mxu0 0
        %1373 = vmatprep.subr.bf16.mxu0 0
        %1374 = vmatpush1.bf16.xpose.msra.mxu0 0
        %1375 = vmatprep.subr.bf16.mxu0 0
        %1376 = vmatpush1.bf16.xpose.msra.mxu0 0
        %1377 = vmatprep.subr.bf16.mxu0 0
        %1378 = vmatpush1.bf16.xpose.msra.mxu0 0
        %1379 = vmatprep.subr.bf16.mxu0 0
        %1380 = vmatpush1.bf16.xpose.msra.mxu0 0
        %1381 = vmatprep.subr.bf16.mxu0 0
        %1382 = vmatpush1.bf16.xpose.msra.mxu0 0
        %1383 = vmatprep.subr.bf16.mxu0 0
        %1384 = vmatpush1.bf16.xpose.msra.mxu0 0
        %1385 = vmatprep.subr.bf16.mxu0 0
        %1386 = vmatpush1.bf16.xpose.msra.mxu0 0
        %1387 = vmatprep.mubr.bf16.mxu0 0
        %1388 = vmatmul.mubr.bf16.gmra.mrb[0].mxu0 %v1350
        %v1389 = vpop.f32.mrb[0].mxu0
        %v1390 = vadd.f32 0.0, %v1389
        %v1391 = vpop.f32.mrb[0].mxu0
        %v1392 = vpop.f32.mrb[0].mxu0
        %v1393 = vpop.f32.mrb[0].mxu0
        %1394 = vdwg.mxu0
        %v1396 = vsel %vm1256, %v919, 0
        %v1399 = vsel %vm1256, %v1087, 0
        %1401 = vmatprep.subr.bf16.mxu0 0
        %1402 = vmatpush1.bf16.xpose.msra.mxu0 %v1399
        %1403 = vmatprep.subr.bf16.mxu0 0
        %1404 = vmatpush1.bf16.xpose.msra.mxu0 0
        %1405 = vmatprep.subr.bf16.mxu0 0
        %1406 = vmatpush1.bf16.xpose.msra.mxu0 0
        %1407 = vmatprep.subr.bf16.mxu0 0
        %1408 = vmatpush1.bf16.xpose.msra.mxu0 0
        %1409 = vmatprep.subr.bf16.mxu0 0
        %1410 = vmatpush1.bf16.xpose.msra.mxu0 0
        %1411 = vmatprep.subr.bf16.mxu0 0
        %1412 = vmatpush1.bf16.xpose.msra.mxu0 0
        %1413 = vmatprep.subr.bf16.mxu0 0
        %1414 = vmatpush1.bf16.xpose.msra.mxu0 0
        %1415 = vmatprep.subr.bf16.mxu0 0
        %1416 = vmatpush1.bf16.xpose.msra.mxu0 0
        %1417 = vmatprep.subr.bf16.mxu0 0
        %1418 = vmatpush1.bf16.xpose.msra.mxu0 0
        %1419 = vmatprep.subr.bf16.mxu0 0
        %1420 = vmatpush1.bf16.xpose.msra.mxu0 0
        %1421 = vmatprep.subr.bf16.mxu0 0
        %1422 = vmatpush1.bf16.xpose.msra.mxu0 0
        %1423 = vmatprep.subr.bf16.mxu0 0
        %1424 = vmatpush1.bf16.xpose.msra.mxu0 0
        %1425 = vmatprep.subr.bf16.mxu0 0
        %1426 = vmatpush1.bf16.xpose.msra.mxu0 0
        %1427 = vmatprep.subr.bf16.mxu0 0
        %1428 = vmatpush1.bf16.xpose.msra.mxu0 0
        %1429 = vmatprep.subr.bf16.mxu0 0
        %1430 = vmatpush1.bf16.xpose.msra.mxu0 0
        %1431 = vmatprep.subr.bf16.mxu0 0
        %1432 = vmatpush1.bf16.xpose.msra.mxu0 0
        %1433 = vmatprep.mubr.bf16.mxu0 0
        %1434 = vmatmul.mubr.bf16.gmra.mrb[0].mxu0 %v1396
        %v1435 = vpop.f32.mrb[0].mxu0
        %v1436 = vadd.f32 0.0, %v1435
        %v1437 = vpop.f32.mrb[0].mxu0
        %v1438 = vpop.f32.mrb[0].mxu0
        %v1439 = vpop.f32.mrb[0].mxu0
        %1440 = vdwg.mxu0
        %v1441 = vlaneseq
        %v1442 = vshrl.u32 %v1441, 7
        %v1443 = vlaneseq
        %v1444 = vand.u32 %v1443, 127
        %vm1445 = vcmp.ge.s32.totalorder %v1442, %v1444
        %v1446 = vsel %vm1445, 1, 0
        %vm1447 = vcmp.eq.s32.totalorder %v1446, 1
        %v1448 = vsel %vm1447, %v1298, -1e+30
        %v1449 = vsel %vm1447, %v1344, -1e+30
        %v1450 = vsel %vm1447, %v1390, -1e+30
        %v1451 = vsel %vm1447, %v1436, -1e+30
        %v1452 = vsel %vm1256, %v1448, -inf
        %1453 = vmax.xlane.f32.xlu0 %v1452
        %v1454 = vpop.xlane.xlu0 %1453
        %v1455 = vsel %vm1256, %v1449, -inf
        %1456 = vmax.xlane.f32.xlu0 %v1455
        %v1457 = vpop.xlane.xlu0 %1456
        %v1458 = vsel %vm1256, %v1450, -inf
        %1459 = vmax.xlane.f32.xlu0 %v1458
        %v1460 = vpop.xlane.xlu0 %1459
        %v1461 = vsel %vm1256, %v1451, -inf
        %1462 = vmax.xlane.f32.xlu0 %v1461
        %v1463 = vpop.xlane.xlu0 %1462
        %v1464 = vsub.f32 %v1448, %v1454
        %v1465 = vsub.f32 %v1449, %v1457
        %v1466 = vsub.f32 %v1450, %v1460
        %v1467 = vsub.f32 %v1451, %v1463
        %v1468 = vmul.f32 %v1464, 1.442695
        %v1469 = vpow.pop %v1468
        %v1470 = vmul.f32 %v1465, 1.442695
        %v1471 = vpow.pop %v1470
        %v1472 = vmul.f32 %v1466, 1.442695
        %v1473 = vpow.pop %v1472
        %v1474 = vmul.f32 %v1467, 1.442695
        %v1475 = vpow.pop %v1474
        %v1476 = vsel %vm1256, %v1469, 0.0
        %1477 = vadd.xlane.f32.xlu0 %v1476
        %v1478 = vpop.xlane.xlu0 %1477
        %v1479 = vsel %vm1256, %v1471, 0.0
        %1480 = vadd.xlane.f32.xlu0 %v1479
        %v1481 = vpop.xlane.xlu0 %1480
        %v1482 = vsel %vm1256, %v1473, 0.0
        %1483 = vadd.xlane.f32.xlu0 %v1482
        %v1484 = vpop.xlane.xlu0 %1483
        %v1485 = vsel %vm1256, %v1475, 0.0
        %1486 = vadd.xlane.f32.xlu0 %v1485
        %v1487 = vpop.xlane.xlu0 %1486
        %v1488 = vrcp.pop %v1478
        %v1489 = vrcp.pop %v1481
        %v1490 = vrcp.pop %v1484
        %v1491 = vrcp.pop %v1487
        %v1492 = vmul.f32 %v1469, %v1488
        %v1493 = vmul.f32 %v1471, %v1489
        %v1494 = vmul.f32 %v1473, %v1490
        %v1495 = vmul.f32 %v1475, %v1491
        %v1496 = vpack.c.bf16 %v1492, %v1492
        %v1497 = vpack.c.bf16 %v1493, %v1493
        %v1498 = vpack.c.bf16 %v1494, %v1494
        %v1499 = vpack.c.bf16 %v1495, %v1495
        %v1501 = vsel %vm1256, %v1496, 0
        %vm1503 = vcmask 1043456
        %v1505 = vsel %vm1503, %v1246, 0
        %1507 = vmatprep.subr.bf16.mxu0 0
        %1508 = vmatpush1.bf16.msra.mxu0 %v1505
        %1509 = vmatprep.subr.bf16.mxu0 0
        %1510 = vmatpush1.bf16.msra.mxu0 0
        %1511 = vmatprep.subr.bf16.mxu0 0
        %1512 = vmatpush1.bf16.msra.mxu0 0
        %1513 = vmatprep.subr.bf16.mxu0 0
        %1514 = vmatpush1.bf16.msra.mxu0 0
        %1515 = vmatprep.subr.bf16.mxu0 0
        %1516 = vmatpush1.bf16.msra.mxu0 0
        %1517 = vmatprep.subr.bf16.mxu0 0
        %1518 = vmatpush1.bf16.msra.mxu0 0
        %1519 = vmatprep.subr.bf16.mxu0 0
        %1520 = vmatpush1.bf16.msra.mxu0 0
        %1521 = vmatprep.subr.bf16.mxu0 0
        %1522 = vmatpush1.bf16.msra.mxu0 0
        %1523 = vmatprep.subr.bf16.mxu0 0
        %1524 = vmatpush1.bf16.msra.mxu0 0
        %1525 = vmatprep.subr.bf16.mxu0 0
        %1526 = vmatpush1.bf16.msra.mxu0 0
        %1527 = vmatprep.subr.bf16.mxu0 0
        %1528 = vmatpush1.bf16.msra.mxu0 0
        %1529 = vmatprep.subr.bf16.mxu0 0
        %1530 = vmatpush1.bf16.msra.mxu0 0
        %1531 = vmatprep.subr.bf16.mxu0 0
        %1532 = vmatpush1.bf16.msra.mxu0 0
        %1533 = vmatprep.subr.bf16.mxu0 0
        %1534 = vmatpush1.bf16.msra.mxu0 0
        %1535 = vmatprep.subr.bf16.mxu0 0
        %1536 = vmatpush1.bf16.msra.mxu0 0
        %1537 = vmatprep.subr.bf16.mxu0 0
        %1538 = vmatpush1.bf16.msra.mxu0 0
        %1539 = vmatprep.mubr.bf16.mxu0 0
        %1540 = vmatmul.mubr.bf16.gmra.mrb[0].mxu0 %v1501
        %v1541 = vpop.f32.mrb[0].mxu0
        %v1542 = vadd.f32 0.0, %v1541
        %v1543 = vpop.f32.mrb[0].mxu0
        %v1544 = vpop.f32.mrb[0].mxu0
        %v1545 = vpop.f32.mrb[0].mxu0
        %1546 = vdwg.mxu0
        %v1548 = vsel %vm1256, %v1497, 0
        %v1551 = vsel %vm1503, %v1249, 0
        %1553 = vmatprep.subr.bf16.mxu0 0
        %1554 = vmatpush1.bf16.msra.mxu0 %v1551
        %1555 = vmatprep.subr.bf16.mxu0 0
        %1556 = vmatpush1.bf16.msra.mxu0 0
        %1557 = vmatprep.subr.bf16.mxu0 0
        %1558 = vmatpush1.bf16.msra.mxu0 0
        %1559 = vmatprep.subr.bf16.mxu0 0
        %1560 = vmatpush1.bf16.msra.mxu0 0
        %1561 = vmatprep.subr.bf16.mxu0 0
        %1562 = vmatpush1.bf16.msra.mxu0 0
        %1563 = vmatprep.subr.bf16.mxu0 0
        %1564 = vmatpush1.bf16.msra.mxu0 0
        %1565 = vmatprep.subr.bf16.mxu0 0
        %1566 = vmatpush1.bf16.msra.mxu0 0
        %1567 = vmatprep.subr.bf16.mxu0 0
        %1568 = vmatpush1.bf16.msra.mxu0 0
        %1569 = vmatprep.subr.bf16.mxu0 0
        %1570 = vmatpush1.bf16.msra.mxu0 0
        %1571 = vmatprep.subr.bf16.mxu0 0
        %1572 = vmatpush1.bf16.msra.mxu0 0
        %1573 = vmatprep.subr.bf16.mxu0 0
        %1574 = vmatpush1.bf16.msra.mxu0 0
        %1575 = vmatprep.subr.bf16.mxu0 0
        %1576 = vmatpush1.bf16.msra.mxu0 0
        %1577 = vmatprep.subr.bf16.mxu0 0
        %1578 = vmatpush1.bf16.msra.mxu0 0
        %1579 = vmatprep.subr.bf16.mxu0 0
        %1580 = vmatpush1.bf16.msra.mxu0 0
        %1581 = vmatprep.subr.bf16.mxu0 0
        %1582 = vmatpush1.bf16.msra.mxu0 0
        %1583 = vmatprep.subr.bf16.mxu0 0
        %1584 = vmatpush1.bf16.msra.mxu0 0
        %1585 = vmatprep.mubr.bf16.mxu0 0
        %1586 = vmatmul.mubr.bf16.gmra.mrb[0].mxu0 %v1548
        %v1587 = vpop.f32.mrb[0].mxu0
        %v1588 = vadd.f32 0.0, %v1587
        %v1589 = vpop.f32.mrb[0].mxu0
        %v1590 = vpop.f32.mrb[0].mxu0
        %v1591 = vpop.f32.mrb[0].mxu0
        %1592 = vdwg.mxu0
        %v1594 = vsel %vm1256, %v1498, 0
        %v1597 = vsel %vm1503, %v1252, 0
        %1599 = vmatprep.subr.bf16.mxu0 0
        %1600 = vmatpush1.bf16.msra.mxu0 %v1597
        %1601 = vmatprep.subr.bf16.mxu0 0
        %1602 = vmatpush1.bf16.msra.mxu0 0
        %1603 = vmatprep.subr.bf16.mxu0 0
        %1604 = vmatpush1.bf16.msra.mxu0 0
        %1605 = vmatprep.subr.bf16.mxu0 0
        %1606 = vmatpush1.bf16.msra.mxu0 0
        %1607 = vmatprep.subr.bf16.mxu0 0
        %1608 = vmatpush1.bf16.msra.mxu0 0
        %1609 = vmatprep.subr.bf16.mxu0 0
        %1610 = vmatpush1.bf16.msra.mxu0 0
        %1611 = vmatprep.subr.bf16.mxu0 0
        %1612 = vmatpush1.bf16.msra.mxu0 0
        %1613 = vmatprep.subr.bf16.mxu0 0
        %1614 = vmatpush1.bf16.msra.mxu0 0
        %1615 = vmatprep.subr.bf16.mxu0 0
        %1616 = vmatpush1.bf16.msra.mxu0 0
        %1617 = vmatprep.subr.bf16.mxu0 0
        %1618 = vmatpush1.bf16.msra.mxu0 0
        %1619 = vmatprep.subr.bf16.mxu0 0
        %1620 = vmatpush1.bf16.msra.mxu0 0
        %1621 = vmatprep.subr.bf16.mxu0 0
        %1622 = vmatpush1.bf16.msra.mxu0 0
        %1623 = vmatprep.subr.bf16.mxu0 0
        %1624 = vmatpush1.bf16.msra.mxu0 0
        %1625 = vmatprep.subr.bf16.mxu0 0
        %1626 = vmatpush1.bf16.msra.mxu0 0
        %1627 = vmatprep.subr.bf16.mxu0 0
        %1628 = vmatpush1.bf16.msra.mxu0 0
        %1629 = vmatprep.subr.bf16.mxu0 0
        %1630 = vmatpush1.bf16.msra.mxu0 0
        %1631 = vmatprep.mubr.bf16.mxu0 0
        %1632 = vmatmul.mubr.bf16.gmra.mrb[0].mxu0 %v1594
        %v1633 = vpop.f32.mrb[0].mxu0
        %v1634 = vadd.f32 0.0, %v1633
        %v1635 = vpop.f32.mrb[0].mxu0
        %v1636 = vpop.f32.mrb[0].mxu0
        %v1637 = vpop.f32.mrb[0].mxu0
        %1638 = vdwg.mxu0
        %v1640 = vsel %vm1256, %v1499, 0
        %v1643 = vsel %vm1503, %v1255, 0
        %1645 = vmatprep.subr.bf16.mxu0 0
        %1646 = vmatpush1.bf16.msra.mxu0 %v1643
        %1647 = vmatprep.subr.bf16.mxu0 0
        %1648 = vmatpush1.bf16.msra.mxu0 0
        %1649 = vmatprep.subr.bf16.mxu0 0
        %1650 = vmatpush1.bf16.msra.mxu0 0
        %1651 = vmatprep.subr.bf16.mxu0 0
        %1652 = vmatpush1.bf16.msra.mxu0 0
        %1653 = vmatprep.subr.bf16.mxu0 0
        %1654 = vmatpush1.bf16.msra.mxu0 0
        %1655 = vmatprep.subr.bf16.mxu0 0
        %1656 = vmatpush1.bf16.msra.mxu0 0
        %1657 = vmatprep.subr.bf16.mxu0 0
        %1658 = vmatpush1.bf16.msra.mxu0 0
        %1659 = vmatprep.subr.bf16.mxu0 0
        %1660 = vmatpush1.bf16.msra.mxu0 0
        %1661 = vmatprep.subr.bf16.mxu0 0
        %1662 = vmatpush1.bf16.msra.mxu0 0
        %1663 = vmatprep.subr.bf16.mxu0 0
        %1664 = vmatpush1.bf16.msra.mxu0 0
        %1665 = vmatprep.subr.bf16.mxu0 0
        %1666 = vmatpush1.bf16.msra.mxu0 0
        %1667 = vmatprep.subr.bf16.mxu0 0
        %1668 = vmatpush1.bf16.msra.mxu0 0
        %1669 = vmatprep.subr.bf16.mxu0 0
        %1670 = vmatpush1.bf16.msra.mxu0 0
        %1671 = vmatprep.subr.bf16.mxu0 0
        %1672 = vmatpush1.bf16.msra.mxu0 0
        %1673 = vmatprep.subr.bf16.mxu0 0
        %1674 = vmatpush1.bf16.msra.mxu0 0
        %1675 = vmatprep.subr.bf16.mxu0 0
        %1676 = vmatpush1.bf16.msra.mxu0 0
        %1677 = vmatprep.mubr.bf16.mxu0 0
        %1678 = vmatmul.mubr.bf16.gmra.mrb[0].mxu0 %v1640
        %v1679 = vpop.f32.mrb[0].mxu0
        %v1680 = vadd.f32 0.0, %v1679
        %v1681 = vpop.f32.mrb[0].mxu0
        %v1682 = vpop.f32.mrb[0].mxu0
        %v1683 = vpop.f32.mrb[0].mxu0
        %1684 = vdwg.mxu0
        %v1685 = vpack.c.bf16 %v1542, %v1542
        %v1687 = vunpack.c.l.s4 1983009808
        %v1688 = vunpack.c.0.s8 %v1687
        %v1689 = vlaneseq
        %v1690 = vshrl.u32 %v1689, 7
        %v1691 = vsub.s32 %v1688, %v1690
        %v1692 = vrot.slane %v1685, %v1691
        %v1693 = vpack.c.bf16 %v1634, %v1634
        %v1695 = vunpack.c.l.s4 1983009808
        %v1696 = vunpack.c.0.s8 %v1695
        %v1697 = vlaneseq
        %v1698 = vshrl.u32 %v1697, 7
        %v1699 = vsub.s32 %v1696, %v1698
        %v1700 = vrot.slane %v1693, %v1699
        %v1701 = vcombine.low %v1692, %v1700
        %v1702 = vcombine.high %v1692, %v1700
        %v1704 = vunpack.c.l.s4 1934713408
        %v1705 = vunpack.c.0.s8 %v1704
        %v1706 = vlaneseq
        %v1707 = vshrl.u32 %v1706, 7
        %v1708 = vsub.s32 %v1705, %v1707
        %v1709 = vrot.slane %v1701, %v1708
        %v1711 = vunpack.c.l.s4 1934713408
        %v1712 = vunpack.c.0.s8 %v1711
        %v1713 = vlaneseq
        %v1714 = vshrl.u32 %v1713, 7
        %v1715 = vsub.s32 %v1712, %v1714
        %v1716 = vrot.slane %v1702, %v1715
        %v1717 = vcombine.high %v1709, 0
        %v1718 = vcombine.high %v1716, 0
        %v1719 = vpack.c.bf16 %v1588, %v1588
        %v1721 = vunpack.c.l.s4 1983009808
        %v1722 = vunpack.c.0.s8 %v1721
        %v1723 = vlaneseq
        %v1724 = vshrl.u32 %v1723, 7
        %v1725 = vsub.s32 %v1722, %v1724
        %v1726 = vrot.slane %v1719, %v1725
        %v1727 = vpack.c.bf16 %v1680, %v1680
        %v1729 = vunpack.c.l.s4 1983009808
        %v1730 = vunpack.c.0.s8 %v1729
        %v1731 = vlaneseq
        %v1732 = vshrl.u32 %v1731, 7
        %v1733 = vsub.s32 %v1730, %v1732
        %v1734 = vrot.slane %v1727, %v1733
        %v1735 = vcombine.low %v1726, %v1734
        %v1736 = vcombine.high %v1726, %v1734
        %v1738 = vunpack.c.l.s4 1934713408
        %v1739 = vunpack.c.0.s8 %v1738
        %v1740 = vlaneseq
        %v1741 = vshrl.u32 %v1740, 7
        %v1742 = vsub.s32 %v1739, %v1741
        %v1743 = vrot.slane %v1735, %v1742
        %v1745 = vunpack.c.l.s4 1934713408
        %v1746 = vunpack.c.0.s8 %v1745
        %v1747 = vlaneseq
        %v1748 = vshrl.u32 %v1747, 7
        %v1749 = vsub.s32 %v1746, %v1748
        %v1750 = vrot.slane %v1736, %v1749
        %v1751 = vcombine.high %v1743, 0
        %v1752 = vcombine.high %v1750, 0
        %v1755 = vpack.i.b16 %v1743, %v1709
        %v1757 = vshrl.u32 %v1709, 16
        %v1758 = vshrl.u32 %v1743, 16
        %v1759 = vpack.i.b16 %v1758, %v1757
        %v1763 = vpack.i.b16 %v1751, %v1717
        %v1765 = vshrl.u32 %v1717, 16
        %v1766 = vshrl.u32 %v1751, 16
        %v1767 = vpack.i.b16 %v1766, %v1765
        %v1771 = vpack.i.b16 %v1750, %v1716
        %v1773 = vshrl.u32 %v1716, 16
        %v1774 = vshrl.u32 %v1750, 16
        %v1775 = vpack.i.b16 %v1774, %v1773
        %v1779 = vpack.i.b16 %v1752, %v1718
        %v1781 = vshrl.u32 %v1718, 16
        %v1782 = vshrl.u32 %v1752, 16
        %v1783 = vpack.i.b16 %v1782, %v1781
        %v1785 = vcombine.low %v1755, %v1771
        %v1787 = vunpack.c.l.s4 1983009808
        %v1788 = vunpack.c.0.s8 %v1787
        %v1789 = vlaneseq
        %v1790 = vshrl.u32 %v1789, 7
        %v1791 = vsub.s32 %v1788, %v1790
        %v1792 = vrot.slane %v1785, %v1791
        %v1793 = vcombine.low %v1763, %v1779
        %v1795 = vunpack.c.l.s4 1983009808
        %v1796 = vunpack.c.0.s8 %v1795
        %v1797 = vlaneseq
        %v1798 = vshrl.u32 %v1797, 7
        %v1799 = vsub.s32 %v1796, %v1798
        %v1800 = vrot.slane %v1793, %v1799
        %v1801 = vcombine.low %v1792, %v1800
        %v1803 = vunpack.c.l.s4 1934713408
        %v1804 = vunpack.c.0.s8 %v1803
        %v1805 = vlaneseq
        %v1806 = vshrl.u32 %v1805, 7
        %v1807 = vsub.s32 %v1804, %v1806
        %v1808 = vrot.slane %v1801, %v1807
        %v1809 = vcombine.high %v1808, 0
        %v1810 = vcombine.low %v1759, %v1775
        %v1812 = vunpack.c.l.s4 1983009808
        %v1813 = vunpack.c.0.s8 %v1812
        %v1814 = vlaneseq
        %v1815 = vshrl.u32 %v1814, 7
        %v1816 = vsub.s32 %v1813, %v1815
        %v1817 = vrot.slane %v1810, %v1816
        %v1818 = vcombine.low %v1767, %v1783
        %v1820 = vunpack.c.l.s4 1983009808
        %v1821 = vunpack.c.0.s8 %v1820
        %v1822 = vlaneseq
        %v1823 = vshrl.u32 %v1822, 7
        %v1824 = vsub.s32 %v1821, %v1823
        %v1825 = vrot.slane %v1818, %v1824
        %v1826 = vcombine.low %v1817, %v1825
        %v1828 = vunpack.c.l.s4 1934713408
        %v1829 = vunpack.c.0.s8 %v1828
        %v1830 = vlaneseq
        %v1831 = vshrl.u32 %v1830, 7
        %v1832 = vsub.s32 %v1829, %v1831
        %v1833 = vrot.slane %v1826, %v1832
        %v1834 = vcombine.high %v1833, 0
        %v1837 = vpack.i.b16 %v1833, %v1808
        %v1838 = vshrl.u32 %v1808, 16
        %v1839 = vshrl.u32 %v1833, 16
        %v1840 = vpack.i.b16 %v1839, %v1838
        %v1843 = vpack.i.b16 %v1834, %v1809
        %v1844 = vshrl.u32 %v1809, 16
        %v1845 = vshrl.u32 %v1834, 16
        %v1846 = vpack.i.b16 %v1845, %v1844
        %1847 = vrot.lane.b32.xlu0 %v1840, 8
        %v1848 = vpop.permute.xlu0 %1847
        %1849 = vrot.lane.b32.xlu0 %v1843, 16
        %v1850 = vpop.permute.xlu0 %1849
        %1851 = vrot.lane.b32.xlu0 %v1846, 24
        %v1852 = vpop.permute.xlu0 %1851
        %v1855 = vsel %vm1256, %v1837, %v1848
        %vm1856 = vcmask 130048
        %v1858 = vsel %vm1856, %v1855, %v1850
        %vm1859 = vcmask 195584
        %v1861 = vsel %vm1859, %v1858, %v1852
        %s1862 = scalar_lea.vmem [#allocation7], 48
        %v1863 = vld [vmem:[%s1862] sm:$0xf]
        %v1864 = vld [vmem:[%s1862 + $0x4] sm:$0xf]
        %v1865 = vld [vmem:[%s1862 + $0x8] sm:$0xf]
        %v1866 = vld [vmem:[%s1862 + $0xc] sm:$0xf]
        %v1867 = vld [vmem:[%s5 + $0x3] sm:$0x1]
        %v1868 = vlaneseq
        %v1869 = vshrl.u32 %v1868, 7
        %v1870 = vsub.s32 0, %v1869
        %v1871 = vrot.slane %v1867, %v1870
        %v1876 = vunpack.c.l.b16 %v1863
        %v1877 = vunpack.c.l.b16 %v1864
        %v1878 = vunpack.c.l.b16 %v1865
        %v1879 = vunpack.c.l.b16 %v1866
        %v1880 = vpack.c.b16 %v1877, %v1876
        %v1881 = vpack.c.b16 %v1879, %v1878
        %v1884 = vsel %vm535, %v1861, 0
        %1886 = vmatprep.subr.bf16.mxu0 0
        %1887 = vmatpush1.bf16.msra.mxu0 %v1880
        %1888 = vmatprep.subr.bf16.mxu0 0
        %1889 = vmatpush1.bf16.msra.mxu0 %v1881
        %1890 = vmatprep.subr.bf16.mxu0 0
        %1891 = vmatpush1.bf16.msra.mxu0 0
        %1892 = vmatprep.subr.bf16.mxu0 0
        %1893 = vmatpush1.bf16.msra.mxu0 0
        %1894 = vmatprep.subr.bf16.mxu0 0
        %1895 = vmatpush1.bf16.msra.mxu0 0
        %1896 = vmatprep.subr.bf16.mxu0 0
        %1897 = vmatpush1.bf16.msra.mxu0 0
        %1898 = vmatprep.subr.bf16.mxu0 0
        %1899 = vmatpush1.bf16.msra.mxu0 0
        %1900 = vmatprep.subr.bf16.mxu0 0
        %1901 = vmatpush1.bf16.msra.mxu0 0
        %1902 = vmatprep.subr.bf16.mxu0 0
        %1903 = vmatpush1.bf16.msra.mxu0 0
        %1904 = vmatprep.subr.bf16.mxu0 0
        %1905 = vmatpush1.bf16.msra.mxu0 0
        %1906 = vmatprep.subr.bf16.mxu0 0
        %1907 = vmatpush1.bf16.msra.mxu0 0
        %1908 = vmatprep.subr.bf16.mxu0 0
        %1909 = vmatpush1.bf16.msra.mxu0 0
        %1910 = vmatprep.subr.bf16.mxu0 0
        %1911 = vmatpush1.bf16.msra.mxu0 0
        %1912 = vmatprep.subr.bf16.mxu0 0
        %1913 = vmatpush1.bf16.msra.mxu0 0
        %1914 = vmatprep.subr.bf16.mxu0 0
        %1915 = vmatpush1.bf16.msra.mxu0 0
        %1916 = vmatprep.subr.bf16.mxu0 0
        %1917 = vmatpush1.bf16.msra.mxu0 0
        %1918 = vmatprep.mubr.bf16.mxu0 0
        %1919 = vmatmul.mubr.bf16.gmra.mrb[0].mxu0 %v1884
        %v1920 = vpop.f32.mrb[0].mxu0
        %v1921 = vadd.f32 %v1871, %v1920
        %v1922 = vpop.f32.mrb[0].mxu0
        %v1923 = vpop.f32.mrb[0].mxu0
        %v1924 = vpop.f32.mrb[0].mxu0
        %1925 = vdwg.mxu0
        %vm1926 = vcmask 257024
        %1927 = vst.msk [vmem:[%s508] sm:$0xf] %vm1926, %v688
        %1928 = vst.msk [vmem:[%s515] sm:$0xf] %vm1926, %v751
        %v1929 = vadd.f32 %v531, %v1921
        %v1930 = vld [vmem:[%s2 + $0x1] sm:$0x1]
        %v1931 = vld [vmem:[%s3 + $0x1] sm:$0x1]
        %v1932 = vsel %vm535, %v1929, 0.0
        %1933 = vadd.xlane.f32.xlu0 %v1932
        %v1934 = vpop.xlane.xlu0 %1933
        %v1935 = vmul.f32 %v1934, %v539
        %v1936 = vsub.f32 %v1929, %v1935
        %v1937 = vmul.f32 %v1936, %v1936
        %v1938 = vsel %vm535, %v1937, 0.0
        %1939 = vadd.xlane.f32.xlu0 %v1938
        %v1940 = vpop.xlane.xlu0 %1939
        %v1941 = vmul.f32 %v1940, %v539
        %v1942 = vadd.f32 %v1941, 1e-05
        %v1943 = vrsqrt.pop %v1942
        %v1944 = vmul.f32 %v1936, %v1943
        %v1945 = vlaneseq
        %v1946 = vshrl.u32 %v1945, 7
        %v1947 = vsub.s32 0, %v1946
        %v1948 = vrot.slane %v1930, %v1947
        %v1949 = vmul.f32 %v1944, %v1948
        %v1950 = vlaneseq
        %v1951 = vshrl.u32 %v1950, 7
        %v1952 = vsub.s32 0, %v1951
        %v1953 = vrot.slane %v1931, %v1952
        %v1954 = vadd.f32 %v1949, %v1953
        %v1955 = vpack.c.bf16 %v1954, %v1954
        %v1956 = vpack.c.bf16 %v532, %v532
        %v1957 = vld [vmem:[#allocation8] sm:$0xf]
        %v1958 = vld [vmem:[#allocation8 + $0x4] sm:$0xf]
        %v1959 = vld [vmem:[#allocation8 + $0x8] sm:$0xf]
        %v1960 = vld [vmem:[#allocation8 + $0xc] sm:$0xf]
        %v1961 = vld [vmem:[%s7] sm:$0x1]
        %v1962 = vlaneseq
        %v1963 = vshrl.u32 %v1962, 7
        %v1964 = vsub.s32 0, %v1963
        %v1965 = vrot.slane %v1961, %v1964
        %v1970 = vunpack.c.l.b16 %v1957
        %v1971 = vunpack.c.l.b16 %v1958
        %v1972 = vunpack.c.l.b16 %v1959
        %v1973 = vunpack.c.l.b16 %v1960
        %v1974 = vpack.c.b16 %v1971, %v1970
        %v1975 = vpack.c.b16 %v1973, %v1972
        %v1979 = vsel %vm535, %v1955, 0
        %1981 = vmatprep.subr.bf16.mxu0 0
        %1982 = vmatpush1.bf16.msra.mxu0 %v1974
        %1983 = vmatprep.subr.bf16.mxu0 0
        %1984 = vmatpush1.bf16.msra.mxu0 %v1975
        %1985 = vmatprep.subr.bf16.mxu0 0
        %1986 = vmatpush1.bf16.msra.mxu0 0
        %1987 = vmatprep.subr.bf16.mxu0 0
        %1988 = vmatpush1.bf16.msra.mxu0 0
        %1989 = vmatprep.subr.bf16.mxu0 0
        %1990 = vmatpush1.bf16.msra.mxu0 0
        %1991 = vmatprep.subr.bf16.mxu0 0
        %1992 = vmatpush1.bf16.msra.mxu0 0
        %1993 = vmatprep.subr.bf16.mxu0 0
        %1994 = vmatpush1.bf16.msra.mxu0 0
        %1995 = vmatprep.subr.bf16.mxu0 0
        %1996 = vmatpush1.bf16.msra.mxu0 0
        %1997 = vmatprep.subr.bf16.mxu0 0
        %1998 = vmatpush1.bf16.msra.mxu0 0
        %1999 = vmatprep.subr.bf16.mxu0 0
        %2000 = vmatpush1.bf16.msra.mxu0 0
        %2001 = vmatprep.subr.bf16.mxu0 0
        %2002 = vmatpush1.bf16.msra.mxu0 0
        %2003 = vmatprep.subr.bf16.mxu0 0
        %2004 = vmatpush1.bf16.msra.mxu0 0
        %2005 = vmatprep.subr.bf16.mxu0 0
        %2006 = vmatpush1.bf16.msra.mxu0 0
        %2007 = vmatprep.subr.bf16.mxu0 0
        %2008 = vmatpush1.bf16.msra.mxu0 0
        %2009 = vmatprep.subr.bf16.mxu0 0
        %2010 = vmatpush1.bf16.msra.mxu0 0
        %2011 = vmatprep.subr.bf16.mxu0 0
        %2012 = vmatpush1.bf16.msra.mxu0 0
        %2013 = vmatprep.mubr.bf16.mxu0 0
        %2014 = vmatmul.mubr.bf16.gmra.mrb[0].mxu0 %v1979
        %v2015 = vpop.f32.mrb[0].mxu0
        %v2016 = vadd.f32 %v1965, %v2015
        %v2017 = vpop.f32.mrb[0].mxu0
        %v2018 = vpop.f32.mrb[0].mxu0
        %v2019 = vpop.f32.mrb[0].mxu0
        %2020 = vdwg.mxu0
        %v2021 = vpack.c.bf16 %v2016, %v2016
        %s2022 = scalar_lea.vmem [#allocation8], 16
        %v2023 = vld [vmem:[%s2022] sm:$0xf]
        %v2024 = vld [vmem:[%s2022 + $0x4] sm:$0xf]
        %v2025 = vld [vmem:[%s2022 + $0x8] sm:$0xf]
        %v2026 = vld [vmem:[%s2022 + $0xc] sm:$0xf]
        %v2027 = vld [vmem:[%s7 + $0x1] sm:$0x1]
        %v2028 = vlaneseq
        %v2029 = vshrl.u32 %v2028, 7
        %v2030 = vsub.s32 0, %v2029
        %v2031 = vrot.slane %v2027, %v2030
        %v2036 = vunpack.c.l.b16 %v2023
        %v2037 = vunpack.c.l.b16 %v2024
        %v2038 = vunpack.c.l.b16 %v2025
        %v2039 = vunpack.c.l.b16 %v2026
        %v2040 = vpack.c.b16 %v2037, %v2036
        %v2041 = vpack.c.b16 %v2039, %v2038
        %v2045 = vsel %vm535, %v1956, 0
        %2047 = vmatprep.subr.bf16.mxu0 0
        %2048 = vmatpush1.bf16.msra.mxu0 %v2040
        %2049 = vmatprep.subr.bf16.mxu0 0
        %2050 = vmatpush1.bf16.msra.mxu0 %v2041
        %2051 = vmatprep.subr.bf16.mxu0 0
        %2052 = vmatpush1.bf16.msra.mxu0 0
        %2053 = vmatprep.subr.bf16.mxu0 0
        %2054 = vmatpush1.bf16.msra.mxu0 0
        %2055 = vmatprep.subr.bf16.mxu0 0
        %2056 = vmatpush1.bf16.msra.mxu0 0
        %2057 = vmatprep.subr.bf16.mxu0 0
        %2058 = vmatpush1.bf16.msra.mxu0 0
        %2059 = vmatprep.subr.bf16.mxu0 0
        %2060 = vmatpush1.bf16.msra.mxu0 0
        %2061 = vmatprep.subr.bf16.mxu0 0
        %2062 = vmatpush1.bf16.msra.mxu0 0
        %2063 = vmatprep.subr.bf16.mxu0 0
        %2064 = vmatpush1.bf16.msra.mxu0 0
        %2065 = vmatprep.subr.bf16.mxu0 0
        %2066 = vmatpush1.bf16.msra.mxu0 0
        %2067 = vmatprep.subr.bf16.mxu0 0
        %2068 = vmatpush1.bf16.msra.mxu0 0
        %2069 = vmatprep.subr.bf16.mxu0 0
        %2070 = vmatpush1.bf16.msra.mxu0 0
        %2071 = vmatprep.subr.bf16.mxu0 0
        %2072 = vmatpush1.bf16.msra.mxu0 0
        %2073 = vmatprep.subr.bf16.mxu0 0
        %2074 = vmatpush1.bf16.msra.mxu0 0
        %2075 = vmatprep.subr.bf16.mxu0 0
        %2076 = vmatpush1.bf16.msra.mxu0 0
        %2077 = vmatprep.subr.bf16.mxu0 0
        %2078 = vmatpush1.bf16.msra.mxu0 0
        %2079 = vmatprep.mubr.bf16.mxu0 0
        %2080 = vmatmul.mubr.bf16.gmra.mrb[0].mxu0 %v2045
        %v2081 = vpop.f32.mrb[0].mxu0
        %v2082 = vadd.f32 %v2031, %v2081
        %v2083 = vpop.f32.mrb[0].mxu0
        %v2084 = vpop.f32.mrb[0].mxu0
        %v2085 = vpop.f32.mrb[0].mxu0
        %2086 = vdwg.mxu0
        %v2087 = vpack.c.bf16 %v2082, %v2082
        %s2088 = scalar_lea.vmem [#allocation8], 32
        %v2089 = vld [vmem:[%s2088] sm:$0xf]
        %v2090 = vld [vmem:[%s2088 + $0x4] sm:$0xf]
        %v2091 = vld [vmem:[%s2088 + $0x8] sm:$0xf]
        %v2092 = vld [vmem:[%s2088 + $0xc] sm:$0xf]
        %v2093 = vld [vmem:[%s7 + $0x2] sm:$0x1]
        %v2094 = vlaneseq
        %v2095 = vshrl.u32 %v2094, 7
        %v2096 = vsub.s32 0, %v2095
        %v2097 = vrot.slane %v2093, %v2096
        %v2102 = vunpack.c.l.b16 %v2089
        %v2103 = vunpack.c.l.b16 %v2090
        %v2104 = vunpack.c.l.b16 %v2091
        %v2105 = vunpack.c.l.b16 %v2092
        %v2106 = vpack.c.b16 %v2103, %v2102
        %v2107 = vpack.c.b16 %v2105, %v2104
        %2110 = vmatprep.subr.bf16.mxu0 0
        %2111 = vmatpush1.bf16.msra.mxu0 %v2106
        %2112 = vmatprep.subr.bf16.mxu0 0
        %2113 = vmatpush1.bf16.msra.mxu0 %v2107
        %2114 = vmatprep.subr.bf16.mxu0 0
        %2115 = vmatpush1.bf16.msra.mxu0 0
        %2116 = vmatprep.subr.bf16.mxu0 0
        %2117 = vmatpush1.bf16.msra.mxu0 0
        %2118 = vmatprep.subr.bf16.mxu0 0
        %2119 = vmatpush1.bf16.msra.mxu0 0
        %2120 = vmatprep.subr.bf16.mxu0 0
        %2121 = vmatpush1.bf16.msra.mxu0 0
        %2122 = vmatprep.subr.bf16.mxu0 0
        %2123 = vmatpush1.bf16.msra.mxu0 0
        %2124 = vmatprep.subr.bf16.mxu0 0
        %2125 = vmatpush1.bf16.msra.mxu0 0
        %2126 = vmatprep.subr.bf16.mxu0 0
        %2127 = vmatpush1.bf16.msra.mxu0 0
        %2128 = vmatprep.subr.bf16.mxu0 0
        %2129 = vmatpush1.bf16.msra.mxu0 0
        %2130 = vmatprep.subr.bf16.mxu0 0
        %2131 = vmatpush1.bf16.msra.mxu0 0
        %2132 = vmatprep.subr.bf16.mxu0 0
        %2133 = vmatpush1.bf16.msra.mxu0 0
        %2134 = vmatprep.subr.bf16.mxu0 0
        %2135 = vmatpush1.bf16.msra.mxu0 0
        %2136 = vmatprep.subr.bf16.mxu0 0
        %2137 = vmatpush1.bf16.msra.mxu0 0
        %2138 = vmatprep.subr.bf16.mxu0 0
        %2139 = vmatpush1.bf16.msra.mxu0 0
        %2140 = vmatprep.subr.bf16.mxu0 0
        %2141 = vmatpush1.bf16.msra.mxu0 0
        %2142 = vmatprep.mubr.bf16.mxu0 0
        %2143 = vmatmul.mubr.bf16.gmra.mrb[0].mxu0 %v2045
        %v2144 = vpop.f32.mrb[0].mxu0
        %v2145 = vadd.f32 %v2097, %v2144
        %v2146 = vpop.f32.mrb[0].mxu0
        %v2147 = vpop.f32.mrb[0].mxu0
        %v2148 = vpop.f32.mrb[0].mxu0
        %2149 = vdwg.mxu0
        %v2150 = vpack.c.bf16 %v2145, %v2145
        %2152 = vrot.lane.b32.xlu0 %v2021, 120
        %v2153 = vpop.permute.xlu0 %2152
        %2154 = vrot.lane.b32.xlu0 %v2021, 112
        %v2155 = vpop.permute.xlu0 %2154
        %2156 = vrot.lane.b32.xlu0 %v2021, 104
        %v2157 = vpop.permute.xlu0 %2156
        %v2159 = vunpack.c.l.s4 1983009808
        %v2160 = vunpack.c.0.s8 %v2159
        %v2161 = vlaneseq
        %v2162 = vshrl.u32 %v2161, 7
        %v2163 = vsub.s32 %v2160, %v2162
        %v2164 = vrot.slane %v2021, %v2163
        %v2167 = vunpack.c.l.s4 1983009808
        %v2168 = vunpack.c.0.s8 %v2167
        %v2169 = vlaneseq
        %v2170 = vshrl.u32 %v2169, 7
        %v2171 = vsub.s32 %v2168, %v2170
        %v2172 = vrot.slane %v2155, %v2171
        %v2173 = vcombine.low %v2164, %v2172
        %v2174 = vcombine.high %v2164, %v2172
        %v2176 = vunpack.c.l.s4 1934713408
        %v2177 = vunpack.c.0.s8 %v2176
        %v2178 = vlaneseq
        %v2179 = vshrl.u32 %v2178, 7
        %v2180 = vsub.s32 %v2177, %v2179
        %v2181 = vrot.slane %v2173, %v2180
        %v2183 = vunpack.c.l.s4 1934713408
        %v2184 = vunpack.c.0.s8 %v2183
        %v2185 = vlaneseq
        %v2186 = vshrl.u32 %v2185, 7
        %v2187 = vsub.s32 %v2184, %v2186
        %v2188 = vrot.slane %v2174, %v2187
        %v2189 = vcombine.high %v2181, 0
        %v2190 = vcombine.high %v2188, 0
        %v2193 = vunpack.c.l.s4 1983009808
        %v2194 = vunpack.c.0.s8 %v2193
        %v2195 = vlaneseq
        %v2196 = vshrl.u32 %v2195, 7
        %v2197 = vsub.s32 %v2194, %v2196
        %v2198 = vrot.slane %v2153, %v2197
        %v2201 = vunpack.c.l.s4 1983009808
        %v2202 = vunpack.c.0.s8 %v2201
        %v2203 = vlaneseq
        %v2204 = vshrl.u32 %v2203, 7
        %v2205 = vsub.s32 %v2202, %v2204
        %v2206 = vrot.slane %v2157, %v2205
        %v2207 = vcombine.low %v2198, %v2206
        %v2208 = vcombine.high %v2198, %v2206
        %v2210 = vunpack.c.l.s4 1934713408
        %v2211 = vunpack.c.0.s8 %v2210
        %v2212 = vlaneseq
        %v2213 = vshrl.u32 %v2212, 7
        %v2214 = vsub.s32 %v2211, %v2213
        %v2215 = vrot.slane %v2207, %v2214
        %v2217 = vunpack.c.l.s4 1934713408
        %v2218 = vunpack.c.0.s8 %v2217
        %v2219 = vlaneseq
        %v2220 = vshrl.u32 %v2219, 7
        %v2221 = vsub.s32 %v2218, %v2220
        %v2222 = vrot.slane %v2208, %v2221
        %v2223 = vcombine.high %v2215, 0
        %v2224 = vcombine.high %v2222, 0
        %v2227 = vpack.i.b16 %v2215, %v2181
        %v2229 = vshrl.u32 %v2181, 16
        %v2230 = vshrl.u32 %v2215, 16
        %v2231 = vpack.i.b16 %v2230, %v2229
        %v2235 = vpack.i.b16 %v2223, %v2189
        %v2237 = vshrl.u32 %v2189, 16
        %v2238 = vshrl.u32 %v2223, 16
        %v2239 = vpack.i.b16 %v2238, %v2237
        %v2243 = vpack.i.b16 %v2222, %v2188
        %v2245 = vshrl.u32 %v2188, 16
        %v2246 = vshrl.u32 %v2222, 16
        %v2247 = vpack.i.b16 %v2246, %v2245
        %v2251 = vpack.i.b16 %v2224, %v2190
        %v2253 = vshrl.u32 %v2190, 16
        %v2254 = vshrl.u32 %v2224, 16
        %v2255 = vpack.i.b16 %v2254, %v2253
        %v2257 = vcombine.low %v2227, %v2243
        %v2259 = vunpack.c.l.s4 1983009808
        %v2260 = vunpack.c.0.s8 %v2259
        %v2261 = vlaneseq
        %v2262 = vshrl.u32 %v2261, 7
        %v2263 = vsub.s32 %v2260, %v2262
        %v2264 = vrot.slane %v2257, %v2263
        %v2265 = vcombine.low %v2235, %v2251
        %v2267 = vunpack.c.l.s4 1983009808
        %v2268 = vunpack.c.0.s8 %v2267
        %v2269 = vlaneseq
        %v2270 = vshrl.u32 %v2269, 7
        %v2271 = vsub.s32 %v2268, %v2270
        %v2272 = vrot.slane %v2265, %v2271
        %v2273 = vcombine.low %v2264, %v2272
        %v2275 = vunpack.c.l.s4 1934713408
        %v2276 = vunpack.c.0.s8 %v2275
        %v2277 = vlaneseq
        %v2278 = vshrl.u32 %v2277, 7
        %v2279 = vsub.s32 %v2276, %v2278
        %v2280 = vrot.slane %v2273, %v2279
        %v2281 = vcombine.high %v2280, 0
        %v2282 = vcombine.low %v2231, %v2247
        %v2284 = vunpack.c.l.s4 1983009808
        %v2285 = vunpack.c.0.s8 %v2284
        %v2286 = vlaneseq
        %v2287 = vshrl.u32 %v2286, 7
        %v2288 = vsub.s32 %v2285, %v2287
        %v2289 = vrot.slane %v2282, %v2288
        %v2290 = vcombine.low %v2239, %v2255
        %v2292 = vunpack.c.l.s4 1983009808
        %v2293 = vunpack.c.0.s8 %v2292
        %v2294 = vlaneseq
        %v2295 = vshrl.u32 %v2294, 7
        %v2296 = vsub.s32 %v2293, %v2295
        %v2297 = vrot.slane %v2290, %v2296
        %v2298 = vcombine.low %v2289, %v2297
        %v2300 = vunpack.c.l.s4 1934713408
        %v2301 = vunpack.c.0.s8 %v2300
        %v2302 = vlaneseq
        %v2303 = vshrl.u32 %v2302, 7
        %v2304 = vsub.s32 %v2301, %v2303
        %v2305 = vrot.slane %v2298, %v2304
        %v2306 = vcombine.high %v2305, 0
        %v2309 = vpack.i.b16 %v2305, %v2280
        %v2310 = vshrl.u32 %v2280, 16
        %v2311 = vshrl.u32 %v2305, 16
        %v2312 = vpack.i.b16 %v2311, %v2310
        %v2315 = vpack.i.b16 %v2306, %v2281
        %v2316 = vshrl.u32 %v2281, 16
        %v2317 = vshrl.u32 %v2306, 16
        %v2318 = vpack.i.b16 %v2317, %v2316
        %2320 = vrot.lane.b32.xlu0 %v2087, 120
        %v2321 = vpop.permute.xlu0 %2320
        %2322 = vrot.lane.b32.xlu0 %v2087, 112
        %v2323 = vpop.permute.xlu0 %2322
        %2324 = vrot.lane.b32.xlu0 %v2087, 104
        %v2325 = vpop.permute.xlu0 %2324
        %v2327 = vunpack.c.l.s4 1983009808
        %v2328 = vunpack.c.0.s8 %v2327
        %v2329 = vlaneseq
        %v2330 = vshrl.u32 %v2329, 7
        %v2331 = vsub.s32 %v2328, %v2330
        %v2332 = vrot.slane %v2087, %v2331
        %v2335 = vunpack.c.l.s4 1983009808
        %v2336 = vunpack.c.0.s8 %v2335
        %v2337 = vlaneseq
        %v2338 = vshrl.u32 %v2337, 7
        %v2339 = vsub.s32 %v2336, %v2338
        %v2340 = vrot.slane %v2323, %v2339
        %v2341 = vcombine.low %v2332, %v2340
        %v2342 = vcombine.high %v2332, %v2340
        %v2344 = vunpack.c.l.s4 1934713408
        %v2345 = vunpack.c.0.s8 %v2344
        %v2346 = vlaneseq
        %v2347 = vshrl.u32 %v2346, 7
        %v2348 = vsub.s32 %v2345, %v2347
        %v2349 = vrot.slane %v2341, %v2348
        %v2351 = vunpack.c.l.s4 1934713408
        %v2352 = vunpack.c.0.s8 %v2351
        %v2353 = vlaneseq
        %v2354 = vshrl.u32 %v2353, 7
        %v2355 = vsub.s32 %v2352, %v2354
        %v2356 = vrot.slane %v2342, %v2355
        %v2357 = vcombine.high %v2349, 0
        %v2358 = vcombine.high %v2356, 0
        %v2361 = vunpack.c.l.s4 1983009808
        %v2362 = vunpack.c.0.s8 %v2361
        %v2363 = vlaneseq
        %v2364 = vshrl.u32 %v2363, 7
        %v2365 = vsub.s32 %v2362, %v2364
        %v2366 = vrot.slane %v2321, %v2365
        %v2369 = vunpack.c.l.s4 1983009808
        %v2370 = vunpack.c.0.s8 %v2369
        %v2371 = vlaneseq
        %v2372 = vshrl.u32 %v2371, 7
        %v2373 = vsub.s32 %v2370, %v2372
        %v2374 = vrot.slane %v2325, %v2373
        %v2375 = vcombine.low %v2366, %v2374
        %v2376 = vcombine.high %v2366, %v2374
        %v2378 = vunpack.c.l.s4 1934713408
        %v2379 = vunpack.c.0.s8 %v2378
        %v2380 = vlaneseq
        %v2381 = vshrl.u32 %v2380, 7
        %v2382 = vsub.s32 %v2379, %v2381
        %v2383 = vrot.slane %v2375, %v2382
        %v2385 = vunpack.c.l.s4 1934713408
        %v2386 = vunpack.c.0.s8 %v2385
        %v2387 = vlaneseq
        %v2388 = vshrl.u32 %v2387, 7
        %v2389 = vsub.s32 %v2386, %v2388
        %v2390 = vrot.slane %v2376, %v2389
        %v2391 = vcombine.high %v2383, 0
        %v2392 = vcombine.high %v2390, 0
        %v2395 = vpack.i.b16 %v2383, %v2349
        %v2397 = vshrl.u32 %v2349, 16
        %v2398 = vshrl.u32 %v2383, 16
        %v2399 = vpack.i.b16 %v2398, %v2397
        %v2403 = vpack.i.b16 %v2391, %v2357
        %v2405 = vshrl.u32 %v2357, 16
        %v2406 = vshrl.u32 %v2391, 16
        %v2407 = vpack.i.b16 %v2406, %v2405
        %v2411 = vpack.i.b16 %v2390, %v2356
        %v2413 = vshrl.u32 %v2356, 16
        %v2414 = vshrl.u32 %v2390, 16
        %v2415 = vpack.i.b16 %v2414, %v2413
        %v2419 = vpack.i.b16 %v2392, %v2358
        %v2421 = vshrl.u32 %v2358, 16
        %v2422 = vshrl.u32 %v2392, 16
        %v2423 = vpack.i.b16 %v2422, %v2421
        %v2425 = vcombine.low %v2395, %v2411
        %v2427 = vunpack.c.l.s4 1983009808
        %v2428 = vunpack.c.0.s8 %v2427
        %v2429 = vlaneseq
        %v2430 = vshrl.u32 %v2429, 7
        %v2431 = vsub.s32 %v2428, %v2430
        %v2432 = vrot.slane %v2425, %v2431
        %v2433 = vcombine.low %v2403, %v2419
        %v2435 = vunpack.c.l.s4 1983009808
        %v2436 = vunpack.c.0.s8 %v2435
        %v2437 = vlaneseq
        %v2438 = vshrl.u32 %v2437, 7
        %v2439 = vsub.s32 %v2436, %v2438
        %v2440 = vrot.slane %v2433, %v2439
        %v2441 = vcombine.low %v2432, %v2440
        %v2443 = vunpack.c.l.s4 1934713408
        %v2444 = vunpack.c.0.s8 %v2443
        %v2445 = vlaneseq
        %v2446 = vshrl.u32 %v2445, 7
        %v2447 = vsub.s32 %v2444, %v2446
        %v2448 = vrot.slane %v2441, %v2447
        %v2449 = vcombine.high %v2448, 0
        %v2450 = vcombine.low %v2399, %v2415
        %v2452 = vunpack.c.l.s4 1983009808
        %v2453 = vunpack.c.0.s8 %v2452
        %v2454 = vlaneseq
        %v2455 = vshrl.u32 %v2454, 7
        %v2456 = vsub.s32 %v2453, %v2455
        %v2457 = vrot.slane %v2450, %v2456
        %v2458 = vcombine.low %v2407, %v2423
        %v2460 = vunpack.c.l.s4 1983009808
        %v2461 = vunpack.c.0.s8 %v2460
        %v2462 = vlaneseq
        %v2463 = vshrl.u32 %v2462, 7
        %v2464 = vsub.s32 %v2461, %v2463
        %v2465 = vrot.slane %v2458, %v2464
        %v2466 = vcombine.low %v2457, %v2465
        %v2468 = vunpack.c.l.s4 1934713408
        %v2469 = vunpack.c.0.s8 %v2468
        %v2470 = vlaneseq
        %v2471 = vshrl.u32 %v2470, 7
        %v2472 = vsub.s32 %v2469, %v2471
        %v2473 = vrot.slane %v2466, %v2472
        %v2474 = vcombine.high %v2473, 0
        %v2477 = vpack.i.b16 %v2473, %v2448
        %v2478 = vshrl.u32 %v2448, 16
        %v2479 = vshrl.u32 %v2473, 16
        %v2480 = vpack.i.b16 %v2479, %v2478
        %v2483 = vpack.i.b16 %v2474, %v2449
        %v2484 = vshrl.u32 %v2449, 16
        %v2485 = vshrl.u32 %v2474, 16
        %v2486 = vpack.i.b16 %v2485, %v2484
        %2488 = vrot.lane.b32.xlu0 %v2150, 120
        %v2489 = vpop.permute.xlu0 %2488
        %2490 = vrot.lane.b32.xlu0 %v2150, 112
        %v2491 = vpop.permute.xlu0 %2490
        %2492 = vrot.lane.b32.xlu0 %v2150, 104
        %v2493 = vpop.permute.xlu0 %2492
        %v2495 = vunpack.c.l.s4 1983009808
        %v2496 = vunpack.c.0.s8 %v2495
        %v2497 = vlaneseq
        %v2498 = vshrl.u32 %v2497, 7
        %v2499 = vsub.s32 %v2496, %v2498
        %v2500 = vrot.slane %v2150, %v2499
        %v2503 = vunpack.c.l.s4 1983009808
        %v2504 = vunpack.c.0.s8 %v2503
        %v2505 = vlaneseq
        %v2506 = vshrl.u32 %v2505, 7
        %v2507 = vsub.s32 %v2504, %v2506
        %v2508 = vrot.slane %v2491, %v2507
        %v2509 = vcombine.low %v2500, %v2508
        %v2510 = vcombine.high %v2500, %v2508
        %v2512 = vunpack.c.l.s4 1934713408
        %v2513 = vunpack.c.0.s8 %v2512
        %v2514 = vlaneseq
        %v2515 = vshrl.u32 %v2514, 7
        %v2516 = vsub.s32 %v2513, %v2515
        %v2517 = vrot.slane %v2509, %v2516
        %v2519 = vunpack.c.l.s4 1934713408
        %v2520 = vunpack.c.0.s8 %v2519
        %v2521 = vlaneseq
        %v2522 = vshrl.u32 %v2521, 7
        %v2523 = vsub.s32 %v2520, %v2522
        %v2524 = vrot.slane %v2510, %v2523
        %v2525 = vcombine.high %v2517, 0
        %v2526 = vcombine.high %v2524, 0
        %v2529 = vunpack.c.l.s4 1983009808
        %v2530 = vunpack.c.0.s8 %v2529
        %v2531 = vlaneseq
        %v2532 = vshrl.u32 %v2531, 7
        %v2533 = vsub.s32 %v2530, %v2532
        %v2534 = vrot.slane %v2489, %v2533
        %v2537 = vunpack.c.l.s4 1983009808
        %v2538 = vunpack.c.0.s8 %v2537
        %v2539 = vlaneseq
        %v2540 = vshrl.u32 %v2539, 7
        %v2541 = vsub.s32 %v2538, %v2540
        %v2542 = vrot.slane %v2493, %v2541
        %v2543 = vcombine.low %v2534, %v2542
        %v2544 = vcombine.high %v2534, %v2542
        %v2546 = vunpack.c.l.s4 1934713408
        %v2547 = vunpack.c.0.s8 %v2546
        %v2548 = vlaneseq
        %v2549 = vshrl.u32 %v2548, 7
        %v2550 = vsub.s32 %v2547, %v2549
        %v2551 = vrot.slane %v2543, %v2550
        %v2553 = vunpack.c.l.s4 1934713408
        %v2554 = vunpack.c.0.s8 %v2553
        %v2555 = vlaneseq
        %v2556 = vshrl.u32 %v2555, 7
        %v2557 = vsub.s32 %v2554, %v2556
        %v2558 = vrot.slane %v2544, %v2557
        %v2559 = vcombine.high %v2551, 0
        %v2560 = vcombine.high %v2558, 0
        %v2563 = vpack.i.b16 %v2551, %v2517
        %v2565 = vshrl.u32 %v2517, 16
        %v2566 = vshrl.u32 %v2551, 16
        %v2567 = vpack.i.b16 %v2566, %v2565
        %v2571 = vpack.i.b16 %v2559, %v2525
        %v2573 = vshrl.u32 %v2525, 16
        %v2574 = vshrl.u32 %v2559, 16
        %v2575 = vpack.i.b16 %v2574, %v2573
        %v2579 = vpack.i.b16 %v2558, %v2524
        %v2581 = vshrl.u32 %v2524, 16
        %v2582 = vshrl.u32 %v2558, 16
        %v2583 = vpack.i.b16 %v2582, %v2581
        %v2587 = vpack.i.b16 %v2560, %v2526
        %v2589 = vshrl.u32 %v2526, 16
        %v2590 = vshrl.u32 %v2560, 16
        %v2591 = vpack.i.b16 %v2590, %v2589
        %v2593 = vcombine.low %v2563, %v2579
        %v2595 = vunpack.c.l.s4 1983009808
        %v2596 = vunpack.c.0.s8 %v2595
        %v2597 = vlaneseq
        %v2598 = vshrl.u32 %v2597, 7
        %v2599 = vsub.s32 %v2596, %v2598
        %v2600 = vrot.slane %v2593, %v2599
        %v2601 = vcombine.low %v2571, %v2587
        %v2603 = vunpack.c.l.s4 1983009808
        %v2604 = vunpack.c.0.s8 %v2603
        %v2605 = vlaneseq
        %v2606 = vshrl.u32 %v2605, 7
        %v2607 = vsub.s32 %v2604, %v2606
        %v2608 = vrot.slane %v2601, %v2607
        %v2609 = vcombine.low %v2600, %v2608
        %v2611 = vunpack.c.l.s4 1934713408
        %v2612 = vunpack.c.0.s8 %v2611
        %v2613 = vlaneseq
        %v2614 = vshrl.u32 %v2613, 7
        %v2615 = vsub.s32 %v2612, %v2614
        %v2616 = vrot.slane %v2609, %v2615
        %v2617 = vcombine.high %v2616, 0
        %v2618 = vcombine.low %v2567, %v2583
        %v2620 = vunpack.c.l.s4 1983009808
        %v2621 = vunpack.c.0.s8 %v2620
        %v2622 = vlaneseq
        %v2623 = vshrl.u32 %v2622, 7
        %v2624 = vsub.s32 %v2621, %v2623
        %v2625 = vrot.slane %v2618, %v2624
        %v2626 = vcombine.low %v2575, %v2591
        %v2628 = vunpack.c.l.s4 1983009808
        %v2629 = vunpack.c.0.s8 %v2628
        %v2630 = vlaneseq
        %v2631 = vshrl.u32 %v2630, 7
        %v2632 = vsub.s32 %v2629, %v2631
        %v2633 = vrot.slane %v2626, %v2632
        %v2634 = vcombine.low %v2625, %v2633
        %v2636 = vunpack.c.l.s4 1934713408
        %v2637 = vunpack.c.0.s8 %v2636
        %v2638 = vlaneseq
        %v2639 = vshrl.u32 %v2638, 7
        %v2640 = vsub.s32 %v2637, %v2639
        %v2641 = vrot.slane %v2634, %v2640
        %v2642 = vcombine.high %v2641, 0
        %v2645 = vpack.i.b16 %v2641, %v2616
        %v2646 = vshrl.u32 %v2616, 16
        %v2647 = vshrl.u32 %v2641, 16
        %v2648 = vpack.i.b16 %v2647, %v2646
        %v2651 = vpack.i.b16 %v2642, %v2617
        %v2652 = vshrl.u32 %v2617, 16
        %v2653 = vshrl.u32 %v2642, 16
        %v2654 = vpack.i.b16 %v2653, %v2652
        %v2656 = vsel %vm1256, %v2309, 0
        %v2659 = vsel %vm1256, %v2477, 0
        %2661 = vmatprep.subr.bf16.mxu0 0
        %2662 = vmatpush1.bf16.xpose.msra.mxu0 %v2659
        %2663 = vmatprep.subr.bf16.mxu0 0
        %2664 = vmatpush1.bf16.xpose.msra.mxu0 0
        %2665 = vmatprep.subr.bf16.mxu0 0
        %2666 = vmatpush1.bf16.xpose.msra.mxu0 0
        %2667 = vmatprep.subr.bf16.mxu0 0
        %2668 = vmatpush1.bf16.xpose.msra.mxu0 0
        %2669 = vmatprep.subr.bf16.mxu0 0
        %2670 = vmatpush1.bf16.xpose.msra.mxu0 0
        %2671 = vmatprep.subr.bf16.mxu0 0
        %2672 = vmatpush1.bf16.xpose.msra.mxu0 0
        %2673 = vmatprep.subr.bf16.mxu0 0
        %2674 = vmatpush1.bf16.xpose.msra.mxu0 0
        %2675 = vmatprep.subr.bf16.mxu0 0
        %2676 = vmatpush1.bf16.xpose.msra.mxu0 0
        %2677 = vmatprep.subr.bf16.mxu0 0
        %2678 = vmatpush1.bf16.xpose.msra.mxu0 0
        %2679 = vmatprep.subr.bf16.mxu0 0
        %2680 = vmatpush1.bf16.xpose.msra.mxu0 0
        %2681 = vmatprep.subr.bf16.mxu0 0
        %2682 = vmatpush1.bf16.xpose.msra.mxu0 0
        %2683 = vmatprep.subr.bf16.mxu0 0
        %2684 = vmatpush1.bf16.xpose.msra.mxu0 0
        %2685 = vmatprep.subr.bf16.mxu0 0
        %2686 = vmatpush1.bf16.xpose.msra.mxu0 0
        %2687 = vmatprep.subr.bf16.mxu0 0
        %2688 = vmatpush1.bf16.xpose.msra.mxu0 0
        %2689 = vmatprep.subr.bf16.mxu0 0
        %2690 = vmatpush1.bf16.xpose.msra.mxu0 0
        %2691 = vmatprep.subr.bf16.mxu0 0
        %2692 = vmatpush1.bf16.xpose.msra.mxu0 0
        %2693 = vmatprep.mubr.bf16.mxu0 0
        %2694 = vmatmul.mubr.bf16.gmra.mrb[0].mxu0 %v2656
        %v2695 = vpop.f32.mrb[0].mxu0
        %v2696 = vadd.f32 0.0, %v2695
        %v2697 = vpop.f32.mrb[0].mxu0
        %v2698 = vpop.f32.mrb[0].mxu0
        %v2699 = vpop.f32.mrb[0].mxu0
        %2700 = vdwg.mxu0
        %v2702 = vsel %vm1256, %v2312, 0
        %v2705 = vsel %vm1256, %v2480, 0
        %2707 = vmatprep.subr.bf16.mxu0 0
        %2708 = vmatpush1.bf16.xpose.msra.mxu0 %v2705
        %2709 = vmatprep.subr.bf16.mxu0 0
        %2710 = vmatpush1.bf16.xpose.msra.mxu0 0
        %2711 = vmatprep.subr.bf16.mxu0 0
        %2712 = vmatpush1.bf16.xpose.msra.mxu0 0
        %2713 = vmatprep.subr.bf16.mxu0 0
        %2714 = vmatpush1.bf16.xpose.msra.mxu0 0
        %2715 = vmatprep.subr.bf16.mxu0 0
        %2716 = vmatpush1.bf16.xpose.msra.mxu0 0
        %2717 = vmatprep.subr.bf16.mxu0 0
        %2718 = vmatpush1.bf16.xpose.msra.mxu0 0
        %2719 = vmatprep.subr.bf16.mxu0 0
        %2720 = vmatpush1.bf16.xpose.msra.mxu0 0
        %2721 = vmatprep.subr.bf16.mxu0 0
        %2722 = vmatpush1.bf16.xpose.msra.mxu0 0
        %2723 = vmatprep.subr.bf16.mxu0 0
        %2724 = vmatpush1.bf16.xpose.msra.mxu0 0
        %2725 = vmatprep.subr.bf16.mxu0 0
        %2726 = vmatpush1.bf16.xpose.msra.mxu0 0
        %2727 = vmatprep.subr.bf16.mxu0 0
        %2728 = vmatpush1.bf16.xpose.msra.mxu0 0
        %2729 = vmatprep.subr.bf16.mxu0 0
        %2730 = vmatpush1.bf16.xpose.msra.mxu0 0
        %2731 = vmatprep.subr.bf16.mxu0 0
        %2732 = vmatpush1.bf16.xpose.msra.mxu0 0
        %2733 = vmatprep.subr.bf16.mxu0 0
        %2734 = vmatpush1.bf16.xpose.msra.mxu0 0
        %2735 = vmatprep.subr.bf16.mxu0 0
        %2736 = vmatpush1.bf16.xpose.msra.mxu0 0
        %2737 = vmatprep.subr.bf16.mxu0 0
        %2738 = vmatpush1.bf16.xpose.msra.mxu0 0
        %2739 = vmatprep.mubr.bf16.mxu0 0
        %2740 = vmatmul.mubr.bf16.gmra.mrb[0].mxu0 %v2702
        %v2741 = vpop.f32.mrb[0].mxu0
        %v2742 = vadd.f32 0.0, %v2741
        %v2743 = vpop.f32.mrb[0].mxu0
        %v2744 = vpop.f32.mrb[0].mxu0
        %v2745 = vpop.f32.mrb[0].mxu0
        %2746 = vdwg.mxu0
        %v2748 = vsel %vm1256, %v2315, 0
        %v2751 = vsel %vm1256, %v2483, 0
        %2753 = vmatprep.subr.bf16.mxu0 0
        %2754 = vmatpush1.bf16.xpose.msra.mxu0 %v2751
        %2755 = vmatprep.subr.bf16.mxu0 0
        %2756 = vmatpush1.bf16.xpose.msra.mxu0 0
        %2757 = vmatprep.subr.bf16.mxu0 0
        %2758 = vmatpush1.bf16.xpose.msra.mxu0 0
        %2759 = vmatprep.subr.bf16.mxu0 0
        %2760 = vmatpush1.bf16.xpose.msra.mxu0 0
        %2761 = vmatprep.subr.bf16.mxu0 0
        %2762 = vmatpush1.bf16.xpose.msra.mxu0 0
        %2763 = vmatprep.subr.bf16.mxu0 0
        %2764 = vmatpush1.bf16.xpose.msra.mxu0 0
        %2765 = vmatprep.subr.bf16.mxu0 0
        %2766 = vmatpush1.bf16.xpose.msra.mxu0 0
        %2767 = vmatprep.subr.bf16.mxu0 0
        %2768 = vmatpush1.bf16.xpose.msra.mxu0 0
        %2769 = vmatprep.subr.bf16.mxu0 0
        %2770 = vmatpush1.bf16.xpose.msra.mxu0 0
        %2771 = vmatprep.subr.bf16.mxu0 0
        %2772 = vmatpush1.bf16.xpose.msra.mxu0 0
        %2773 = vmatprep.subr.bf16.mxu0 0
        %2774 = vmatpush1.bf16.xpose.msra.mxu0 0
        %2775 = vmatprep.subr.bf16.mxu0 0
        %2776 = vmatpush1.bf16.xpose.msra.mxu0 0
        %2777 = vmatprep.subr.bf16.mxu0 0
        %2778 = vmatpush1.bf16.xpose.msra.mxu0 0
        %2779 = vmatprep.subr.bf16.mxu0 0
        %2780 = vmatpush1.bf16.xpose.msra.mxu0 0
        %2781 = vmatprep.subr.bf16.mxu0 0
        %2782 = vmatpush1.bf16.xpose.msra.mxu0 0
        %2783 = vmatprep.subr.bf16.mxu0 0
        %2784 = vmatpush1.bf16.xpose.msra.mxu0 0
        %2785 = vmatprep.mubr.bf16.mxu0 0
        %2786 = vmatmul.mubr.bf16.gmra.mrb[0].mxu0 %v2748
        %v2787 = vpop.f32.mrb[0].mxu0
        %v2788 = vadd.f32 0.0, %v2787
        %v2789 = vpop.f32.mrb[0].mxu0
        %v2790 = vpop.f32.mrb[0].mxu0
        %v2791 = vpop.f32.mrb[0].mxu0
        %2792 = vdwg.mxu0
        %v2794 = vsel %vm1256, %v2318, 0
        %v2797 = vsel %vm1256, %v2486, 0
        %2799 = vmatprep.subr.bf16.mxu0 0
        %2800 = vmatpush1.bf16.xpose.msra.mxu0 %v2797
        %2801 = vmatprep.subr.bf16.mxu0 0
        %2802 = vmatpush1.bf16.xpose.msra.mxu0 0
        %2803 = vmatprep.subr.bf16.mxu0 0
        %2804 = vmatpush1.bf16.xpose.msra.mxu0 0
        %2805 = vmatprep.subr.bf16.mxu0 0
        %2806 = vmatpush1.bf16.xpose.msra.mxu0 0
        %2807 = vmatprep.subr.bf16.mxu0 0
        %2808 = vmatpush1.bf16.xpose.msra.mxu0 0
        %2809 = vmatprep.subr.bf16.mxu0 0
        %2810 = vmatpush1.bf16.xpose.msra.mxu0 0
        %2811 = vmatprep.subr.bf16.mxu0 0
        %2812 = vmatpush1.bf16.xpose.msra.mxu0 0
        %2813 = vmatprep.subr.bf16.mxu0 0
        %2814 = vmatpush1.bf16.xpose.msra.mxu0 0
        %2815 = vmatprep.subr.bf16.mxu0 0
        %2816 = vmatpush1.bf16.xpose.msra.mxu0 0
        %2817 = vmatprep.subr.bf16.mxu0 0
        %2818 = vmatpush1.bf16.xpose.msra.mxu0 0
        %2819 = vmatprep.subr.bf16.mxu0 0
        %2820 = vmatpush1.bf16.xpose.msra.mxu0 0
        %2821 = vmatprep.subr.bf16.mxu0 0
        %2822 = vmatpush1.bf16.xpose.msra.mxu0 0
        %2823 = vmatprep.subr.bf16.mxu0 0
        %2824 = vmatpush1.bf16.xpose.msra.mxu0 0
        %2825 = vmatprep.subr.bf16.mxu0 0
        %2826 = vmatpush1.bf16.xpose.msra.mxu0 0
        %2827 = vmatprep.subr.bf16.mxu0 0
        %2828 = vmatpush1.bf16.xpose.msra.mxu0 0
        %2829 = vmatprep.subr.bf16.mxu0 0
        %2830 = vmatpush1.bf16.xpose.msra.mxu0 0
        %2831 = vmatprep.mubr.bf16.mxu0 0
        %2832 = vmatmul.mubr.bf16.gmra.mrb[0].mxu0 %v2794
        %v2833 = vpop.f32.mrb[0].mxu0
        %v2834 = vadd.f32 0.0, %v2833
        %v2835 = vpop.f32.mrb[0].mxu0
        %v2836 = vpop.f32.mrb[0].mxu0
        %v2837 = vpop.f32.mrb[0].mxu0
        %2838 = vdwg.mxu0
        %v2839 = vsel %vm1256, %v2696, -inf
        %2840 = vmax.xlane.f32.xlu0 %v2839
        %v2841 = vpop.xlane.xlu0 %2840
        %v2842 = vsel %vm1256, %v2742, -inf
        %2843 = vmax.xlane.f32.xlu0 %v2842
        %v2844 = vpop.xlane.xlu0 %2843
        %v2845 = vsel %vm1256, %v2788, -inf
        %2846 = vmax.xlane.f32.xlu0 %v2845
        %v2847 = vpop.xlane.xlu0 %2846
        %v2848 = vsel %vm1256, %v2834, -inf
        %2849 = vmax.xlane.f32.xlu0 %v2848
        %v2850 = vpop.xlane.xlu0 %2849
        %v2851 = vsub.f32 %v2696, %v2841
        %v2852 = vsub.f32 %v2742, %v2844
        %v2853 = vsub.f32 %v2788, %v2847
        %v2854 = vsub.f32 %v2834, %v2850
        %v2855 = vmul.f32 %v2851, 1.442695
        %v2856 = vpow.pop %v2855
        %v2857 = vmul.f32 %v2852, 1.442695
        %v2858 = vpow.pop %v2857
        %v2859 = vmul.f32 %v2853, 1.442695
        %v2860 = vpow.pop %v2859
        %v2861 = vmul.f32 %v2854, 1.442695
        %v2862 = vpow.pop %v2861
        %v2863 = vsel %vm1256, %v2856, 0.0
        %2864 = vadd.xlane.f32.xlu0 %v2863
        %v2865 = vpop.xlane.xlu0 %2864
        %v2866 = vsel %vm1256, %v2858, 0.0
        %2867 = vadd.xlane.f32.xlu0 %v2866
        %v2868 = vpop.xlane.xlu0 %2867
        %v2869 = vsel %vm1256, %v2860, 0.0
        %2870 = vadd.xlane.f32.xlu0 %v2869
        %v2871 = vpop.xlane.xlu0 %2870
        %v2872 = vsel %vm1256, %v2862, 0.0
        %2873 = vadd.xlane.f32.xlu0 %v2872
        %v2874 = vpop.xlane.xlu0 %2873
        %v2875 = vrcp.pop %v2865
        %v2876 = vrcp.pop %v2868
        %v2877 = vrcp.pop %v2871
        %v2878 = vrcp.pop %v2874
        %v2879 = vmul.f32 %v2856, %v2875
        %v2880 = vmul.f32 %v2858, %v2876
        %v2881 = vmul.f32 %v2860, %v2877
        %v2882 = vmul.f32 %v2862, %v2878
        %v2883 = vpack.c.bf16 %v2879, %v2879
        %v2884 = vpack.c.bf16 %v2880, %v2880
        %v2885 = vpack.c.bf16 %v2881, %v2881
        %v2886 = vpack.c.bf16 %v2882, %v2882
        %v2888 = vsel %vm1256, %v2883, 0
        %v2891 = vsel %vm1503, %v2645, 0
        %2893 = vmatprep.subr.bf16.mxu0 0
        %2894 = vmatpush1.bf16.msra.mxu0 %v2891
        %2895 = vmatprep.subr.bf16.mxu0 0
        %2896 = vmatpush1.bf16.msra.mxu0 0
        %2897 = vmatprep.subr.bf16.mxu0 0
        %2898 = vmatpush1.bf16.msra.mxu0 0
        %2899 = vmatprep.subr.bf16.mxu0 0
        %2900 = vmatpush1.bf16.msra.mxu0 0
        %2901 = vmatprep.subr.bf16.mxu0 0
        %2902 = vmatpush1.bf16.msra.mxu0 0
        %2903 = vmatprep.subr.bf16.mxu0 0
        %2904 = vmatpush1.bf16.msra.mxu0 0
        %2905 = vmatprep.subr.bf16.mxu0 0
        %2906 = vmatpush1.bf16.msra.mxu0 0
        %2907 = vmatprep.subr.bf16.mxu0 0
        %2908 = vmatpush1.bf16.msra.mxu0 0
        %2909 = vmatprep.subr.bf16.mxu0 0
        %2910 = vmatpush1.bf16.msra.mxu0 0
        %2911 = vmatprep.subr.bf16.mxu0 0
        %2912 = vmatpush1.bf16.msra.mxu0 0
        %2913 = vmatprep.subr.bf16.mxu0 0
        %2914 = vmatpush1.bf16.msra.mxu0 0
        %2915 = vmatprep.subr.bf16.mxu0 0
        %2916 = vmatpush1.bf16.msra.mxu0 0
        %2917 = vmatprep.subr.bf16.mxu0 0
        %2918 = vmatpush1.bf16.msra.mxu0 0
        %2919 = vmatprep.subr.bf16.mxu0 0
        %2920 = vmatpush1.bf16.msra.mxu0 0
        %2921 = vmatprep.subr.bf16.mxu0 0
        %2922 = vmatpush1.bf16.msra.mxu0 0
        %2923 = vmatprep.subr.bf16.mxu0 0
        %2924 = vmatpush1.bf16.msra.mxu0 0
        %2925 = vmatprep.mubr.bf16.mxu0 0
        %2926 = vmatmul.mubr.bf16.gmra.mrb[0].mxu0 %v2888
        %v2927 = vpop.f32.mrb[0].mxu0
        %v2928 = vadd.f32 0.0, %v2927
        %v2929 = vpop.f32.mrb[0].mxu0
        %v2930 = vpop.f32.mrb[0].mxu0
        %v2931 = vpop.f32.mrb[0].mxu0
        %2932 = vdwg.mxu0
        %v2934 = vsel %vm1256, %v2884, 0
        %v2937 = vsel %vm1503, %v2648, 0
        %2939 = vmatprep.subr.bf16.mxu0 0
        %2940 = vmatpush1.bf16.msra.mxu0 %v2937
        %2941 = vmatprep.subr.bf16.mxu0 0
        %2942 = vmatpush1.bf16.msra.mxu0 0
        %2943 = vmatprep.subr.bf16.mxu0 0
        %2944 = vmatpush1.bf16.msra.mxu0 0
        %2945 = vmatprep.subr.bf16.mxu0 0
        %2946 = vmatpush1.bf16.msra.mxu0 0
        %2947 = vmatprep.subr.bf16.mxu0 0
        %2948 = vmatpush1.bf16.msra.mxu0 0
        %2949 = vmatprep.subr.bf16.mxu0 0
        %2950 = vmatpush1.bf16.msra.mxu0 0
        %2951 = vmatprep.subr.bf16.mxu0 0
        %2952 = vmatpush1.bf16.msra.mxu0 0
        %2953 = vmatprep.subr.bf16.mxu0 0
        %2954 = vmatpush1.bf16.msra.mxu0 0
        %2955 = vmatprep.subr.bf16.mxu0 0
        %2956 = vmatpush1.bf16.msra.mxu0 0
        %2957 = vmatprep.subr.bf16.mxu0 0
        %2958 = vmatpush1.bf16.msra.mxu0 0
        %2959 = vmatprep.subr.bf16.mxu0 0
        %2960 = vmatpush1.bf16.msra.mxu0 0
        %2961 = vmatprep.subr.bf16.mxu0 0
        %2962 = vmatpush1.bf16.msra.mxu0 0
        %2963 = vmatprep.subr.bf16.mxu0 0
        %2964 = vmatpush1.bf16.msra.mxu0 0
        %2965 = vmatprep.subr.bf16.mxu0 0
        %2966 = vmatpush1.bf16.msra.mxu0 0
        %2967 = vmatprep.subr.bf16.mxu0 0
        %2968 = vmatpush1.bf16.msra.mxu0 0
        %2969 = vmatprep.subr.bf16.mxu0 0
        %2970 = vmatpush1.bf16.msra.mxu0 0
        %2971 = vmatprep.mubr.bf16.mxu0 0
        %2972 = vmatmul.mubr.bf16.gmra.mrb[0].mxu0 %v2934
        %v2973 = vpop.f32.mrb[0].mxu0
        %v2974 = vadd.f32 0.0, %v2973
        %v2975 = vpop.f32.mrb[0].mxu0
        %v2976 = vpop.f32.mrb[0].mxu0
        %v2977 = vpop.f32.mrb[0].mxu0
        %2978 = vdwg.mxu0
        %v2980 = vsel %vm1256, %v2885, 0
        %v2983 = vsel %vm1503, %v2651, 0
        %2985 = vmatprep.subr.bf16.mxu0 0
        %2986 = vmatpush1.bf16.msra.mxu0 %v2983
        %2987 = vmatprep.subr.bf16.mxu0 0
        %2988 = vmatpush1.bf16.msra.mxu0 0
        %2989 = vmatprep.subr.bf16.mxu0 0
        %2990 = vmatpush1.bf16.msra.mxu0 0
        %2991 = vmatprep.subr.bf16.mxu0 0
        %2992 = vmatpush1.bf16.msra.mxu0 0
        %2993 = vmatprep.subr.bf16.mxu0 0
        %2994 = vmatpush1.bf16.msra.mxu0 0
        %2995 = vmatprep.subr.bf16.mxu0 0
        %2996 = vmatpush1.bf16.msra.mxu0 0
        %2997 = vmatprep.subr.bf16.mxu0 0
        %2998 = vmatpush1.bf16.msra.mxu0 0
        %2999 = vmatprep.subr.bf16.mxu0 0
        %3000 = vmatpush1.bf16.msra.mxu0 0
        %3001 = vmatprep.subr.bf16.mxu0 0
        %3002 = vmatpush1.bf16.msra.mxu0 0
        %3003 = vmatprep.subr.bf16.mxu0 0
        %3004 = vmatpush1.bf16.msra.mxu0 0
        %3005 = vmatprep.subr.bf16.mxu0 0
        %3006 = vmatpush1.bf16.msra.mxu0 0
        %3007 = vmatprep.subr.bf16.mxu0 0
        %3008 = vmatpush1.bf16.msra.mxu0 0
        %3009 = vmatprep.subr.bf16.mxu0 0
        %3010 = vmatpush1.bf16.msra.mxu0 0
        %3011 = vmatprep.subr.bf16.mxu0 0
        %3012 = vmatpush1.bf16.msra.mxu0 0
        %3013 = vmatprep.subr.bf16.mxu0 0
        %3014 = vmatpush1.bf16.msra.mxu0 0
        %3015 = vmatprep.subr.bf16.mxu0 0
        %3016 = vmatpush1.bf16.msra.mxu0 0
        %3017 = vmatprep.mubr.bf16.mxu0 0
        %3018 = vmatmul.mubr.bf16.gmra.mrb[0].mxu0 %v2980
        %v3019 = vpop.f32.mrb[0].mxu0
        %v3020 = vadd.f32 0.0, %v3019
        %v3021 = vpop.f32.mrb[0].mxu0
        %v3022 = vpop.f32.mrb[0].mxu0
        %v3023 = vpop.f32.mrb[0].mxu0
        %3024 = vdwg.mxu0
        %v3026 = vsel %vm1256, %v2886, 0
        %v3029 = vsel %vm1503, %v2654, 0
        %3031 = vmatprep.subr.bf16.mxu0 0
        %3032 = vmatpush1.bf16.msra.mxu0 %v3029
        %3033 = vmatprep.subr.bf16.mxu0 0
        %3034 = vmatpush1.bf16.msra.mxu0 0
        %3035 = vmatprep.subr.bf16.mxu0 0
        %3036 = vmatpush1.bf16.msra.mxu0 0
        %3037 = vmatprep.subr.bf16.mxu0 0
        %3038 = vmatpush1.bf16.msra.mxu0 0
        %3039 = vmatprep.subr.bf16.mxu0 0
        %3040 = vmatpush1.bf16.msra.mxu0 0
        %3041 = vmatprep.subr.bf16.mxu0 0
        %3042 = vmatpush1.bf16.msra.mxu0 0
        %3043 = vmatprep.subr.bf16.mxu0 0
        %3044 = vmatpush1.bf16.msra.mxu0 0
        %3045 = vmatprep.subr.bf16.mxu0 0
        %3046 = vmatpush1.bf16.msra.mxu0 0
        %3047 = vmatprep.subr.bf16.mxu0 0
        %3048 = vmatpush1.bf16.msra.mxu0 0
        %3049 = vmatprep.subr.bf16.mxu0 0
        %3050 = vmatpush1.bf16.msra.mxu0 0
        %3051 = vmatprep.subr.bf16.mxu0 0
        %3052 = vmatpush1.bf16.msra.mxu0 0
        %3053 = vmatprep.subr.bf16.mxu0 0
        %3054 = vmatpush1.bf16.msra.mxu0 0
        %3055 = vmatprep.subr.bf16.mxu0 0
        %3056 = vmatpush1.bf16.msra.mxu0 0
        %3057 = vmatprep.subr.bf16.mxu0 0
        %3058 = vmatpush1.bf16.msra.mxu0 0
        %3059 = vmatprep.subr.bf16.mxu0 0
        %3060 = vmatpush1.bf16.msra.mxu0 0
        %3061 = vmatprep.subr.bf16.mxu0 0
        %3062 = vmatpush1.bf16.msra.mxu0 0
        %3063 = vmatprep.mubr.bf16.mxu0 0
        %3064 = vmatmul.mubr.bf16.gmra.mrb[0].mxu0 %v3026
        %v3065 = vpop.f32.mrb[0].mxu0
        %v3066 = vadd.f32 0.0, %v3065
        %v3067 = vpop.f32.mrb[0].mxu0
        %v3068 = vpop.f32.mrb[0].mxu0
        %v3069 = vpop.f32.mrb[0].mxu0
        %3070 = vdwg.mxu0
        %v3071 = vpack.c.bf16 %v2928, %v2928
        %v3073 = vunpack.c.l.s4 1983009808
        %v3074 = vunpack.c.0.s8 %v3073
        %v3075 = vlaneseq
        %v3076 = vshrl.u32 %v3075, 7
        %v3077 = vsub.s32 %v3074, %v3076
        %v3078 = vrot.slane %v3071, %v3077
        %v3079 = vpack.c.bf16 %v3020, %v3020
        %v3081 = vunpack.c.l.s4 1983009808
        %v3082 = vunpack.c.0.s8 %v3081
        %v3083 = vlaneseq
        %v3084 = vshrl.u32 %v3083, 7
        %v3085 = vsub.s32 %v3082, %v3084
        %v3086 = vrot.slane %v3079, %v3085
        %v3087 = vcombine.low %v3078, %v3086
        %v3088 = vcombine.high %v3078, %v3086
        %v3090 = vunpack.c.l.s4 1934713408
        %v3091 = vunpack.c.0.s8 %v3090
        %v3092 = vlaneseq
        %v3093 = vshrl.u32 %v3092, 7
        %v3094 = vsub.s32 %v3091, %v3093
        %v3095 = vrot.slane %v3087, %v3094
        %v3097 = vunpack.c.l.s4 1934713408
        %v3098 = vunpack.c.0.s8 %v3097
        %v3099 = vlaneseq
        %v3100 = vshrl.u32 %v3099, 7
        %v3101 = vsub.s32 %v3098, %v3100
        %v3102 = vrot.slane %v3088, %v3101
        %v3103 = vcombine.high %v3095, 0
        %v3104 = vcombine.high %v3102, 0
        %v3105 = vpack.c.bf16 %v2974, %v2974
        %v3107 = vunpack.c.l.s4 1983009808
        %v3108 = vunpack.c.0.s8 %v3107
        %v3109 = vlaneseq
        %v3110 = vshrl.u32 %v3109, 7
        %v3111 = vsub.s32 %v3108, %v3110
        %v3112 = vrot.slane %v3105, %v3111
        %v3113 = vpack.c.bf16 %v3066, %v3066
        %v3115 = vunpack.c.l.s4 1983009808
        %v3116 = vunpack.c.0.s8 %v3115
        %v3117 = vlaneseq
        %v3118 = vshrl.u32 %v3117, 7
        %v3119 = vsub.s32 %v3116, %v3118
        %v3120 = vrot.slane %v3113, %v3119
        %v3121 = vcombine.low %v3112, %v3120
        %v3122 = vcombine.high %v3112, %v3120
        %v3124 = vunpack.c.l.s4 1934713408
        %v3125 = vunpack.c.0.s8 %v3124
        %v3126 = vlaneseq
        %v3127 = vshrl.u32 %v3126, 7
        %v3128 = vsub.s32 %v3125, %v3127
        %v3129 = vrot.slane %v3121, %v3128
        %v3131 = vunpack.c.l.s4 1934713408
        %v3132 = vunpack.c.0.s8 %v3131
        %v3133 = vlaneseq
        %v3134 = vshrl.u32 %v3133, 7
        %v3135 = vsub.s32 %v3132, %v3134
        %v3136 = vrot.slane %v3122, %v3135
        %v3137 = vcombine.high %v3129, 0
        %v3138 = vcombine.high %v3136, 0
        %v3141 = vpack.i.b16 %v3129, %v3095
        %v3143 = vshrl.u32 %v3095, 16
        %v3144 = vshrl.u32 %v3129, 16
        %v3145 = vpack.i.b16 %v3144, %v3143
        %v3149 = vpack.i.b16 %v3137, %v3103
        %v3151 = vshrl.u32 %v3103, 16
        %v3152 = vshrl.u32 %v3137, 16
        %v3153 = vpack.i.b16 %v3152, %v3151
        %v3157 = vpack.i.b16 %v3136, %v3102
        %v3159 = vshrl.u32 %v3102, 16
        %v3160 = vshrl.u32 %v3136, 16
        %v3161 = vpack.i.b16 %v3160, %v3159
        %v3165 = vpack.i.b16 %v3138, %v3104
        %v3167 = vshrl.u32 %v3104, 16
        %v3168 = vshrl.u32 %v3138, 16
        %v3169 = vpack.i.b16 %v3168, %v3167
        %v3171 = vcombine.low %v3141, %v3157
        %v3173 = vunpack.c.l.s4 1983009808
        %v3174 = vunpack.c.0.s8 %v3173
        %v3175 = vlaneseq
        %v3176 = vshrl.u32 %v3175, 7
        %v3177 = vsub.s32 %v3174, %v3176
        %v3178 = vrot.slane %v3171, %v3177
        %v3179 = vcombine.low %v3149, %v3165
        %v3181 = vunpack.c.l.s4 1983009808
        %v3182 = vunpack.c.0.s8 %v3181
        %v3183 = vlaneseq
        %v3184 = vshrl.u32 %v3183, 7
        %v3185 = vsub.s32 %v3182, %v3184
        %v3186 = vrot.slane %v3179, %v3185
        %v3187 = vcombine.low %v3178, %v3186
        %v3189 = vunpack.c.l.s4 1934713408
        %v3190 = vunpack.c.0.s8 %v3189
        %v3191 = vlaneseq
        %v3192 = vshrl.u32 %v3191, 7
        %v3193 = vsub.s32 %v3190, %v3192
        %v3194 = vrot.slane %v3187, %v3193
        %v3195 = vcombine.high %v3194, 0
        %v3196 = vcombine.low %v3145, %v3161
        %v3198 = vunpack.c.l.s4 1983009808
        %v3199 = vunpack.c.0.s8 %v3198
        %v3200 = vlaneseq
        %v3201 = vshrl.u32 %v3200, 7
        %v3202 = vsub.s32 %v3199, %v3201
        %v3203 = vrot.slane %v3196, %v3202
        %v3204 = vcombine.low %v3153, %v3169
        %v3206 = vunpack.c.l.s4 1983009808
        %v3207 = vunpack.c.0.s8 %v3206
        %v3208 = vlaneseq
        %v3209 = vshrl.u32 %v3208, 7
        %v3210 = vsub.s32 %v3207, %v3209
        %v3211 = vrot.slane %v3204, %v3210
        %v3212 = vcombine.low %v3203, %v3211
        %v3214 = vunpack.c.l.s4 1934713408
        %v3215 = vunpack.c.0.s8 %v3214
        %v3216 = vlaneseq
        %v3217 = vshrl.u32 %v3216, 7
        %v3218 = vsub.s32 %v3215, %v3217
        %v3219 = vrot.slane %v3212, %v3218
        %v3220 = vcombine.high %v3219, 0
        %v3223 = vpack.i.b16 %v3219, %v3194
        %v3224 = vshrl.u32 %v3194, 16
        %v3225 = vshrl.u32 %v3219, 16
        %v3226 = vpack.i.b16 %v3225, %v3224
        %v3229 = vpack.i.b16 %v3220, %v3195
        %v3230 = vshrl.u32 %v3195, 16
        %v3231 = vshrl.u32 %v3220, 16
        %v3232 = vpack.i.b16 %v3231, %v3230
        %3233 = vrot.lane.b32.xlu0 %v3226, 8
        %v3234 = vpop.permute.xlu0 %3233
        %3235 = vrot.lane.b32.xlu0 %v3229, 16
        %v3236 = vpop.permute.xlu0 %3235
        %3237 = vrot.lane.b32.xlu0 %v3232, 24
        %v3238 = vpop.permute.xlu0 %3237
        %v3241 = vsel %vm1256, %v3223, %v3234
        %v3243 = vsel %vm1856, %v3241, %v3236
        %v3245 = vsel %vm1859, %v3243, %v3238
        %s3246 = scalar_lea.vmem [#allocation8], 48
        %v3247 = vld [vmem:[%s3246] sm:$0xf]
        %v3248 = vld [vmem:[%s3246 + $0x4] sm:$0xf]
        %v3249 = vld [vmem:[%s3246 + $0x8] sm:$0xf]
        %v3250 = vld [vmem:[%s3246 + $0xc] sm:$0xf]
        %v3251 = vld [vmem:[%s7 + $0x3] sm:$0x1]
        %v3252 = vlaneseq
        %v3253 = vshrl.u32 %v3252, 7
        %v3254 = vsub.s32 0, %v3253
        %v3255 = vrot.slane %v3251, %v3254
        %v3260 = vunpack.c.l.b16 %v3247
        %v3261 = vunpack.c.l.b16 %v3248
        %v3262 = vunpack.c.l.b16 %v3249
        %v3263 = vunpack.c.l.b16 %v3250
        %v3264 = vpack.c.b16 %v3261, %v3260
        %v3265 = vpack.c.b16 %v3263, %v3262
        %v3268 = vsel %vm535, %v3245, 0
        %3270 = vmatprep.subr.bf16.mxu0 0
        %3271 = vmatpush1.bf16.msra.mxu0 %v3264
        %3272 = vmatprep.subr.bf16.mxu0 0
        %3273 = vmatpush1.bf16.msra.mxu0 %v3265
        %3274 = vmatprep.subr.bf16.mxu0 0
        %3275 = vmatpush1.bf16.msra.mxu0 0
        %3276 = vmatprep.subr.bf16.mxu0 0
        %3277 = vmatpush1.bf16.msra.mxu0 0
        %3278 = vmatprep.subr.bf16.mxu0 0
        %3279 = vmatpush1.bf16.msra.mxu0 0
        %3280 = vmatprep.subr.bf16.mxu0 0
        %3281 = vmatpush1.bf16.msra.mxu0 0
        %3282 = vmatprep.subr.bf16.mxu0 0
        %3283 = vmatpush1.bf16.msra.mxu0 0
        %3284 = vmatprep.subr.bf16.mxu0 0
        %3285 = vmatpush1.bf16.msra.mxu0 0
        %3286 = vmatprep.subr.bf16.mxu0 0
        %3287 = vmatpush1.bf16.msra.mxu0 0
        %3288 = vmatprep.subr.bf16.mxu0 0
        %3289 = vmatpush1.bf16.msra.mxu0 0
        %3290 = vmatprep.subr.bf16.mxu0 0
        %3291 = vmatpush1.bf16.msra.mxu0 0
        %3292 = vmatprep.subr.bf16.mxu0 0
        %3293 = vmatpush1.bf16.msra.mxu0 0
        %3294 = vmatprep.subr.bf16.mxu0 0
        %3295 = vmatpush1.bf16.msra.mxu0 0
        %3296 = vmatprep.subr.bf16.mxu0 0
        %3297 = vmatpush1.bf16.msra.mxu0 0
        %3298 = vmatprep.subr.bf16.mxu0 0
        %3299 = vmatpush1.bf16.msra.mxu0 0
        %3300 = vmatprep.subr.bf16.mxu0 0
        %3301 = vmatpush1.bf16.msra.mxu0 0
        %3302 = vmatprep.mubr.bf16.mxu0 0
        %3303 = vmatmul.mubr.bf16.gmra.mrb[0].mxu0 %v3268
        %v3304 = vpop.f32.mrb[0].mxu0
        %v3305 = vadd.f32 %v3255, %v3304
        %v3306 = vpop.f32.mrb[0].mxu0
        %v3307 = vpop.f32.mrb[0].mxu0
        %v3308 = vpop.f32.mrb[0].mxu0
        %3309 = vdwg.mxu0
        %3310 = vst.msk [vmem:[%s522] sm:$0xf] %vm1926, %v2087
        %3311 = vst.msk [vmem:[%s529] sm:$0xf] %vm1926, %v2150
        %v3312 = vadd.f32 %v1929, %v3305
        %3313 = vst.msk [vmem:[%s501] sm:$0xff] %vm535, %v3312
        %s3314 = sand.u32 %s226, 1
        %s3315 = scalar_lea.sflag [#allocation4], %s3314
        %s3316 = sand.u32 %s226, 1
        %s3317 = smul.addr %s3316, 8
        %s3318 = scalar_lea.vmem [#allocation10], %s3317
        %s3319 = sand.u32 %s40, 1
        %s3320 = scalar_lea.sflag [#allocation12], %s3319
        %s3321 = sand.u32 %s252, 1
        %s3322 = smul.addr %s3321, 4
        %s3323 = scalar_lea.vmem [#allocation11], %s3322
        %s3324 = sand.u32 %s40, 1
        %s3325 = scalar_lea.sflag [#allocation12], %s3324
        %s3326 = sand.u32 %s278, 1
        %s3327 = smul.addr %s3326, 4
        %s3328 = scalar_lea.vmem [#allocation13], %s3327
        %s3329 = sand.u32 %s40, 1
        %s3330 = scalar_lea.sflag [#allocation15], %s3329
        %s3331 = sand.u32 %s304, 1
        %s3332 = smul.addr %s3331, 4
        %s3333 = scalar_lea.vmem [#allocation14], %s3332
        %s3334 = sand.u32 %s40, 1
        %s3335 = scalar_lea.sflag [#allocation15], %s3334
        %s3336 = sand.u32 %s330, 1
        %s3337 = smul.addr %s3336, 4
        %s3338 = scalar_lea.vmem [#allocation16], %s3337
        // Predicated region
        $region69: #{tpu_custom_call.1} parent=51 // pred_check
          %p3339 = pneg %p236
        $region70: #{tpu_custom_call.1} parent=51 // pred_check_branch
          %3341 = sbr.rel (%p3339) target = $region72
        $region71: #{tpu_custom_call.1} parent=51 // pred_region
          %s3343 = ssub.s32 128, 128
          %3344 = vsyncadd %s3315, %s3343
          %s3345 = smul.addr %s40, 128
          %s3346 = scalar_lea.hbm %s8, %s3345
          %s3348 = sshll.u32 %s3318, 4
          %s3349 = int_to_ptr.vmem [resolvable:$true] %s3348
          %3351 = dma.vmem_to_hbm [thread:$0]  %s3349, 128, %s3346, %s3315
        $region72: #{tpu_custom_call.1} parent=51 // pred_fallthru
          _
        // Predicated region
        $region73: #{tpu_custom_call.1} parent=51 // pred_check
          %p3352 = pneg %p262
        $region74: #{tpu_custom_call.1} parent=51 // pred_check_branch
          %3354 = sbr.rel (%p3352) target = $region76
        $region75: #{tpu_custom_call.1} parent=51 // pred_region
          %s3356 = ssub.s32 64, 64
          %3357 = vsyncadd %s3320, %s3356
          %s3358 = smul.addr %s40, 64
          %s3359 = scalar_lea.hbm %s9, %s3358
          %s3361 = sshll.u32 %s3323, 4
          %s3362 = int_to_ptr.vmem [resolvable:$true] %s3361
          %3364 = dma.vmem_to_hbm [thread:$0]  %s3362, 64, %s3359, %s3320
        $region76: #{tpu_custom_call.1} parent=51 // pred_fallthru
          _
        // Predicated region
        $region77: #{tpu_custom_call.1} parent=51 // pred_check
          %p3365 = pneg %p288
        $region78: #{tpu_custom_call.1} parent=51 // pred_check_branch
          %3367 = sbr.rel (%p3365) target = $region80
        $region79: #{tpu_custom_call.1} parent=51 // pred_region
          %s3369 = ssub.s32 64, 64
          %3370 = vsyncadd %s3325, %s3369
          %s3371 = smul.addr %s40, 64
          %s3372 = scalar_lea.hbm %s10, %s3371
          %s3374 = sshll.u32 %s3328, 4
          %s3375 = int_to_ptr.vmem [resolvable:$true] %s3374
          %3377 = dma.vmem_to_hbm [thread:$0]  %s3375, 64, %s3372, %s3325
        $region80: #{tpu_custom_call.1} parent=51 // pred_fallthru
          _
        // Predicated region
        $region81: #{tpu_custom_call.1} parent=51 // pred_check
          %p3378 = pneg %p314
        $region82: #{tpu_custom_call.1} parent=51 // pred_check_branch
          %3380 = sbr.rel (%p3378) target = $region84
        $region83: #{tpu_custom_call.1} parent=51 // pred_region
          %s3382 = ssub.s32 64, 64
          %3383 = vsyncadd %s3330, %s3382
          %s3384 = smul.addr %s40, 64
          %s3385 = scalar_lea.hbm %s11, %s3384
          %s3387 = sshll.u32 %s3333, 4
          %s3388 = int_to_ptr.vmem [resolvable:$true] %s3387
          %3390 = dma.vmem_to_hbm [thread:$0]  %s3388, 64, %s3385, %s3330
        $region84: #{tpu_custom_call.1} parent=51 // pred_fallthru
          _
        // Predicated region
        $region85: #{tpu_custom_call.1} parent=51 // pred_check
          %p3391 = pneg %p340
        $region86: #{tpu_custom_call.1} parent=51 // pred_check_branch
          %3393 = sbr.rel (%p3391) target = $region88
        $region87: #{tpu_custom_call.1} parent=51 // pred_region
          %s3395 = ssub.s32 64, 64
          %3396 = vsyncadd %s3335, %s3395
          %s3397 = smul.addr %s40, 64
          %s3398 = scalar_lea.hbm %s12, %s3397
          %s3400 = sshll.u32 %s3338, 4
          %s3401 = int_to_ptr.vmem [resolvable:$true] %s3400
          %3403 = dma.vmem_to_hbm [thread:$0]  %s3401, 64, %s3398, %s3335
        $region88: #{tpu_custom_call.1} parent=51 // pred_fallthru
          _
      $region52: #{tpu_custom_call.1} parent=5 // pred_fallthru
        _
      %p3404 = scmp.le.s32.totalorder 2, %s35
      // Predicated region
      $region89: #{tpu_custom_call.1} parent=5 // pred_check
        %p3405 = pneg %p3404
      $region90: #{tpu_custom_call.1} parent=5 // pred_check_branch
        %3407 = sbr.rel (%p3405) target = $region92
      $region91: #{tpu_custom_call.1} parent=5 // pred_region
        %s3408 = ssub.s32 %s35, 2
        // Predicated region
        $region93: #{tpu_custom_call.1} parent=91 // pred_check
          %p3409 = pneg %p242
        $region94: #{tpu_custom_call.1} parent=91 // pred_check_branch
          %3411 = sbr.rel (%p3409) target = $region96
        $region95: #{tpu_custom_call.1} parent=91 // pred_region
          %s3412 = sand.u32 %s227, 1
          %s3413 = scalar_lea.sflag [#allocation4], %s3412
          %s3414 = sand.u32 %s227, 1
          %s3415 = smul.addr %s3414, 8
          %s3416 = scalar_lea.vmem [#allocation10], %s3415
          %3417 = dma.done %s3413, 128
        $region96: #{tpu_custom_call.1} parent=91 // pred_fallthru
          _
        // Predicated region
        $region97: #{tpu_custom_call.1} parent=91 // pred_check
          %p3418 = pneg %p268
        $region98: #{tpu_custom_call.1} parent=91 // pred_check_branch
          %3420 = sbr.rel (%p3418) target = $region100
        $region99: #{tpu_custom_call.1} parent=91 // pred_region
          %s3421 = sand.u32 %s41, 1
          %s3422 = scalar_lea.sflag [#allocation12], %s3421
          %s3423 = sand.u32 %s253, 1
          %s3424 = smul.addr %s3423, 4
          %s3425 = scalar_lea.vmem [#allocation11], %s3424
          %3426 = dma.done %s3422, 64
        $region100: #{tpu_custom_call.1} parent=91 // pred_fallthru
          _
        // Predicated region
        $region101: #{tpu_custom_call.1} parent=91 // pred_check
          %p3427 = pneg %p294
        $region102: #{tpu_custom_call.1} parent=91 // pred_check_branch
          %3429 = sbr.rel (%p3427) target = $region104
        $region103: #{tpu_custom_call.1} parent=91 // pred_region
          %s3430 = sand.u32 %s41, 1
          %s3431 = scalar_lea.sflag [#allocation12], %s3430
          %s3432 = sand.u32 %s279, 1
          %s3433 = smul.addr %s3432, 4
          %s3434 = scalar_lea.vmem [#allocation13], %s3433
          %3435 = dma.done %s3431, 64
        $region104: #{tpu_custom_call.1} parent=91 // pred_fallthru
          _
        // Predicated region
        $region105: #{tpu_custom_call.1} parent=91 // pred_check
          %p3436 = pneg %p320
        $region106: #{tpu_custom_call.1} parent=91 // pred_check_branch
          %3438 = sbr.rel (%p3436) target = $region108
        $region107: #{tpu_custom_call.1} parent=91 // pred_region
          %s3439 = sand.u32 %s41, 1
          %s3440 = scalar_lea.sflag [#allocation15], %s3439
          %s3441 = sand.u32 %s305, 1
          %s3442 = smul.addr %s3441, 4
          %s3443 = scalar_lea.vmem [#allocation14], %s3442
          %3444 = dma.done %s3440, 64
        $region108: #{tpu_custom_call.1} parent=91 // pred_fallthru
          _
        // Predicated region
        $region109: #{tpu_custom_call.1} parent=91 // pred_check
          %p3445 = pneg %p346
        $region110: #{tpu_custom_call.1} parent=91 // pred_check_branch
          %3447 = sbr.rel (%p3445) target = $region112
        $region111: #{tpu_custom_call.1} parent=91 // pred_region
          %s3448 = sand.u32 %s41, 1
          %s3449 = scalar_lea.sflag [#allocation15], %s3448
          %s3450 = sand.u32 %s331, 1
          %s3451 = smul.addr %s3450, 4
          %s3452 = scalar_lea.vmem [#allocation16], %s3451
          %3453 = dma.done %s3449, 64
        $region112: #{tpu_custom_call.1} parent=91 // pred_fallthru
          _
      $region92: #{tpu_custom_call.1} parent=5 // pred_fallthru
        _
    $region6: #{tpu_custom_call.1} parent=1 // loop_footer
      %s39 = sadd.s32 1, %s35
    $region7: #{tpu_custom_call.1} parent=1 // loop_footer_branch
      %34 = sbr.rel target = $region3
    $region8: #{tpu_custom_call.1} parent=1 // loop_exit
      _
    %3454 = vsyncpa [#allocation3], 1
    %s3455 = scalar_lea.sflag [#allocation3], 1
    %3456 = vsyncpa %s3455, 1
    %3457 = vsyncpa [#allocation6], 1
    %s3458 = scalar_lea.sflag [#allocation6], 1
    %3459 = vsyncpa %s3458, 1
    %3460 = vsyncpa [#allocation9], 1
    %3461 = vsyncpa [#allocation4], 1
    %s3462 = scalar_lea.sflag [#allocation4], 1
    %3463 = vsyncpa %s3462, 1
    %3464 = vsyncpa [#allocation12], 1
    %s3465 = scalar_lea.sflag [#allocation12], 1
    %3466 = vsyncpa %s3465, 1
    %3467 = vsyncpa [#allocation15], 1
    %s3468 = scalar_lea.sflag [#allocation15], 1
    %3469 = vsyncpa %s3468, 1

</llo_original>
